<compile_context>
chip_gen: v5e
topology: v5e:2x2
jax: 0.10.0
libtpu: 0.0.40
codegen_flags: <defaults>
</compile_context>

<pallas_src>
import numpy as np
import jax
import jax.numpy as jnp
from jax.experimental import pallas as pl
from jax.experimental.pallas import tpu as pltpu

NEG_SLOPE = 0.01          # nn.LeakyReLU default
BN_EPS = 1e-5             # nn.BatchNorm2d default

_VMEM_LIMIT_CACHE = None


def _vmem_limit_bytes():
    """Generation-aware scoped-VMEM request:
    v5e/v6e (128 MiB physical) -> 64 MiB; v7x (64 MiB) -> 32 MiB; unknown -> 32 MiB."""
    global _VMEM_LIMIT_CACHE
    if _VMEM_LIMIT_CACHE is None:
        cap = 64 * 1024 * 1024                      # conservative fallback
        try:
            info = pltpu.get_tpu_info()
            cap = int(getattr(info, "vmem_capacity_bytes", cap) or cap)
        except Exception:
            pass
        _VMEM_LIMIT_CACHE = int(min(max(cap // 2, 32 * 1024 * 1024),
                                    100 * 1024 * 1024))
    return _VMEM_LIMIT_CACHE


def _dim_semantics(n_steps):
    # v7x megacore: only shard the grid axis across the two TensorCores when
    # each core still gets >= 2 steps (so its DMA pipeline overlaps);
    # otherwise keep the axis "arbitrary" (also the right call on 1-TC v5e/v6e).
    return ("parallel",) if n_steps >= 4 else ("arbitrary",)


def _round_up(x, m):
    return ((x + m - 1) // m) * m


def _lrelu(v):
    return jnp.where(v > 0, v, NEG_SLOPE * v)


# ----------------------------------------------------------------------------
# Padded pixel-flat layout helpers
# ----------------------------------------------------------------------------
def _tap_offsets(wp):
    """Flat-row offsets of the 9 taps of a 3x3/pad-1 conv, tap t = kh*3 + kw."""
    return tuple((kh - 1) * wp + (kw - 1) for kh in range(3) for kw in range(3))


def _row_shift(x, off):
    """y[r] = x[r + off], zero-filled at the ends; `off` is a static int."""
    if off == 0:
        return x
    p, c = x.shape
    pad = jnp.zeros((abs(off), c), x.dtype)
    if off > 0:
        return jnp.concatenate([x[off:], pad], axis=0)
    return jnp.concatenate([pad, x[:off]], axis=0)


def _pad_pixelflat(x_nhwc):
    """NHWC -> zero-padded pixel-flat (B, round_up((H+2)*(W+2), 8), C)."""
    b, h, w, c = x_nhwc.shape
    p = (h + 2) * (w + 2)
    p_pad = _round_up(p, 8)
    xp = jnp.pad(x_nhwc, ((0, 0), (1, 1), (1, 1), (0, 0)))
    xp = xp.reshape(b, p, c)
    if p_pad != p:
        xp = jnp.pad(xp, ((0, 0), (0, p_pad - p), (0, 0)))
    return xp


def _interior_mask(h, w, p_pad):
    """(p_pad, 1) f32 mask: 1 on interior pixels, 0 on padding rows."""
    grid = np.zeros((h + 2, w + 2), np.float32)
    grid[1:h + 1, 1:w + 1] = 1.0
    m = np.zeros((p_pad, 1), np.float32)
    m[:(h + 2) * (w + 2), 0] = grid.reshape(-1)
    return jnp.asarray(m)


def _unpack_double_w(y, h, w, cout):
    """(B, P_pad, 2*Cout) even/odd-packed conv-transpose output -> (B, H, 2W, Cout)."""
    b = y.shape[0]
    p = (h + 2) * (w + 2)
    y = y[:, :p].reshape(b, h + 2, w + 2, 2, cout)
    y = y[:, 1:h + 1, 1:w + 1]
    return y.reshape(b, h, 2 * w, cout)


# ----------------------------------------------------------------------------
# Fused ResBlock + BatchNorm(eval) kernel (one pallas_call per block)
#   out = BN( x + conv1x1( lrelu( conv3x3( lrelu(x) ) ) ) )
# with BN scale folded into w2/b2 and applied to the residual via `scale`.
# ----------------------------------------------------------------------------
def resblock_bn(xp, blk, h, w):
    b, p, d = xp.shape
    offsets = _tap_offsets(w + 2)
    mask = _interior_mask(h, w, p)

    def kernel(x_ref, m_ref, w1_ref, b1_ref, w2_ref, b2_ref, s_ref, o_ref):
        x = x_ref[0]                                              # (P, d) bf16
        xa = _lrelu(x.astype(jnp.float32)).astype(jnp.bfloat16)   # pre-act once
        acc = jnp.zeros((p, d), jnp.float32)
        for t, off in enumerate(offsets):                         # 9 static taps
            acc = acc + jnp.dot(_row_shift(xa, off), w1_ref[t],
                                preferred_element_type=jnp.float32)
        h1 = _lrelu(acc + b1_ref[...]).astype(jnp.bfloat16)
        out = jnp.dot(h1, w2_ref[...], preferred_element_type=jnp.float32)
        out = out + b2_ref[...] + x.astype(jnp.float32) * s_ref[...]
        o_ref[0] = (out * m_ref[...]).astype(o_ref.dtype)         # re-zero pads

    return pl.pallas_call(
        kernel,
        out_shape=jax.ShapeDtypeStruct((b, p, d), jnp.bfloat16),
        grid=(b,),
        in_specs=[
            pl.BlockSpec((1, p, d), lambda i: (i, 0, 0)),   # x (conv in + residual)
            pl.BlockSpec((p, 1), lambda i: (0, 0)),          # interior mask
            pl.BlockSpec((9, d, d), lambda i: (0, 0, 0)),    # conv3x3 taps
            pl.BlockSpec((1, d), lambda i: (0, 0)),          # b1
            pl.BlockSpec((d, d), lambda i: (0, 0)),          # w2 * bn_scale
            pl.BlockSpec((1, d), lambda i: (0, 0)),          # b2*scale + shift
            pl.BlockSpec((1, d), lambda i: (0, 0)),          # bn scale (residual)
        ],
        out_specs=pl.BlockSpec((1, p, d), lambda i: (i, 0, 0)),
        compiler_params=pltpu.CompilerParams(
            dimension_semantics=_dim_semantics(b),
            vmem_limit_bytes=_vmem_limit_bytes()),
    )(xp, mask, blk["w1"], blk["b1"], blk["w2f"], blk["b2f"], blk["scale"])


# ----------------------------------------------------------------------------
# Sub-pixel ConvTranspose2d(k=(3,4), s=(1,2), p=(1,1)) (+ optional folded
# BN + LeakyReLU): stride-1 3x3 conv producing packed (even, odd) columns.
# ----------------------------------------------------------------------------
def conv_transpose_subpixel(xp, w_taps, bias, post_lrelu, h, w):
    b, p, cin = xp.shape
    nout = w_taps.shape[2]
    offsets = _tap_offsets(w + 2)

    def kernel(x_ref, w_ref, b_ref, o_ref):
        x = x_ref[0]                                              # (P, Cin) bf16
        acc = jnp.zeros((p, nout), jnp.float32)
        for t, off in enumerate(offsets):
            acc = acc + jnp.dot(_row_shift(x, off), w_ref[t],
                                preferred_element_type=jnp.float32)
        acc = acc + b_ref[...]
        if post_lrelu:
            acc = _lrelu(acc)
        o_ref[0] = acc.astype(o_ref.dtype)

    return pl.pallas_call(
        kernel,
        out_shape=jax.ShapeDtypeStruct((b, p, nout), jnp.bfloat16),
        grid=(b,),
        in_specs=[
            pl.BlockSpec((1, p, cin), lambda i: (i, 0, 0)),
            pl.BlockSpec((9, cin, nout), lambda i: (0, 0, 0)),
            pl.BlockSpec((1, nout), lambda i: (0, 0)),
        ],
        out_specs=pl.BlockSpec((1, p, nout), lambda i: (i, 0, 0)),
        compiler_params=pltpu.CompilerParams(
            dimension_semantics=_dim_semantics(b),
            vmem_limit_bytes=_vmem_limit_bytes()),
    )(xp, w_taps, bias)


# ----------------------------------------------------------------------------
# Bilinear resize (align_corners=True): per-(batch, channel) plane kernel,
# two small dense contractions (no Kronecker inflation), bf16 operands.
# ----------------------------------------------------------------------------
def _interp_matrix_np(out_size, in_size):
    a = np.zeros((out_size, in_size), np.float32)
    for i in range(out_size):
        pos = 0.0 if out_size == 1 else i * (in_size - 1) / (out_size - 1)
        i0 = int(np.floor(pos))
        i1 = min(i0 + 1, in_size - 1)
        f = pos - i0
        a[i, i0] += 1.0 - f
        a[i, i1] += f
    return a


def bilinear_resize_nchw(x_bchw, out_hw):
    b, c, hf, wf = x_bchw.shape
    ho, wo = int(out_hw[0]), int(out_hw[1])
    ah = jnp.asarray(_interp_matrix_np(ho, hf), jnp.bfloat16)        # (Ho, Hf)
    awt = jnp.asarray(_interp_matrix_np(wo, wf).T, jnp.bfloat16)     # (Wf, Wo)
    xr = x_bchw.reshape(b * c, hf, wf).astype(jnp.bfloat16)

    def kernel(x_ref, ah_ref, awt_ref, o_ref):
        t = jnp.dot(ah_ref[...], x_ref[0], preferred_element_type=jnp.float32)
        o_ref[0] = jnp.dot(t.astype(jnp.bfloat16), awt_ref[...],
                           preferred_element_type=jnp.float32)

    out = pl.pallas_call(
        kernel,
        out_shape=jax.ShapeDtypeStruct((b * c, ho, wo), jnp.float32),
        grid=(b * c,),
        in_specs=[
            pl.BlockSpec((1, hf, wf), lambda i: (i, 0, 0)),
            pl.BlockSpec((ho, hf), lambda i: (0, 0)),
            pl.BlockSpec((wf, wo), lambda i: (0, 0)),
        ],
        out_specs=pl.BlockSpec((1, ho, wo), lambda i: (i, 0, 0)),
        compiler_params=pltpu.CompilerParams(
            dimension_semantics=_dim_semantics(b * c),
            vmem_limit_bytes=_vmem_limit_bytes()),
    )(xr, ah, awt)
    return out.reshape(b, c, ho, wo)


# ----------------------------------------------------------------------------
# Full VQVAEDecoder forward (expects pre-processed params)
# ----------------------------------------------------------------------------
def vqvae_decoder_forward(x_nchw, params, upsample_size):
    x = jnp.transpose(x_nchw, (0, 2, 3, 1)).astype(jnp.bfloat16)     # NHWC
    _, h, w, d = x.shape
    xp = _pad_pixelflat(x)

    # [ResBlock(d,d) ; BatchNorm2d(d)] * n_resnet_blocks (one kernel each);
    # geometry is unchanged so consecutive blocks chain with no XLA glue.
    for blk in params["res_blocks"]:
        xp = resblock_bn(xp, blk, h, w)

    cur_w = w
    # VQVAEDecBlock: ConvT -> BN -> LeakyReLU (BN folded into weights/bias)
    for blk in params["dec_blocks"]:
        y = conv_transpose_subpixel(xp, blk["w"], blk["b"], True, h, cur_w)
        x_nhwc = _unpack_double_w(y, h, cur_w, d)
        cur_w *= 2
        xp = _pad_pixelflat(x_nhwc)

    # final two plain ConvTranspose2d layers
    nc = params["ct1_b"].shape[1] // 2
    y = conv_transpose_subpixel(xp, params["ct1_w"], params["ct1_b"], False, h, cur_w)
    x_nhwc = _unpack_double_w(y, h, cur_w, nc)
    cur_w *= 2
    xp = _pad_pixelflat(x_nhwc)

    y = conv_transpose_subpixel(xp, params["ct2_w"], params["ct2_b"], False, h, cur_w)
    x_nhwc = _unpack_double_w(y, h, cur_w, nc)
    cur_w *= 2

    # F.interpolate(mode='bilinear', align_corners=True) on NCHW planes
    feat = jnp.transpose(x_nhwc, (0, 3, 1, 2))                        # (B,C,Hf,Wf)
    return bilinear_resize_nchw(feat, upsample_size)                  # (B,C,Ho,Wo)


# ----------------------------------------------------------------------------
# One-time parameter preparation: per-tap weight layouts, bias/BN folding
# ----------------------------------------------------------------------------
def preprocess_params(raw):
    def bn_fold(gamma, beta, mean, var):
        scale = gamma / jnp.sqrt(var + BN_EPS)
        shift = beta - mean * scale
        return scale, shift

    def conv3x3_taps(w_oihw):              # (Cout, Cin, 3, 3) -> (9, Cin, Cout)
        cout, cin = w_oihw.shape[0], w_oihw.shape[1]
        return jnp.transpose(w_oihw, (2, 3, 1, 0)).reshape(9, cin, cout)

    def subpixel_taps(w_iohw):             # ConvT (Cin, Cout, 3, 4) -> (9, Cin, 2*Cout)
        cin, cout = w_iohw.shape[0], w_iohw.shape[1]
        wf = w_iohw[:, :, ::-1, :]                     # flip kh (delta_h = 1 - kh)
        z = jnp.zeros_like(wf[..., 0])                 # (Cin, Cout, 3)
        w_even = jnp.stack([wf[..., 3], wf[..., 1], z], axis=-1)   # (Cin,Cout,3,3)
        w_odd = jnp.stack([z, wf[..., 2], wf[..., 0]], axis=-1)
        w_cat = jnp.concatenate([w_even, w_odd], axis=1)            # (Cin,2Cout,3,3)
        return jnp.transpose(w_cat, (2, 3, 0, 1)).reshape(9, cin, 2 * cout)

    out = {"res_blocks": [], "dec_blocks": []}
    for blk in raw["res_blocks"]:
        d = blk["b1"].shape[0]
        scale, shift = bn_fold(blk["bn_gamma"], blk["bn_beta"],
                               blk["bn_mean"], blk["bn_var"])
        w2 = blk["w2"][:, :, 0, 0].T                                 # (Cin, Cout)
        out["res_blocks"].append({
            "w1": conv3x3_taps(blk["w1"]).astype(jnp.bfloat16),
            "b1": blk["b1"].reshape(1, d).astype(jnp.float32),
            "w2f": (w2 * scale[None, :]).astype(jnp.bfloat16),
            "b2f": (blk["b2"] * scale + shift).reshape(1, d).astype(jnp.float32),
            "scale": scale.reshape(1, d).astype(jnp.float32),
        })
    for blk in raw["dec_blocks"]:
        scale, shift = bn_fold(blk["bn_gamma"], blk["bn_beta"],
                               blk["bn_mean"], blk["bn_var"])
        taps = subpixel_taps(blk["w"])
        scale2 = jnp.concatenate([scale, scale])
        shift2 = jnp.concatenate([shift, shift])
        bias2 = jnp.concatenate([blk["b"], blk["b"]])
        out["dec_blocks"].append({
            "w": (taps * scale2[None, None, :]).astype(jnp.bfloat16),
            "b": (bias2 * scale2 + shift2).reshape(1, -1).astype(jnp.float32),
        })
    out["ct1_w"] = subpixel_taps(raw["ct1_w"]).astype(jnp.bfloat16)
    out["ct1_b"] = jnp.concatenate([raw["ct1_b"], raw["ct1_b"]]).reshape(1, -1).astype(jnp.float32)
    out["ct2_w"] = subpixel_taps(raw["ct2_w"]).astype(jnp.bfloat16)
    out["ct2_b"] = jnp.concatenate([raw["ct2_b"], raw["ct2_b"]]).reshape(1, -1).astype(jnp.float32)
    return out


# ----------------------------------------------------------------------------
# Deterministic parameter init (shapes match the nn.Module __init__, PyTorch layout)
# ----------------------------------------------------------------------------
def init_params(key, d, num_channels, downsample_rate, n_resnet_blocks):
    n_dec = int(np.log2(downsample_rate)) - 1
    kit = iter(jax.random.split(key, 128))

    def nrm(shape, s=0.05):
        return s * jax.random.normal(next(kit), shape, jnp.float32)

    params = {"res_blocks": [], "dec_blocks": []}
    for _ in range(n_resnet_blocks):
        params["res_blocks"].append({
            "w1": nrm((d, d, 3, 3)), "b1": nrm((d,)),
            "w2": nrm((d, d, 1, 1)), "b2": nrm((d,)),
            "bn_gamma": 1.0 + nrm((d,)), "bn_beta": nrm((d,)),
            "bn_mean": nrm((d,)), "bn_var": 1.0 + jnp.abs(nrm((d,))),
        })
    for _ in range(n_dec):
        params["dec_blocks"].append({
            "w": nrm((d, d, 3, 4)), "b": nrm((d,)),
            "bn_gamma": 1.0 + nrm((d,)), "bn_beta": nrm((d,)),
            "bn_mean": nrm((d,)), "bn_var": 1.0 + jnp.abs(nrm((d,))),
        })
    params["ct1_w"] = nrm((d, num_channels, 3, 4))
    params["ct1_b"] = nrm((num_channels,))
    params["ct2_w"] = nrm((num_channels, num_channels, 3, 4))
    params["ct2_b"] = nrm((num_channels,))
    return params


if __name__ == "__main__":
    # small, module-consistent shapes
    d, num_channels = 32, 4
    downsample_rate, n_resnet_blocks = 4, 1
    B, H, Win = 2, 8, 4                      # encoder output (B, d, H, W')

    key = jax.random.PRNGKey(0)
    kx, kp = jax.random.split(key)
    x = jax.random.normal(kx, (B, d, H, Win), jnp.float32)
    raw_params = init_params(kp, d, num_channels, downsample_rate, n_resnet_blocks)
    params = preprocess_params(raw_params)   # one-time weight prep / folding

    upsample_size = (12, 40)                 # registered (H, W) target

    fwd = jax.jit(lambda xx, pp: vqvae_decoder_forward(xx, pp, upsample_size))
    out = jax.block_until_ready(fwd(x, params))

    assert out.shape == (B, num_channels, upsample_size[0], upsample_size[1]), out.shape
    assert bool(jnp.all(jnp.isfinite(out)))
    print("KERNEL_OK")
</pallas_src>

<mosaic_0001>
module attributes {stable_mosaic.version = 11 : i64} {
  func.func @kernel(%arg0: i32, %arg1: memref<1x64x32xbf16, #tpu.memory_space<vmem>>, %arg2: memref<64x1xf32, #tpu.memory_space<vmem>>, %arg3: memref<9x32x32xbf16, #tpu.memory_space<vmem>>, %arg4: memref<1x32xf32, #tpu.memory_space<vmem>>, %arg5: memref<32x32xbf16, #tpu.memory_space<vmem>>, %arg6: memref<1x32xf32, #tpu.memory_space<vmem>>, %arg7: memref<1x32xf32, #tpu.memory_space<vmem>>, %arg8: memref<1x64x32xbf16, #tpu.memory_space<vmem>>) attributes {dimension_semantics = [#tpu.dimension_semantics<arbitrary>], iteration_bounds = array<i64: 2>, scalar_prefetch = 0 : i64, scratch_operands = 0 : i64, tpu.core_type = #tpu.core_type<tc>, window_params = [{transform_indices = @transform_0, window_bounds = array<i64: 1, 64, 32>}, {pipeline_mode = #tpu.pipeline_mode<synchronous>, transform_indices = @transform_1, window_bounds = array<i64: 64, 1>}, {pipeline_mode = #tpu.pipeline_mode<synchronous>, transform_indices = @transform_2, window_bounds = array<i64: 9, 32, 32>}, {pipeline_mode = #tpu.pipeline_mode<synchronous>, transform_indices = @transform_3, window_bounds = array<i64: 1, 32>}, {pipeline_mode = #tpu.pipeline_mode<synchronous>, transform_indices = @transform_4, window_bounds = array<i64: 32, 32>}, {pipeline_mode = #tpu.pipeline_mode<synchronous>, transform_indices = @transform_5, window_bounds = array<i64: 1, 32>}, {pipeline_mode = #tpu.pipeline_mode<synchronous>, transform_indices = @transform_6, window_bounds = array<i64: 1, 32>}, {transform_indices = @transform_7, window_bounds = array<i64: 1, 64, 32>}]} {
    %c0 = arith.constant 0 : index
    %c0_0 = arith.constant 0 : index
    %c0_1 = arith.constant 0 : index
    %0 = vector.load %arg1[%c0, %c0_0, %c0_1] : memref<1x64x32xbf16, #tpu.memory_space<vmem>>, vector<1x64x32xbf16>
    %1 = vector.shape_cast %0 : vector<1x64x32xbf16> to vector<64x32xbf16>
    %2 = arith.extf %1 : vector<64x32xbf16> to vector<64x32xf32>
    %cst = arith.constant 0.000000e+00 : f32
    %3 = vector.broadcast %cst : f32 to vector<64x32xf32>
    %4 = arith.cmpf ogt, %2, %3 : vector<64x32xf32>
    %cst_2 = arith.constant 0.00999999977 : f32
    %5 = vector.broadcast %cst_2 : f32 to vector<64x32xf32>
    %6 = arith.mulf %5, %2 : vector<64x32xf32>
    %7 = arith.select %4, %2, %6 : vector<64x32xi1>, vector<64x32xf32>
    %8 = arith.truncf %7 : vector<64x32xf32> to vector<64x32xbf16>
    %cst_3 = arith.constant 0.000000e+00 : f32
    %9 = vector.broadcast %cst_3 : f32 to vector<64x32xf32>
    %cst_4 = arith.constant 0.000000e+00 : bf16
    %10 = vector.broadcast %cst_4 : bf16 to vector<7x32xbf16>
    %11 = vector.extract_strided_slice %8 {offsets = [0, 0], sizes = [57, 32], strides = [1, 1]} : vector<64x32xbf16> to vector<57x32xbf16>
    %12 = tpu.concatenate %10, %11 in 0 : vector<7x32xbf16>, vector<57x32xbf16> -> vector<64x32xbf16>
    %c0_5 = arith.constant 0 : index
    %c0_6 = arith.constant 0 : index
    %c0_7 = arith.constant 0 : index
    %13 = vector.load %arg3[%c0_5, %c0_6, %c0_7] : memref<9x32x32xbf16, #tpu.memory_space<vmem>>, vector<1x32x32xbf16>
    %14 = vector.shape_cast %13 : vector<1x32x32xbf16> to vector<32x32xbf16>
    %cst_8 = arith.constant dense<0.000000e+00> : vector<64x32xf32>
    %15 = tpu.matmul %12, %14, %cst_8 {dimension_numbers = #tpu.dot_dimension_numbers<[1], [0], [0], [1], [0, 0, 1, 1], [], []>} : vector<64x32xbf16>, vector<32x32xbf16>, vector<64x32xf32> -> vector<64x32xf32>
    %16 = arith.addf %9, %15 : vector<64x32xf32>
    %cst_9 = arith.constant 0.000000e+00 : bf16
    %17 = vector.broadcast %cst_9 : bf16 to vector<6x32xbf16>
    %18 = vector.extract_strided_slice %8 {offsets = [0, 0], sizes = [58, 32], strides = [1, 1]} : vector<64x32xbf16> to vector<58x32xbf16>
    %19 = tpu.concatenate %17, %18 in 0 : vector<6x32xbf16>, vector<58x32xbf16> -> vector<64x32xbf16>
    %c1 = arith.constant 1 : index
    %c0_10 = arith.constant 0 : index
    %c0_11 = arith.constant 0 : index
    %20 = vector.load %arg3[%c1, %c0_10, %c0_11] : memref<9x32x32xbf16, #tpu.memory_space<vmem>>, vector<1x32x32xbf16>
    %21 = vector.shape_cast %20 : vector<1x32x32xbf16> to vector<32x32xbf16>
    %cst_12 = arith.constant dense<0.000000e+00> : vector<64x32xf32>
    %22 = tpu.matmul %19, %21, %cst_12 {dimension_numbers = #tpu.dot_dimension_numbers<[1], [0], [0], [1], [0, 0, 1, 1], [], []>} : vector<64x32xbf16>, vector<32x32xbf16>, vector<64x32xf32> -> vector<64x32xf32>
    %23 = arith.addf %16, %22 : vector<64x32xf32>
    %cst_13 = arith.constant 0.000000e+00 : bf16
    %24 = vector.broadcast %cst_13 : bf16 to vector<5x32xbf16>
    %25 = vector.extract_strided_slice %8 {offsets = [0, 0], sizes = [59, 32], strides = [1, 1]} : vector<64x32xbf16> to vector<59x32xbf16>
    %26 = tpu.concatenate %24, %25 in 0 : vector<5x32xbf16>, vector<59x32xbf16> -> vector<64x32xbf16>
    %c2 = arith.constant 2 : index
    %c0_14 = arith.constant 0 : index
    %c0_15 = arith.constant 0 : index
    %27 = vector.load %arg3[%c2, %c0_14, %c0_15] : memref<9x32x32xbf16, #tpu.memory_space<vmem>>, vector<1x32x32xbf16>
    %28 = vector.shape_cast %27 : vector<1x32x32xbf16> to vector<32x32xbf16>
    %cst_16 = arith.constant dense<0.000000e+00> : vector<64x32xf32>
    %29 = tpu.matmul %26, %28, %cst_16 {dimension_numbers = #tpu.dot_dimension_numbers<[1], [0], [0], [1], [0, 0, 1, 1], [], []>} : vector<64x32xbf16>, vector<32x32xbf16>, vector<64x32xf32> -> vector<64x32xf32>
    %30 = arith.addf %23, %29 : vector<64x32xf32>
    %cst_17 = arith.constant 0.000000e+00 : bf16
    %31 = vector.broadcast %cst_17 : bf16 to vector<1x32xbf16>
    %32 = vector.extract_strided_slice %8 {offsets = [0, 0], sizes = [63, 32], strides = [1, 1]} : vector<64x32xbf16> to vector<63x32xbf16>
    %33 = tpu.concatenate %31, %32 in 0 : vector<1x32xbf16>, vector<63x32xbf16> -> vector<64x32xbf16>
    %c3 = arith.constant 3 : index
    %c0_18 = arith.constant 0 : index
    %c0_19 = arith.constant 0 : index
    %34 = vector.load %arg3[%c3, %c0_18, %c0_19] : memref<9x32x32xbf16, #tpu.memory_space<vmem>>, vector<1x32x32xbf16>
    %35 = vector.shape_cast %34 : vector<1x32x32xbf16> to vector<32x32xbf16>
    %cst_20 = arith.constant dense<0.000000e+00> : vector<64x32xf32>
    %36 = tpu.matmul %33, %35, %cst_20 {dimension_numbers = #tpu.dot_dimension_numbers<[1], [0], [0], [1], [0, 0, 1, 1], [], []>} : vector<64x32xbf16>, vector<32x32xbf16>, vector<64x32xf32> -> vector<64x32xf32>
    %37 = arith.addf %30, %36 : vector<64x32xf32>
    %c4 = arith.constant 4 : index
    %c0_21 = arith.constant 0 : index
    %c0_22 = arith.constant 0 : index
    %38 = vector.load %arg3[%c4, %c0_21, %c0_22] : memref<9x32x32xbf16, #tpu.memory_space<vmem>>, vector<1x32x32xbf16>
    %39 = vector.shape_cast %38 : vector<1x32x32xbf16> to vector<32x32xbf16>
    %cst_23 = arith.constant dense<0.000000e+00> : vector<64x32xf32>
    %40 = tpu.matmul %8, %39, %cst_23 {dimension_numbers = #tpu.dot_dimension_numbers<[1], [0], [0], [1], [0, 0, 1, 1], [], []>} : vector<64x32xbf16>, vector<32x32xbf16>, vector<64x32xf32> -> vector<64x32xf32>
    %41 = arith.addf %37, %40 : vector<64x32xf32>
    %cst_24 = arith.constant 0.000000e+00 : bf16
    %42 = vector.broadcast %cst_24 : bf16 to vector<1x32xbf16>
    %43 = vector.extract_strided_slice %8 {offsets = [1, 0], sizes = [63, 32], strides = [1, 1]} : vector<64x32xbf16> to vector<63x32xbf16>
    %44 = tpu.concatenate %43, %42 in 0 : vector<63x32xbf16>, vector<1x32xbf16> -> vector<64x32xbf16>
    %c5 = arith.constant 5 : index
    %c0_25 = arith.constant 0 : index
    %c0_26 = arith.constant 0 : index
    %45 = vector.load %arg3[%c5, %c0_25, %c0_26] : memref<9x32x32xbf16, #tpu.memory_space<vmem>>, vector<1x32x32xbf16>
    %46 = vector.shape_cast %45 : vector<1x32x32xbf16> to vector<32x32xbf16>
    %cst_27 = arith.constant dense<0.000000e+00> : vector<64x32xf32>
    %47 = tpu.matmul %44, %46, %cst_27 {dimension_numbers = #tpu.dot_dimension_numbers<[1], [0], [0], [1], [0, 0, 1, 1], [], []>} : vector<64x32xbf16>, vector<32x32xbf16>, vector<64x32xf32> -> vector<64x32xf32>
    %48 = arith.addf %41, %47 : vector<64x32xf32>
    %cst_28 = arith.constant 0.000000e+00 : bf16
    %49 = vector.broadcast %cst_28 : bf16 to vector<5x32xbf16>
    %50 = vector.extract_strided_slice %8 {offsets = [5, 0], sizes = [59, 32], strides = [1, 1]} : vector<64x32xbf16> to vector<59x32xbf16>
    %51 = tpu.concatenate %50, %49 in 0 : vector<59x32xbf16>, vector<5x32xbf16> -> vector<64x32xbf16>
    %c6 = arith.constant 6 : index
    %c0_29 = arith.constant 0 : index
    %c0_30 = arith.constant 0 : index
    %52 = vector.load %arg3[%c6, %c0_29, %c0_30] : memref<9x32x32xbf16, #tpu.memory_space<vmem>>, vector<1x32x32xbf16>
    %53 = vector.shape_cast %52 : vector<1x32x32xbf16> to vector<32x32xbf16>
    %cst_31 = arith.constant dense<0.000000e+00> : vector<64x32xf32>
    %54 = tpu.matmul %51, %53, %cst_31 {dimension_numbers = #tpu.dot_dimension_numbers<[1], [0], [0], [1], [0, 0, 1, 1], [], []>} : vector<64x32xbf16>, vector<32x32xbf16>, vector<64x32xf32> -> vector<64x32xf32>
    %55 = arith.addf %48, %54 : vector<64x32xf32>
    %cst_32 = arith.constant 0.000000e+00 : bf16
    %56 = vector.broadcast %cst_32 : bf16 to vector<6x32xbf16>
    %57 = vector.extract_strided_slice %8 {offsets = [6, 0], sizes = [58, 32], strides = [1, 1]} : vector<64x32xbf16> to vector<58x32xbf16>
    %58 = tpu.concatenate %57, %56 in 0 : vector<58x32xbf16>, vector<6x32xbf16> -> vector<64x32xbf16>
    %c7 = arith.constant 7 : index
    %c0_33 = arith.constant 0 : index
    %c0_34 = arith.constant 0 : index
    %59 = vector.load %arg3[%c7, %c0_33, %c0_34] : memref<9x32x32xbf16, #tpu.memory_space<vmem>>, vector<1x32x32xbf16>
    %60 = vector.shape_cast %59 : vector<1x32x32xbf16> to vector<32x32xbf16>
    %cst_35 = arith.constant dense<0.000000e+00> : vector<64x32xf32>
    %61 = tpu.matmul %58, %60, %cst_35 {dimension_numbers = #tpu.dot_dimension_numbers<[1], [0], [0], [1], [0, 0, 1, 1], [], []>} : vector<64x32xbf16>, vector<32x32xbf16>, vector<64x32xf32> -> vector<64x32xf32>
    %62 = arith.addf %55, %61 : vector<64x32xf32>
    %cst_36 = arith.constant 0.000000e+00 : bf16
    %63 = vector.broadcast %cst_36 : bf16 to vector<7x32xbf16>
    %64 = vector.extract_strided_slice %8 {offsets = [7, 0], sizes = [57, 32], strides = [1, 1]} : vector<64x32xbf16> to vector<57x32xbf16>
    %65 = tpu.concatenate %64, %63 in 0 : vector<57x32xbf16>, vector<7x32xbf16> -> vector<64x32xbf16>
    %c8 = arith.constant 8 : index
    %c0_37 = arith.constant 0 : index
    %c0_38 = arith.constant 0 : index
    %66 = vector.load %arg3[%c8, %c0_37, %c0_38] : memref<9x32x32xbf16, #tpu.memory_space<vmem>>, vector<1x32x32xbf16>
    %67 = vector.shape_cast %66 : vector<1x32x32xbf16> to vector<32x32xbf16>
    %cst_39 = arith.constant dense<0.000000e+00> : vector<64x32xf32>
    %68 = tpu.matmul %65, %67, %cst_39 {dimension_numbers = #tpu.dot_dimension_numbers<[1], [0], [0], [1], [0, 0, 1, 1], [], []>} : vector<64x32xbf16>, vector<32x32xbf16>, vector<64x32xf32> -> vector<64x32xf32>
    %69 = arith.addf %62, %68 : vector<64x32xf32>
    %c0_40 = arith.constant 0 : index
    %c0_41 = arith.constant 0 : index
    %70 = vector.load %arg4[%c0_40, %c0_41] : memref<1x32xf32, #tpu.memory_space<vmem>>, vector<1x32xf32>
    %71 = vector.broadcast %70 : vector<1x32xf32> to vector<64x32xf32>
    %72 = arith.addf %69, %71 : vector<64x32xf32>
    %cst_42 = arith.constant 0.000000e+00 : f32
    %73 = vector.broadcast %cst_42 : f32 to vector<64x32xf32>
    %74 = arith.cmpf ogt, %72, %73 : vector<64x32xf32>
    %cst_43 = arith.constant 0.00999999977 : f32
    %75 = vector.broadcast %cst_43 : f32 to vector<64x32xf32>
    %76 = arith.mulf %75, %72 : vector<64x32xf32>
    %77 = arith.select %74, %72, %76 : vector<64x32xi1>, vector<64x32xf32>
    %78 = arith.truncf %77 : vector<64x32xf32> to vector<64x32xbf16>
    %c0_44 = arith.constant 0 : index
    %c0_45 = arith.constant 0 : index
    %79 = vector.load %arg5[%c0_44, %c0_45] : memref<32x32xbf16, #tpu.memory_space<vmem>>, vector<32x32xbf16>
    %cst_46 = arith.constant dense<0.000000e+00> : vector<64x32xf32>
    %80 = tpu.matmul %78, %79, %cst_46 {dimension_numbers = #tpu.dot_dimension_numbers<[1], [0], [0], [1], [0, 0, 1, 1], [], []>} : vector<64x32xbf16>, vector<32x32xbf16>, vector<64x32xf32> -> vector<64x32xf32>
    %c0_47 = arith.constant 0 : index
    %c0_48 = arith.constant 0 : index
    %81 = vector.load %arg6[%c0_47, %c0_48] : memref<1x32xf32, #tpu.memory_space<vmem>>, vector<1x32xf32>
    %82 = vector.broadcast %81 : vector<1x32xf32> to vector<64x32xf32>
    %83 = arith.addf %80, %82 : vector<64x32xf32>
    %84 = arith.extf %1 : vector<64x32xbf16> to vector<64x32xf32>
    %c0_49 = arith.constant 0 : index
    %c0_50 = arith.constant 0 : index
    %85 = vector.load %arg7[%c0_49, %c0_50] : memref<1x32xf32, #tpu.memory_space<vmem>>, vector<1x32xf32>
    %86 = vector.broadcast %85 : vector<1x32xf32> to vector<64x32xf32>
    %87 = arith.mulf %84, %86 : vector<64x32xf32>
    %88 = arith.addf %83, %87 : vector<64x32xf32>
    %c0_51 = arith.constant 0 : index
    %c0_52 = arith.constant 0 : index
    %89 = vector.load %arg2[%c0_51, %c0_52] : memref<64x1xf32, #tpu.memory_space<vmem>>, vector<64x1xf32>
    %90 = vector.broadcast %89 : vector<64x1xf32> to vector<64x32xf32>
    %91 = arith.mulf %88, %90 : vector<64x32xf32>
    %92 = arith.truncf %91 : vector<64x32xf32> to vector<64x32xbf16>
    %c0_53 = arith.constant 0 : index
    %c0_54 = arith.constant 0 : index
    %c0_55 = arith.constant 0 : index
    %93 = vector.load %arg8[%c0_53, %c0_54, %c0_55] : memref<1x64x32xbf16, #tpu.memory_space<vmem>>, vector<1x64x32xbf16>
    %94 = vector.shape_cast %93 : vector<1x64x32xbf16> to vector<64x32xbf16>
    %95 = vector.shape_cast %92 : vector<64x32xbf16> to vector<1x64x32xbf16>
    tpu.vector_store %arg8[%c0_53, %c0_54, %c0_55], %95 {strides = array<i32>} : memref<1x64x32xbf16, #tpu.memory_space<vmem>>, vector<1x64x32xbf16>,
    return
  }
  func.func @transform_0(%arg0: i32) -> (i32, i32, i32) {
    %c0_i32 = arith.constant 0 : i32
    %c0_i32_0 = arith.constant 0 : i32
    %c0_i32_1 = arith.constant 0 : i32
    return %arg0, %c0_i32, %c0_i32_0 : i32, i32, i32
  }
  func.func @transform_1(%arg0: i32) -> (i32, i32) {
    %c0_i32 = arith.constant 0 : i32
    %c0_i32_0 = arith.constant 0 : i32
    %c0_i32_1 = arith.constant 0 : i32
    return %c0_i32, %c0_i32_0 : i32, i32
  }
  func.func @transform_2(%arg0: i32) -> (i32, i32, i32) {
    %c0_i32 = arith.constant 0 : i32
    %c0_i32_0 = arith.constant 0 : i32
    %c0_i32_1 = arith.constant 0 : i32
    %c0_i32_2 = arith.constant 0 : i32
    return %c0_i32, %c0_i32_0, %c0_i32_1 : i32, i32, i32
  }
  func.func @transform_3(%arg0: i32) -> (i32, i32) {
    %c0_i32 = arith.constant 0 : i32
    %c0_i32_0 = arith.constant 0 : i32
    %c0_i32_1 = arith.constant 0 : i32
    return %c0_i32, %c0_i32_0 : i32, i32
  }
  func.func @transform_4(%arg0: i32) -> (i32, i32) {
    %c0_i32 = arith.constant 0 : i32
    %c0_i32_0 = arith.constant 0 : i32
    %c0_i32_1 = arith.constant 0 : i32
    return %c0_i32, %c0_i32_0 : i32, i32
  }
  func.func @transform_5(%arg0: i32) -> (i32, i32) {
    %c0_i32 = arith.constant 0 : i32
    %c0_i32_0 = arith.constant 0 : i32
    %c0_i32_1 = arith.constant 0 : i32
    return %c0_i32, %c0_i32_0 : i32, i32
  }
  func.func @transform_6(%arg0: i32) -> (i32, i32) {
    %c0_i32 = arith.constant 0 : i32
    %c0_i32_0 = arith.constant 0 : i32
    %c0_i32_1 = arith.constant 0 : i32
    return %c0_i32, %c0_i32_0 : i32, i32
  }
  func.func @transform_7(%arg0: i32) -> (i32, i32, i32) {
    %c0_i32 = arith.constant 0 : i32
    %c0_i32_0 = arith.constant 0 : i32
    %c0_i32_1 = arith.constant 0 : i32
    return %arg0, %c0_i32, %c0_i32_0 : i32, i32, i32
  }
}

module attributes {stable_mosaic.version = 11 : i64} {
  func.func @kernel(%arg0: i32, %arg1: memref<1x64x32xbf16, #tpu.memory_space<vmem>>, %arg2: memref<9x32x64xbf16, #tpu.memory_space<vmem>>, %arg3: memref<1x64xf32, #tpu.memory_space<vmem>>, %arg4: memref<1x64x64xbf16, #tpu.memory_space<vmem>>) attributes {dimension_semantics = [#tpu.dimension_semantics<arbitrary>], iteration_bounds = array<i64: 2>, scalar_prefetch = 0 : i64, scratch_operands = 0 : i64, tpu.core_type = #tpu.core_type<tc>, window_params = [{transform_indices = @transform_0, window_bounds = array<i64: 1, 64, 32>}, {pipeline_mode = #tpu.pipeline_mode<synchronous>, transform_indices = @transform_1, window_bounds = array<i64: 9, 32, 64>}, {pipeline_mode = #tpu.pipeline_mode<synchronous>, transform_indices = @transform_2, window_bounds = array<i64: 1, 64>}, {transform_indices = @transform_3, window_bounds = array<i64: 1, 64, 64>}]} {
    %c0 = arith.constant 0 : index
    %c0_0 = arith.constant 0 : index
    %c0_1 = arith.constant 0 : index
    %0 = vector.load %arg1[%c0, %c0_0, %c0_1] : memref<1x64x32xbf16, #tpu.memory_space<vmem>>, vector<1x64x32xbf16>
    %1 = vector.shape_cast %0 : vector<1x64x32xbf16> to vector<64x32xbf16>
    %cst = arith.constant 0.000000e+00 : f32
    %2 = vector.broadcast %cst : f32 to vector<64x64xf32>
    %cst_2 = arith.constant 0.000000e+00 : bf16
    %3 = vector.broadcast %cst_2 : bf16 to vector<7x32xbf16>
    %4 = vector.extract_strided_slice %1 {offsets = [0, 0], sizes = [57, 32], strides = [1, 1]} : vector<64x32xbf16> to vector<57x32xbf16>
    %5 = tpu.concatenate %3, %4 in 0 : vector<7x32xbf16>, vector<57x32xbf16> -> vector<64x32xbf16>
    %c0_3 = arith.constant 0 : index
    %c0_4 = arith.constant 0 : index
    %c0_5 = arith.constant 0 : index
    %6 = vector.load %arg2[%c0_3, %c0_4, %c0_5] : memref<9x32x64xbf16, #tpu.memory_space<vmem>>, vector<1x32x64xbf16>
    %7 = vector.shape_cast %6 : vector<1x32x64xbf16> to vector<32x64xbf16>
    %cst_6 = arith.constant dense<0.000000e+00> : vector<64x64xf32>
    %8 = tpu.matmul %5, %7, %cst_6 {dimension_numbers = #tpu.dot_dimension_numbers<[1], [0], [0], [1], [0, 0, 1, 1], [], []>} : vector<64x32xbf16>, vector<32x64xbf16>, vector<64x64xf32> -> vector<64x64xf32>
    %9 = arith.addf %2, %8 : vector<64x64xf32>
    %cst_7 = arith.constant 0.000000e+00 : bf16
    %10 = vector.broadcast %cst_7 : bf16 to vector<6x32xbf16>
    %11 = vector.extract_strided_slice %1 {offsets = [0, 0], sizes = [58, 32], strides = [1, 1]} : vector<64x32xbf16> to vector<58x32xbf16>
    %12 = tpu.concatenate %10, %11 in 0 : vector<6x32xbf16>, vector<58x32xbf16> -> vector<64x32xbf16>
    %c1 = arith.constant 1 : index
    %c0_8 = arith.constant 0 : index
    %c0_9 = arith.constant 0 : index
    %13 = vector.load %arg2[%c1, %c0_8, %c0_9] : memref<9x32x64xbf16, #tpu.memory_space<vmem>>, vector<1x32x64xbf16>
    %14 = vector.shape_cast %13 : vector<1x32x64xbf16> to vector<32x64xbf16>
    %cst_10 = arith.constant dense<0.000000e+00> : vector<64x64xf32>
    %15 = tpu.matmul %12, %14, %cst_10 {dimension_numbers = #tpu.dot_dimension_numbers<[1], [0], [0], [1], [0, 0, 1, 1], [], []>} : vector<64x32xbf16>, vector<32x64xbf16>, vector<64x64xf32> -> vector<64x64xf32>
    %16 = arith.addf %9, %15 : vector<64x64xf32>
    %cst_11 = arith.constant 0.000000e+00 : bf16
    %17 = vector.broadcast %cst_11 : bf16 to vector<5x32xbf16>
    %18 = vector.extract_strided_slice %1 {offsets = [0, 0], sizes = [59, 32], strides = [1, 1]} : vector<64x32xbf16> to vector<59x32xbf16>
    %19 = tpu.concatenate %17, %18 in 0 : vector<5x32xbf16>, vector<59x32xbf16> -> vector<64x32xbf16>
    %c2 = arith.constant 2 : index
    %c0_12 = arith.constant 0 : index
    %c0_13 = arith.constant 0 : index
    %20 = vector.load %arg2[%c2, %c0_12, %c0_13] : memref<9x32x64xbf16, #tpu.memory_space<vmem>>, vector<1x32x64xbf16>
    %21 = vector.shape_cast %20 : vector<1x32x64xbf16> to vector<32x64xbf16>
    %cst_14 = arith.constant dense<0.000000e+00> : vector<64x64xf32>
    %22 = tpu.matmul %19, %21, %cst_14 {dimension_numbers = #tpu.dot_dimension_numbers<[1], [0], [0], [1], [0, 0, 1, 1], [], []>} : vector<64x32xbf16>, vector<32x64xbf16>, vector<64x64xf32> -> vector<64x64xf32>
    %23 = arith.addf %16, %22 : vector<64x64xf32>
    %cst_15 = arith.constant 0.000000e+00 : bf16
    %24 = vector.broadcast %cst_15 : bf16 to vector<1x32xbf16>
    %25 = vector.extract_strided_slice %1 {offsets = [0, 0], sizes = [63, 32], strides = [1, 1]} : vector<64x32xbf16> to vector<63x32xbf16>
    %26 = tpu.concatenate %24, %25 in 0 : vector<1x32xbf16>, vector<63x32xbf16> -> vector<64x32xbf16>
    %c3 = arith.constant 3 : index
    %c0_16 = arith.constant 0 : index
    %c0_17 = arith.constant 0 : index
    %27 = vector.load %arg2[%c3, %c0_16, %c0_17] : memref<9x32x64xbf16, #tpu.memory_space<vmem>>, vector<1x32x64xbf16>
    %28 = vector.shape_cast %27 : vector<1x32x64xbf16> to vector<32x64xbf16>
    %cst_18 = arith.constant dense<0.000000e+00> : vector<64x64xf32>
    %29 = tpu.matmul %26, %28, %cst_18 {dimension_numbers = #tpu.dot_dimension_numbers<[1], [0], [0], [1], [0, 0, 1, 1], [], []>} : vector<64x32xbf16>, vector<32x64xbf16>, vector<64x64xf32> -> vector<64x64xf32>
    %30 = arith.addf %23, %29 : vector<64x64xf32>
    %c4 = arith.constant 4 : index
    %c0_19 = arith.constant 0 : index
    %c0_20 = arith.constant 0 : index
    %31 = vector.load %arg2[%c4, %c0_19, %c0_20] : memref<9x32x64xbf16, #tpu.memory_space<vmem>>, vector<1x32x64xbf16>
    %32 = vector.shape_cast %31 : vector<1x32x64xbf16> to vector<32x64xbf16>
    %cst_21 = arith.constant dense<0.000000e+00> : vector<64x64xf32>
    %33 = tpu.matmul %1, %32, %cst_21 {dimension_numbers = #tpu.dot_dimension_numbers<[1], [0], [0], [1], [0, 0, 1, 1], [], []>} : vector<64x32xbf16>, vector<32x64xbf16>, vector<64x64xf32> -> vector<64x64xf32>
    %34 = arith.addf %30, %33 : vector<64x64xf32>
    %cst_22 = arith.constant 0.000000e+00 : bf16
    %35 = vector.broadcast %cst_22 : bf16 to vector<1x32xbf16>
    %36 = vector.extract_strided_slice %1 {offsets = [1, 0], sizes = [63, 32], strides = [1, 1]} : vector<64x32xbf16> to vector<63x32xbf16>
    %37 = tpu.concatenate %36, %35 in 0 : vector<63x32xbf16>, vector<1x32xbf16> -> vector<64x32xbf16>
    %c5 = arith.constant 5 : index
    %c0_23 = arith.constant 0 : index
    %c0_24 = arith.constant 0 : index
    %38 = vector.load %arg2[%c5, %c0_23, %c0_24] : memref<9x32x64xbf16, #tpu.memory_space<vmem>>, vector<1x32x64xbf16>
    %39 = vector.shape_cast %38 : vector<1x32x64xbf16> to vector<32x64xbf16>
    %cst_25 = arith.constant dense<0.000000e+00> : vector<64x64xf32>
    %40 = tpu.matmul %37, %39, %cst_25 {dimension_numbers = #tpu.dot_dimension_numbers<[1], [0], [0], [1], [0, 0, 1, 1], [], []>} : vector<64x32xbf16>, vector<32x64xbf16>, vector<64x64xf32> -> vector<64x64xf32>
    %41 = arith.addf %34, %40 : vector<64x64xf32>
    %cst_26 = arith.constant 0.000000e+00 : bf16
    %42 = vector.broadcast %cst_26 : bf16 to vector<5x32xbf16>
    %43 = vector.extract_strided_slice %1 {offsets = [5, 0], sizes = [59, 32], strides = [1, 1]} : vector<64x32xbf16> to vector<59x32xbf16>
    %44 = tpu.concatenate %43, %42 in 0 : vector<59x32xbf16>, vector<5x32xbf16> -> vector<64x32xbf16>
    %c6 = arith.constant 6 : index
    %c0_27 = arith.constant 0 : index
    %c0_28 = arith.constant 0 : index
    %45 = vector.load %arg2[%c6, %c0_27, %c0_28] : memref<9x32x64xbf16, #tpu.memory_space<vmem>>, vector<1x32x64xbf16>
    %46 = vector.shape_cast %45 : vector<1x32x64xbf16> to vector<32x64xbf16>
    %cst_29 = arith.constant dense<0.000000e+00> : vector<64x64xf32>
    %47 = tpu.matmul %44, %46, %cst_29 {dimension_numbers = #tpu.dot_dimension_numbers<[1], [0], [0], [1], [0, 0, 1, 1], [], []>} : vector<64x32xbf16>, vector<32x64xbf16>, vector<64x64xf32> -> vector<64x64xf32>
    %48 = arith.addf %41, %47 : vector<64x64xf32>
    %cst_30 = arith.constant 0.000000e+00 : bf16
    %49 = vector.broadcast %cst_30 : bf16 to vector<6x32xbf16>
    %50 = vector.extract_strided_slice %1 {offsets = [6, 0], sizes = [58, 32], strides = [1, 1]} : vector<64x32xbf16> to vector<58x32xbf16>
    %51 = tpu.concatenate %50, %49 in 0 : vector<58x32xbf16>, vector<6x32xbf16> -> vector<64x32xbf16>
    %c7 = arith.constant 7 : index
    %c0_31 = arith.constant 0 : index
    %c0_32 = arith.constant 0 : index
    %52 = vector.load %arg2[%c7, %c0_31, %c0_32] : memref<9x32x64xbf16, #tpu.memory_space<vmem>>, vector<1x32x64xbf16>
    %53 = vector.shape_cast %52 : vector<1x32x64xbf16> to vector<32x64xbf16>
    %cst_33 = arith.constant dense<0.000000e+00> : vector<64x64xf32>
    %54 = tpu.matmul %51, %53, %cst_33 {dimension_numbers = #tpu.dot_dimension_numbers<[1], [0], [0], [1], [0, 0, 1, 1], [], []>} : vector<64x32xbf16>, vector<32x64xbf16>, vector<64x64xf32> -> vector<64x64xf32>
    %55 = arith.addf %48, %54 : vector<64x64xf32>
    %cst_34 = arith.constant 0.000000e+00 : bf16
    %56 = vector.broadcast %cst_34 : bf16 to vector<7x32xbf16>
    %57 = vector.extract_strided_slice %1 {offsets = [7, 0], sizes = [57, 32], strides = [1, 1]} : vector<64x32xbf16> to vector<57x32xbf16>
    %58 = tpu.concatenate %57, %56 in 0 : vector<57x32xbf16>, vector<7x32xbf16> -> vector<64x32xbf16>
    %c8 = arith.constant 8 : index
    %c0_35 = arith.constant 0 : index
    %c0_36 = arith.constant 0 : index
    %59 = vector.load %arg2[%c8, %c0_35, %c0_36] : memref<9x32x64xbf16, #tpu.memory_space<vmem>>, vector<1x32x64xbf16>
    %60 = vector.shape_cast %59 : vector<1x32x64xbf16> to vector<32x64xbf16>
    %cst_37 = arith.constant dense<0.000000e+00> : vector<64x64xf32>
    %61 = tpu.matmul %58, %60, %cst_37 {dimension_numbers = #tpu.dot_dimension_numbers<[1], [0], [0], [1], [0, 0, 1, 1], [], []>} : vector<64x32xbf16>, vector<32x64xbf16>, vector<64x64xf32> -> vector<64x64xf32>
    %62 = arith.addf %55, %61 : vector<64x64xf32>
    %c0_38 = arith.constant 0 : index
    %c0_39 = arith.constant 0 : index
    %63 = vector.load %arg3[%c0_38, %c0_39] : memref<1x64xf32, #tpu.memory_space<vmem>>, vector<1x64xf32>
    %64 = vector.broadcast %63 : vector<1x64xf32> to vector<64x64xf32>
    %65 = arith.addf %62, %64 : vector<64x64xf32>
    %cst_40 = arith.constant 0.000000e+00 : f32
    %66 = vector.broadcast %cst_40 : f32 to vector<64x64xf32>
    %67 = arith.cmpf ogt, %65, %66 : vector<64x64xf32>
    %cst_41 = arith.constant 0.00999999977 : f32
    %68 = vector.broadcast %cst_41 : f32 to vector<64x64xf32>
    %69 = arith.mulf %68, %65 : vector<64x64xf32>
    %70 = arith.select %67, %65, %69 : vector<64x64xi1>, vector<64x64xf32>
    %71 = arith.truncf %70 : vector<64x64xf32> to vector<64x64xbf16>
    %c0_42 = arith.constant 0 : index
    %c0_43 = arith.constant 0 : index
    %c0_44 = arith.constant 0 : index
    %72 = vector.load %arg4[%c0_42, %c0_43, %c0_44] : memref<1x64x64xbf16, #tpu.memory_space<vmem>>, vector<1x64x64xbf16>
    %73 = vector.shape_cast %72 : vector<1x64x64xbf16> to vector<64x64xbf16>
    %74 = vector.shape_cast %71 : vector<64x64xbf16> to vector<1x64x64xbf16>
    tpu.vector_store %arg4[%c0_42, %c0_43, %c0_44], %74 {strides = array<i32>} : memref<1x64x64xbf16, #tpu.memory_space<vmem>>, vector<1x64x64xbf16>,
    return
  }
  func.func @transform_0(%arg0: i32) -> (i32, i32, i32) {
    %c0_i32 = arith.constant 0 : i32
    %c0_i32_0 = arith.constant 0 : i32
    %c0_i32_1 = arith.constant 0 : i32
    return %arg0, %c0_i32, %c0_i32_0 : i32, i32, i32
  }
  func.func @transform_1(%arg0: i32) -> (i32, i32, i32) {
    %c0_i32 = arith.constant 0 : i32
    %c0_i32_0 = arith.constant 0 : i32
    %c0_i32_1 = arith.constant 0 : i32
    %c0_i32_2 = arith.constant 0 : i32
    return %c0_i32, %c0_i32_0, %c0_i32_1 : i32, i32, i32
  }
  func.func @transform_2(%arg0: i32) -> (i32, i32) {
    %c0_i32 = arith.constant 0 : i32
    %c0_i32_0 = arith.constant 0 : i32
    %c0_i32_1 = arith.constant 0 : i32
    return %c0_i32, %c0_i32_0 : i32, i32
  }
  func.func @transform_3(%arg0: i32) -> (i32, i32, i32) {
    %c0_i32 = arith.constant 0 : i32
    %c0_i32_0 = arith.constant 0 : i32
    %c0_i32_1 = arith.constant 0 : i32
    return %arg0, %c0_i32, %c0_i32_0 : i32, i32, i32
  }
}

module attributes {stable_mosaic.version = 11 : i64} {
  func.func @kernel(%arg0: i32, %arg1: memref<1x104x32xbf16, #tpu.memory_space<vmem>>, %arg2: memref<9x32x8xbf16, #tpu.memory_space<vmem>>, %arg3: memref<1x8xf32, #tpu.memory_space<vmem>>, %arg4: memref<1x104x8xbf16, #tpu.memory_space<vmem>>) attributes {dimension_semantics = [#tpu.dimension_semantics<arbitrary>], iteration_bounds = array<i64: 2>, scalar_prefetch = 0 : i64, scratch_operands = 0 : i64, tpu.core_type = #tpu.core_type<tc>, window_params = [{transform_indices = @transform_0, window_bounds = array<i64: 1, 104, 32>}, {pipeline_mode = #tpu.pipeline_mode<synchronous>, transform_indices = @transform_1, window_bounds = array<i64: 9, 32, 8>}, {pipeline_mode = #tpu.pipeline_mode<synchronous>, transform_indices = @transform_2, window_bounds = array<i64: 1, 8>}, {transform_indices = @transform_3, window_bounds = array<i64: 1, 104, 8>}]} {
    %c0 = arith.constant 0 : index
    %c0_0 = arith.constant 0 : index
    %c0_1 = arith.constant 0 : index
    %0 = vector.load %arg1[%c0, %c0_0, %c0_1] : memref<1x104x32xbf16, #tpu.memory_space<vmem>>, vector<1x104x32xbf16>
    %1 = vector.shape_cast %0 : vector<1x104x32xbf16> to vector<104x32xbf16>
    %cst = arith.constant 0.000000e+00 : f32
    %2 = vector.broadcast %cst : f32 to vector<104x8xf32>
    %cst_2 = arith.constant 0.000000e+00 : bf16
    %3 = vector.broadcast %cst_2 : bf16 to vector<11x32xbf16>
    %4 = vector.extract_strided_slice %1 {offsets = [0, 0], sizes = [93, 32], strides = [1, 1]} : vector<104x32xbf16> to vector<93x32xbf16>
    %5 = tpu.concatenate %3, %4 in 0 : vector<11x32xbf16>, vector<93x32xbf16> -> vector<104x32xbf16>
    %c0_3 = arith.constant 0 : index
    %c0_4 = arith.constant 0 : index
    %c0_5 = arith.constant 0 : index
    %6 = vector.load %arg2[%c0_3, %c0_4, %c0_5] : memref<9x32x8xbf16, #tpu.memory_space<vmem>>, vector<1x32x8xbf16>
    %7 = vector.shape_cast %6 : vector<1x32x8xbf16> to vector<32x8xbf16>
    %cst_6 = arith.constant dense<0.000000e+00> : vector<104x8xf32>
    %8 = tpu.matmul %5, %7, %cst_6 {dimension_numbers = #tpu.dot_dimension_numbers<[1], [0], [0], [1], [0, 0, 1, 1], [], []>} : vector<104x32xbf16>, vector<32x8xbf16>, vector<104x8xf32> -> vector<104x8xf32>
    %9 = arith.addf %2, %8 : vector<104x8xf32>
    %cst_7 = arith.constant 0.000000e+00 : bf16
    %10 = vector.broadcast %cst_7 : bf16 to vector<10x32xbf16>
    %11 = vector.extract_strided_slice %1 {offsets = [0, 0], sizes = [94, 32], strides = [1, 1]} : vector<104x32xbf16> to vector<94x32xbf16>
    %12 = tpu.concatenate %10, %11 in 0 : vector<10x32xbf16>, vector<94x32xbf16> -> vector<104x32xbf16>
    %c1 = arith.constant 1 : index
    %c0_8 = arith.constant 0 : index
    %c0_9 = arith.constant 0 : index
    %13 = vector.load %arg2[%c1, %c0_8, %c0_9] : memref<9x32x8xbf16, #tpu.memory_space<vmem>>, vector<1x32x8xbf16>
    %14 = vector.shape_cast %13 : vector<1x32x8xbf16> to vector<32x8xbf16>
    %cst_10 = arith.constant dense<0.000000e+00> : vector<104x8xf32>
    %15 = tpu.matmul %12, %14, %cst_10 {dimension_numbers = #tpu.dot_dimension_numbers<[1], [0], [0], [1], [0, 0, 1, 1], [], []>} : vector<104x32xbf16>, vector<32x8xbf16>, vector<104x8xf32> -> vector<104x8xf32>
    %16 = arith.addf %9, %15 : vector<104x8xf32>
    %cst_11 = arith.constant 0.000000e+00 : bf16
    %17 = vector.broadcast %cst_11 : bf16 to vector<9x32xbf16>
    %18 = vector.extract_strided_slice %1 {offsets = [0, 0], sizes = [95, 32], strides = [1, 1]} : vector<104x32xbf16> to vector<95x32xbf16>
    %19 = tpu.concatenate %17, %18 in 0 : vector<9x32xbf16>, vector<95x32xbf16> -> vector<104x32xbf16>
    %c2 = arith.constant 2 : index
    %c0_12 = arith.constant 0 : index
    %c0_13 = arith.constant 0 : index
    %20 = vector.load %arg2[%c2, %c0_12, %c0_13] : memref<9x32x8xbf16, #tpu.memory_space<vmem>>, vector<1x32x8xbf16>
    %21 = vector.shape_cast %20 : vector<1x32x8xbf16> to vector<32x8xbf16>
    %cst_14 = arith.constant dense<0.000000e+00> : vector<104x8xf32>
    %22 = tpu.matmul %19, %21, %cst_14 {dimension_numbers = #tpu.dot_dimension_numbers<[1], [0], [0], [1], [0, 0, 1, 1], [], []>} : vector<104x32xbf16>, vector<32x8xbf16>, vector<104x8xf32> -> vector<104x8xf32>
    %23 = arith.addf %16, %22 : vector<104x8xf32>
    %cst_15 = arith.constant 0.000000e+00 : bf16
    %24 = vector.broadcast %cst_15 : bf16 to vector<1x32xbf16>
    %25 = vector.extract_strided_slice %1 {offsets = [0, 0], sizes = [103, 32], strides = [1, 1]} : vector<104x32xbf16> to vector<103x32xbf16>
    %26 = tpu.concatenate %24, %25 in 0 : vector<1x32xbf16>, vector<103x32xbf16> -> vector<104x32xbf16>
    %c3 = arith.constant 3 : index
    %c0_16 = arith.constant 0 : index
    %c0_17 = arith.constant 0 : index
    %27 = vector.load %arg2[%c3, %c0_16, %c0_17] : memref<9x32x8xbf16, #tpu.memory_space<vmem>>, vector<1x32x8xbf16>
    %28 = vector.shape_cast %27 : vector<1x32x8xbf16> to vector<32x8xbf16>
    %cst_18 = arith.constant dense<0.000000e+00> : vector<104x8xf32>
    %29 = tpu.matmul %26, %28, %cst_18 {dimension_numbers = #tpu.dot_dimension_numbers<[1], [0], [0], [1], [0, 0, 1, 1], [], []>} : vector<104x32xbf16>, vector<32x8xbf16>, vector<104x8xf32> -> vector<104x8xf32>
    %30 = arith.addf %23, %29 : vector<104x8xf32>
    %c4 = arith.constant 4 : index
    %c0_19 = arith.constant 0 : index
    %c0_20 = arith.constant 0 : index
    %31 = vector.load %arg2[%c4, %c0_19, %c0_20] : memref<9x32x8xbf16, #tpu.memory_space<vmem>>, vector<1x32x8xbf16>
    %32 = vector.shape_cast %31 : vector<1x32x8xbf16> to vector<32x8xbf16>
    %cst_21 = arith.constant dense<0.000000e+00> : vector<104x8xf32>
    %33 = tpu.matmul %1, %32, %cst_21 {dimension_numbers = #tpu.dot_dimension_numbers<[1], [0], [0], [1], [0, 0, 1, 1], [], []>} : vector<104x32xbf16>, vector<32x8xbf16>, vector<104x8xf32> -> vector<104x8xf32>
    %34 = arith.addf %30, %33 : vector<104x8xf32>
    %cst_22 = arith.constant 0.000000e+00 : bf16
    %35 = vector.broadcast %cst_22 : bf16 to vector<1x32xbf16>
    %36 = vector.extract_strided_slice %1 {offsets = [1, 0], sizes = [103, 32], strides = [1, 1]} : vector<104x32xbf16> to vector<103x32xbf16>
    %37 = tpu.concatenate %36, %35 in 0 : vector<103x32xbf16>, vector<1x32xbf16> -> vector<104x32xbf16>
    %c5 = arith.constant 5 : index
    %c0_23 = arith.constant 0 : index
    %c0_24 = arith.constant 0 : index
    %38 = vector.load %arg2[%c5, %c0_23, %c0_24] : memref<9x32x8xbf16, #tpu.memory_space<vmem>>, vector<1x32x8xbf16>
    %39 = vector.shape_cast %38 : vector<1x32x8xbf16> to vector<32x8xbf16>
    %cst_25 = arith.constant dense<0.000000e+00> : vector<104x8xf32>
    %40 = tpu.matmul %37, %39, %cst_25 {dimension_numbers = #tpu.dot_dimension_numbers<[1], [0], [0], [1], [0, 0, 1, 1], [], []>} : vector<104x32xbf16>, vector<32x8xbf16>, vector<104x8xf32> -> vector<104x8xf32>
    %41 = arith.addf %34, %40 : vector<104x8xf32>
    %cst_26 = arith.constant 0.000000e+00 : bf16
    %42 = vector.broadcast %cst_26 : bf16 to vector<9x32xbf16>
    %43 = vector.extract_strided_slice %1 {offsets = [9, 0], sizes = [95, 32], strides = [1, 1]} : vector<104x32xbf16> to vector<95x32xbf16>
    %44 = tpu.concatenate %43, %42 in 0 : vector<95x32xbf16>, vector<9x32xbf16> -> vector<104x32xbf16>
    %c6 = arith.constant 6 : index
    %c0_27 = arith.constant 0 : index
    %c0_28 = arith.constant 0 : index
    %45 = vector.load %arg2[%c6, %c0_27, %c0_28] : memref<9x32x8xbf16, #tpu.memory_space<vmem>>, vector<1x32x8xbf16>
    %46 = vector.shape_cast %45 : vector<1x32x8xbf16> to vector<32x8xbf16>
    %cst_29 = arith.constant dense<0.000000e+00> : vector<104x8xf32>
    %47 = tpu.matmul %44, %46, %cst_29 {dimension_numbers = #tpu.dot_dimension_numbers<[1], [0], [0], [1], [0, 0, 1, 1], [], []>} : vector<104x32xbf16>, vector<32x8xbf16>, vector<104x8xf32> -> vector<104x8xf32>
    %48 = arith.addf %41, %47 : vector<104x8xf32>
    %cst_30 = arith.constant 0.000000e+00 : bf16
    %49 = vector.broadcast %cst_30 : bf16 to vector<10x32xbf16>
    %50 = vector.extract_strided_slice %1 {offsets = [10, 0], sizes = [94, 32], strides = [1, 1]} : vector<104x32xbf16> to vector<94x32xbf16>
    %51 = tpu.concatenate %50, %49 in 0 : vector<94x32xbf16>, vector<10x32xbf16> -> vector<104x32xbf16>
    %c7 = arith.constant 7 : index
    %c0_31 = arith.constant 0 : index
    %c0_32 = arith.constant 0 : index
    %52 = vector.load %arg2[%c7, %c0_31, %c0_32] : memref<9x32x8xbf16, #tpu.memory_space<vmem>>, vector<1x32x8xbf16>
    %53 = vector.shape_cast %52 : vector<1x32x8xbf16> to vector<32x8xbf16>
    %cst_33 = arith.constant dense<0.000000e+00> : vector<104x8xf32>
    %54 = tpu.matmul %51, %53, %cst_33 {dimension_numbers = #tpu.dot_dimension_numbers<[1], [0], [0], [1], [0, 0, 1, 1], [], []>} : vector<104x32xbf16>, vector<32x8xbf16>, vector<104x8xf32> -> vector<104x8xf32>
    %55 = arith.addf %48, %54 : vector<104x8xf32>
    %cst_34 = arith.constant 0.000000e+00 : bf16
    %56 = vector.broadcast %cst_34 : bf16 to vector<11x32xbf16>
    %57 = vector.extract_strided_slice %1 {offsets = [11, 0], sizes = [93, 32], strides = [1, 1]} : vector<104x32xbf16> to vector<93x32xbf16>
    %58 = tpu.concatenate %57, %56 in 0 : vector<93x32xbf16>, vector<11x32xbf16> -> vector<104x32xbf16>
    %c8 = arith.constant 8 : index
    %c0_35 = arith.constant 0 : index
    %c0_36 = arith.constant 0 : index
    %59 = vector.load %arg2[%c8, %c0_35, %c0_36] : memref<9x32x8xbf16, #tpu.memory_space<vmem>>, vector<1x32x8xbf16>
    %60 = vector.shape_cast %59 : vector<1x32x8xbf16> to vector<32x8xbf16>
    %cst_37 = arith.constant dense<0.000000e+00> : vector<104x8xf32>
    %61 = tpu.matmul %58, %60, %cst_37 {dimension_numbers = #tpu.dot_dimension_numbers<[1], [0], [0], [1], [0, 0, 1, 1], [], []>} : vector<104x32xbf16>, vector<32x8xbf16>, vector<104x8xf32> -> vector<104x8xf32>
    %62 = arith.addf %55, %61 : vector<104x8xf32>
    %c0_38 = arith.constant 0 : index
    %c0_39 = arith.constant 0 : index
    %63 = vector.load %arg3[%c0_38, %c0_39] : memref<1x8xf32, #tpu.memory_space<vmem>>, vector<1x8xf32>
    %64 = vector.broadcast %63 : vector<1x8xf32> to vector<104x8xf32>
    %65 = arith.addf %62, %64 : vector<104x8xf32>
    %66 = arith.truncf %65 : vector<104x8xf32> to vector<104x8xbf16>
    %c0_40 = arith.constant 0 : index
    %c0_41 = arith.constant 0 : index
    %c0_42 = arith.constant 0 : index
    %67 = vector.load %arg4[%c0_40, %c0_41, %c0_42] : memref<1x104x8xbf16, #tpu.memory_space<vmem>>, vector<1x104x8xbf16>
    %68 = vector.shape_cast %67 : vector<1x104x8xbf16> to vector<104x8xbf16>
    %69 = vector.shape_cast %66 : vector<104x8xbf16> to vector<1x104x8xbf16>
    tpu.vector_store %arg4[%c0_40, %c0_41, %c0_42], %69 {strides = array<i32>} : memref<1x104x8xbf16, #tpu.memory_space<vmem>>, vector<1x104x8xbf16>,
    return
  }
  func.func @transform_0(%arg0: i32) -> (i32, i32, i32) {
    %c0_i32 = arith.constant 0 : i32
    %c0_i32_0 = arith.constant 0 : i32
    %c0_i32_1 = arith.constant 0 : i32
    return %arg0, %c0_i32, %c0_i32_0 : i32, i32, i32
  }
  func.func @transform_1(%arg0: i32) -> (i32, i32, i32) {
    %c0_i32 = arith.constant 0 : i32
    %c0_i32_0 = arith.constant 0 : i32
    %c0_i32_1 = arith.constant 0 : i32
    %c0_i32_2 = arith.constant 0 : i32
    return %c0_i32, %c0_i32_0, %c0_i32_1 : i32, i32, i32
  }
  func.func @transform_2(%arg0: i32) -> (i32, i32) {
    %c0_i32 = arith.constant 0 : i32
    %c0_i32_0 = arith.constant 0 : i32
    %c0_i32_1 = arith.constant 0 : i32
    return %c0_i32, %c0_i32_0 : i32, i32
  }
  func.func @transform_3(%arg0: i32) -> (i32, i32, i32) {
    %c0_i32 = arith.constant 0 : i32
    %c0_i32_0 = arith.constant 0 : i32
    %c0_i32_1 = arith.constant 0 : i32
    return %arg0, %c0_i32, %c0_i32_0 : i32, i32, i32
  }
}

module attributes {stable_mosaic.version = 11 : i64} {
  func.func @kernel(%arg0: i32, %arg1: memref<1x184x4xbf16, #tpu.memory_space<vmem>>, %arg2: memref<9x4x8xbf16, #tpu.memory_space<vmem>>, %arg3: memref<1x8xf32, #tpu.memory_space<vmem>>, %arg4: memref<1x184x8xbf16, #tpu.memory_space<vmem>>) attributes {dimension_semantics = [#tpu.dimension_semantics<arbitrary>], iteration_bounds = array<i64: 2>, scalar_prefetch = 0 : i64, scratch_operands = 0 : i64, tpu.core_type = #tpu.core_type<tc>, window_params = [{transform_indices = @transform_0, window_bounds = array<i64: 1, 184, 4>}, {pipeline_mode = #tpu.pipeline_mode<synchronous>, transform_indices = @transform_1, window_bounds = array<i64: 9, 4, 8>}, {pipeline_mode = #tpu.pipeline_mode<synchronous>, transform_indices = @transform_2, window_bounds = array<i64: 1, 8>}, {transform_indices = @transform_3, window_bounds = array<i64: 1, 184, 8>}]} {
    %c0 = arith.constant 0 : index
    %c0_0 = arith.constant 0 : index
    %c0_1 = arith.constant 0 : index
    %0 = vector.load %arg1[%c0, %c0_0, %c0_1] : memref<1x184x4xbf16, #tpu.memory_space<vmem>>, vector<1x184x4xbf16>
    %1 = vector.shape_cast %0 : vector<1x184x4xbf16> to vector<184x4xbf16>
    %cst = arith.constant 0.000000e+00 : f32
    %2 = vector.broadcast %cst : f32 to vector<184x8xf32>
    %cst_2 = arith.constant 0.000000e+00 : bf16
    %3 = vector.broadcast %cst_2 : bf16 to vector<19x4xbf16>
    %4 = vector.extract_strided_slice %1 {offsets = [0, 0], sizes = [165, 4], strides = [1, 1]} : vector<184x4xbf16> to vector<165x4xbf16>
    %5 = tpu.concatenate %3, %4 in 0 : vector<19x4xbf16>, vector<165x4xbf16> -> vector<184x4xbf16>
    %c0_3 = arith.constant 0 : index
    %c0_4 = arith.constant 0 : index
    %c0_5 = arith.constant 0 : index
    %6 = vector.load %arg2[%c0_3, %c0_4, %c0_5] : memref<9x4x8xbf16, #tpu.memory_space<vmem>>, vector<1x4x8xbf16>
    %7 = vector.shape_cast %6 : vector<1x4x8xbf16> to vector<4x8xbf16>
    %cst_6 = arith.constant dense<0.000000e+00> : vector<184x8xf32>
    %8 = tpu.matmul %5, %7, %cst_6 {dimension_numbers = #tpu.dot_dimension_numbers<[1], [0], [0], [1], [0, 0, 1, 1], [], []>} : vector<184x4xbf16>, vector<4x8xbf16>, vector<184x8xf32> -> vector<184x8xf32>
    %9 = arith.addf %2, %8 : vector<184x8xf32>
    %cst_7 = arith.constant 0.000000e+00 : bf16
    %10 = vector.broadcast %cst_7 : bf16 to vector<18x4xbf16>
    %11 = vector.extract_strided_slice %1 {offsets = [0, 0], sizes = [166, 4], strides = [1, 1]} : vector<184x4xbf16> to vector<166x4xbf16>
    %12 = tpu.concatenate %10, %11 in 0 : vector<18x4xbf16>, vector<166x4xbf16> -> vector<184x4xbf16>
    %c1 = arith.constant 1 : index
    %c0_8 = arith.constant 0 : index
    %c0_9 = arith.constant 0 : index
    %13 = vector.load %arg2[%c1, %c0_8, %c0_9] : memref<9x4x8xbf16, #tpu.memory_space<vmem>>, vector<1x4x8xbf16>
    %14 = vector.shape_cast %13 : vector<1x4x8xbf16> to vector<4x8xbf16>
    %cst_10 = arith.constant dense<0.000000e+00> : vector<184x8xf32>
    %15 = tpu.matmul %12, %14, %cst_10 {dimension_numbers = #tpu.dot_dimension_numbers<[1], [0], [0], [1], [0, 0, 1, 1], [], []>} : vector<184x4xbf16>, vector<4x8xbf16>, vector<184x8xf32> -> vector<184x8xf32>
    %16 = arith.addf %9, %15 : vector<184x8xf32>
    %cst_11 = arith.constant 0.000000e+00 : bf16
    %17 = vector.broadcast %cst_11 : bf16 to vector<17x4xbf16>
    %18 = vector.extract_strided_slice %1 {offsets = [0, 0], sizes = [167, 4], strides = [1, 1]} : vector<184x4xbf16> to vector<167x4xbf16>
    %19 = tpu.concatenate %17, %18 in 0 : vector<17x4xbf16>, vector<167x4xbf16> -> vector<184x4xbf16>
    %c2 = arith.constant 2 : index
    %c0_12 = arith.constant 0 : index
    %c0_13 = arith.constant 0 : index
    %20 = vector.load %arg2[%c2, %c0_12, %c0_13] : memref<9x4x8xbf16, #tpu.memory_space<vmem>>, vector<1x4x8xbf16>
    %21 = vector.shape_cast %20 : vector<1x4x8xbf16> to vector<4x8xbf16>
    %cst_14 = arith.constant dense<0.000000e+00> : vector<184x8xf32>
    %22 = tpu.matmul %19, %21, %cst_14 {dimension_numbers = #tpu.dot_dimension_numbers<[1], [0], [0], [1], [0, 0, 1, 1], [], []>} : vector<184x4xbf16>, vector<4x8xbf16>, vector<184x8xf32> -> vector<184x8xf32>
    %23 = arith.addf %16, %22 : vector<184x8xf32>
    %cst_15 = arith.constant 0.000000e+00 : bf16
    %24 = vector.broadcast %cst_15 : bf16 to vector<1x4xbf16>
    %25 = vector.extract_strided_slice %1 {offsets = [0, 0], sizes = [183, 4], strides = [1, 1]} : vector<184x4xbf16> to vector<183x4xbf16>
    %26 = tpu.concatenate %24, %25 in 0 : vector<1x4xbf16>, vector<183x4xbf16> -> vector<184x4xbf16>
    %c3 = arith.constant 3 : index
    %c0_16 = arith.constant 0 : index
    %c0_17 = arith.constant 0 : index
    %27 = vector.load %arg2[%c3, %c0_16, %c0_17] : memref<9x4x8xbf16, #tpu.memory_space<vmem>>, vector<1x4x8xbf16>
    %28 = vector.shape_cast %27 : vector<1x4x8xbf16> to vector<4x8xbf16>
    %cst_18 = arith.constant dense<0.000000e+00> : vector<184x8xf32>
    %29 = tpu.matmul %26, %28, %cst_18 {dimension_numbers = #tpu.dot_dimension_numbers<[1], [0], [0], [1], [0, 0, 1, 1], [], []>} : vector<184x4xbf16>, vector<4x8xbf16>, vector<184x8xf32> -> vector<184x8xf32>
    %30 = arith.addf %23, %29 : vector<184x8xf32>
    %c4 = arith.constant 4 : index
    %c0_19 = arith.constant 0 : index
    %c0_20 = arith.constant 0 : index
    %31 = vector.load %arg2[%c4, %c0_19, %c0_20] : memref<9x4x8xbf16, #tpu.memory_space<vmem>>, vector<1x4x8xbf16>
    %32 = vector.shape_cast %31 : vector<1x4x8xbf16> to vector<4x8xbf16>
    %cst_21 = arith.constant dense<0.000000e+00> : vector<184x8xf32>
    %33 = tpu.matmul %1, %32, %cst_21 {dimension_numbers = #tpu.dot_dimension_numbers<[1], [0], [0], [1], [0, 0, 1, 1], [], []>} : vector<184x4xbf16>, vector<4x8xbf16>, vector<184x8xf32> -> vector<184x8xf32>
    %34 = arith.addf %30, %33 : vector<184x8xf32>
    %cst_22 = arith.constant 0.000000e+00 : bf16
    %35 = vector.broadcast %cst_22 : bf16 to vector<1x4xbf16>
    %36 = vector.extract_strided_slice %1 {offsets = [1, 0], sizes = [183, 4], strides = [1, 1]} : vector<184x4xbf16> to vector<183x4xbf16>
    %37 = tpu.concatenate %36, %35 in 0 : vector<183x4xbf16>, vector<1x4xbf16> -> vector<184x4xbf16>
    %c5 = arith.constant 5 : index
    %c0_23 = arith.constant 0 : index
    %c0_24 = arith.constant 0 : index
    %38 = vector.load %arg2[%c5, %c0_23, %c0_24] : memref<9x4x8xbf16, #tpu.memory_space<vmem>>, vector<1x4x8xbf16>
    %39 = vector.shape_cast %38 : vector<1x4x8xbf16> to vector<4x8xbf16>
    %cst_25 = arith.constant dense<0.000000e+00> : vector<184x8xf32>
    %40 = tpu.matmul %37, %39, %cst_25 {dimension_numbers = #tpu.dot_dimension_numbers<[1], [0], [0], [1], [0, 0, 1, 1], [], []>} : vector<184x4xbf16>, vector<4x8xbf16>, vector<184x8xf32> -> vector<184x8xf32>
    %41 = arith.addf %34, %40 : vector<184x8xf32>
    %cst_26 = arith.constant 0.000000e+00 : bf16
    %42 = vector.broadcast %cst_26 : bf16 to vector<17x4xbf16>
    %43 = vector.extract_strided_slice %1 {offsets = [17, 0], sizes = [167, 4], strides = [1, 1]} : vector<184x4xbf16> to vector<167x4xbf16>
    %44 = tpu.concatenate %43, %42 in 0 : vector<167x4xbf16>, vector<17x4xbf16> -> vector<184x4xbf16>
    %c6 = arith.constant 6 : index
    %c0_27 = arith.constant 0 : index
    %c0_28 = arith.constant 0 : index
    %45 = vector.load %arg2[%c6, %c0_27, %c0_28] : memref<9x4x8xbf16, #tpu.memory_space<vmem>>, vector<1x4x8xbf16>
    %46 = vector.shape_cast %45 : vector<1x4x8xbf16> to vector<4x8xbf16>
    %cst_29 = arith.constant dense<0.000000e+00> : vector<184x8xf32>
    %47 = tpu.matmul %44, %46, %cst_29 {dimension_numbers = #tpu.dot_dimension_numbers<[1], [0], [0], [1], [0, 0, 1, 1], [], []>} : vector<184x4xbf16>, vector<4x8xbf16>, vector<184x8xf32> -> vector<184x8xf32>
    %48 = arith.addf %41, %47 : vector<184x8xf32>
    %cst_30 = arith.constant 0.000000e+00 : bf16
    %49 = vector.broadcast %cst_30 : bf16 to vector<18x4xbf16>
    %50 = vector.extract_strided_slice %1 {offsets = [18, 0], sizes = [166, 4], strides = [1, 1]} : vector<184x4xbf16> to vector<166x4xbf16>
    %51 = tpu.concatenate %50, %49 in 0 : vector<166x4xbf16>, vector<18x4xbf16> -> vector<184x4xbf16>
    %c7 = arith.constant 7 : index
    %c0_31 = arith.constant 0 : index
    %c0_32 = arith.constant 0 : index
    %52 = vector.load %arg2[%c7, %c0_31, %c0_32] : memref<9x4x8xbf16, #tpu.memory_space<vmem>>, vector<1x4x8xbf16>
    %53 = vector.shape_cast %52 : vector<1x4x8xbf16> to vector<4x8xbf16>
    %cst_33 = arith.constant dense<0.000000e+00> : vector<184x8xf32>
    %54 = tpu.matmul %51, %53, %cst_33 {dimension_numbers = #tpu.dot_dimension_numbers<[1], [0], [0], [1], [0, 0, 1, 1], [], []>} : vector<184x4xbf16>, vector<4x8xbf16>, vector<184x8xf32> -> vector<184x8xf32>
    %55 = arith.addf %48, %54 : vector<184x8xf32>
    %cst_34 = arith.constant 0.000000e+00 : bf16
    %56 = vector.broadcast %cst_34 : bf16 to vector<19x4xbf16>
    %57 = vector.extract_strided_slice %1 {offsets = [19, 0], sizes = [165, 4], strides = [1, 1]} : vector<184x4xbf16> to vector<165x4xbf16>
    %58 = tpu.concatenate %57, %56 in 0 : vector<165x4xbf16>, vector<19x4xbf16> -> vector<184x4xbf16>
    %c8 = arith.constant 8 : index
    %c0_35 = arith.constant 0 : index
    %c0_36 = arith.constant 0 : index
    %59 = vector.load %arg2[%c8, %c0_35, %c0_36] : memref<9x4x8xbf16, #tpu.memory_space<vmem>>, vector<1x4x8xbf16>
    %60 = vector.shape_cast %59 : vector<1x4x8xbf16> to vector<4x8xbf16>
    %cst_37 = arith.constant dense<0.000000e+00> : vector<184x8xf32>
    %61 = tpu.matmul %58, %60, %cst_37 {dimension_numbers = #tpu.dot_dimension_numbers<[1], [0], [0], [1], [0, 0, 1, 1], [], []>} : vector<184x4xbf16>, vector<4x8xbf16>, vector<184x8xf32> -> vector<184x8xf32>
    %62 = arith.addf %55, %61 : vector<184x8xf32>
    %c0_38 = arith.constant 0 : index
    %c0_39 = arith.constant 0 : index
    %63 = vector.load %arg3[%c0_38, %c0_39] : memref<1x8xf32, #tpu.memory_space<vmem>>, vector<1x8xf32>
    %64 = vector.broadcast %63 : vector<1x8xf32> to vector<184x8xf32>
    %65 = arith.addf %62, %64 : vector<184x8xf32>
    %66 = arith.truncf %65 : vector<184x8xf32> to vector<184x8xbf16>
    %c0_40 = arith.constant 0 : index
    %c0_41 = arith.constant 0 : index
    %c0_42 = arith.constant 0 : index
    %67 = vector.load %arg4[%c0_40, %c0_41, %c0_42] : memref<1x184x8xbf16, #tpu.memory_space<vmem>>, vector<1x184x8xbf16>
    %68 = vector.shape_cast %67 : vector<1x184x8xbf16> to vector<184x8xbf16>
    %69 = vector.shape_cast %66 : vector<184x8xbf16> to vector<1x184x8xbf16>
    tpu.vector_store %arg4[%c0_40, %c0_41, %c0_42], %69 {strides = array<i32>} : memref<1x184x8xbf16, #tpu.memory_space<vmem>>, vector<1x184x8xbf16>,
    return
  }
  func.func @transform_0(%arg0: i32) -> (i32, i32, i32) {
    %c0_i32 = arith.constant 0 : i32
    %c0_i32_0 = arith.constant 0 : i32
    %c0_i32_1 = arith.constant 0 : i32
    return %arg0, %c0_i32, %c0_i32_0 : i32, i32, i32
  }
  func.func @transform_1(%arg0: i32) -> (i32, i32, i32) {
    %c0_i32 = arith.constant 0 : i32
    %c0_i32_0 = arith.constant 0 : i32
    %c0_i32_1 = arith.constant 0 : i32
    %c0_i32_2 = arith.constant 0 : i32
    return %c0_i32, %c0_i32_0, %c0_i32_1 : i32, i32, i32
  }
  func.func @transform_2(%arg0: i32) -> (i32, i32) {
    %c0_i32 = arith.constant 0 : i32
    %c0_i32_0 = arith.constant 0 : i32
    %c0_i32_1 = arith.constant 0 : i32
    return %c0_i32, %c0_i32_0 : i32, i32
  }
  func.func @transform_3(%arg0: i32) -> (i32, i32, i32) {
    %c0_i32 = arith.constant 0 : i32
    %c0_i32_0 = arith.constant 0 : i32
    %c0_i32_1 = arith.constant 0 : i32
    return %arg0, %c0_i32, %c0_i32_0 : i32, i32, i32
  }
}

module attributes {stable_mosaic.version = 11 : i64} {
  func.func @kernel(%arg0: i32, %arg1: memref<1x8x32xbf16, #tpu.memory_space<vmem>>, %arg2: memref<12x8xbf16, #tpu.memory_space<vmem>>, %arg3: memref<32x40xbf16, #tpu.memory_space<vmem>>, %arg4: memref<1x12x40xf32, #tpu.memory_space<vmem>>) attributes {dimension_semantics = [#tpu.dimension_semantics<parallel>], iteration_bounds = array<i64: 8>, scalar_prefetch = 0 : i64, scratch_operands = 0 : i64, tpu.core_type = #tpu.core_type<tc>, window_params = [{transform_indices = @transform_0, window_bounds = array<i64: 1, 8, 32>}, {pipeline_mode = #tpu.pipeline_mode<synchronous>, transform_indices = @transform_1, window_bounds = array<i64: 12, 8>}, {pipeline_mode = #tpu.pipeline_mode<synchronous>, transform_indices = @transform_2, window_bounds = array<i64: 32, 40>}, {transform_indices = @transform_3, window_bounds = array<i64: 1, 12, 40>}]} {
    %c0 = arith.constant 0 : index
    %c0_0 = arith.constant 0 : index
    %0 = vector.load %arg2[%c0, %c0_0] : memref<12x8xbf16, #tpu.memory_space<vmem>>, vector<12x8xbf16>
    %c0_1 = arith.constant 0 : index
    %c0_2 = arith.constant 0 : index
    %c0_3 = arith.constant 0 : index
    %1 = vector.load %arg1[%c0_1, %c0_2, %c0_3] : memref<1x8x32xbf16, #tpu.memory_space<vmem>>, vector<1x8x32xbf16>
    %2 = vector.shape_cast %1 : vector<1x8x32xbf16> to vector<8x32xbf16>
    %cst = arith.constant dense<0.000000e+00> : vector<12x32xf32>
    %3 = tpu.matmul %0, %2, %cst {dimension_numbers = #tpu.dot_dimension_numbers<[1], [0], [0], [1], [0, 0, 1, 1], [], []>} : vector<12x8xbf16>, vector<8x32xbf16>, vector<12x32xf32> -> vector<12x32xf32>
    %4 = arith.truncf %3 : vector<12x32xf32> to vector<12x32xbf16>
    %c0_4 = arith.constant 0 : index
    %c0_5 = arith.constant 0 : index
    %5 = vector.load %arg3[%c0_4, %c0_5] : memref<32x40xbf16, #tpu.memory_space<vmem>>, vector<32x40xbf16>
    %cst_6 = arith.constant dense<0.000000e+00> : vector<12x40xf32>
    %6 = tpu.matmul %4, %5, %cst_6 {dimension_numbers = #tpu.dot_dimension_numbers<[1], [0], [0], [1], [0, 0, 1, 1], [], []>} : vector<12x32xbf16>, vector<32x40xbf16>, vector<12x40xf32> -> vector<12x40xf32>
    %c0_7 = arith.constant 0 : index
    %c0_8 = arith.constant 0 : index
    %c0_9 = arith.constant 0 : index
    %7 = vector.load %arg4[%c0_7, %c0_8, %c0_9] : memref<1x12x40xf32, #tpu.memory_space<vmem>>, vector<1x12x40xf32>
    %8 = vector.shape_cast %7 : vector<1x12x40xf32> to vector<12x40xf32>
    %9 = vector.shape_cast %6 : vector<12x40xf32> to vector<1x12x40xf32>
    tpu.vector_store %arg4[%c0_7, %c0_8, %c0_9], %9 {strides = array<i32>} : memref<1x12x40xf32, #tpu.memory_space<vmem>>, vector<1x12x40xf32>,
    return
  }
  func.func @transform_0(%arg0: i32) -> (i32, i32, i32) {
    %c0_i32 = arith.constant 0 : i32
    %c0_i32_0 = arith.constant 0 : i32
    %c0_i32_1 = arith.constant 0 : i32
    return %arg0, %c0_i32, %c0_i32_0 : i32, i32, i32
  }
  func.func @transform_1(%arg0: i32) -> (i32, i32) {
    %c0_i32 = arith.constant 0 : i32
    %c0_i32_0 = arith.constant 0 : i32
    %c0_i32_1 = arith.constant 0 : i32
    return %c0_i32, %c0_i32_0 : i32, i32
  }
  func.func @transform_2(%arg0: i32) -> (i32, i32) {
    %c0_i32 = arith.constant 0 : i32
    %c0_i32_0 = arith.constant 0 : i32
    %c0_i32_1 = arith.constant 0 : i32
    return %c0_i32, %c0_i32_0 : i32, i32
  }
  func.func @transform_3(%arg0: i32) -> (i32, i32, i32) {
    %c0_i32 = arith.constant 0 : i32
    %c0_i32_0 = arith.constant 0 : i32
    %c0_i32_1 = arith.constant 0 : i32
    return %arg0, %c0_i32, %c0_i32_0 : i32, i32, i32
  }
}

</mosaic_0001>

<llo_original>
// kernel: _lambda_.5
$region0: #{_lambda_.5}
  #allocation0 [shape = 'u32[]', space=smem, size = 0x4, offset = 0x4, fixed_abs, tag = 'smem constant byte address 0x4 - core index']
  #allocation1 [shape = 'u32[72,128]{1,0:T(1,128)}', space=vmem, size = 0x9000, scoped, tag = 'internal scratch']
  %s0 = inlined_call_operand.vmem [shape: bf16[2,64,32], index: 0, kind: input, shape index: {}]
  %s1 = inlined_call_operand.vmem [shape: f32[64,1], index: 1, kind: input, shape index: {}]
  %s2 = inlined_call_operand.vmem [shape: bf16[9,32,32], index: 2, kind: input, shape index: {}]
  %s3 = inlined_call_operand.vmem [shape: f32[1,32], index: 3, kind: input, shape index: {}]
  %s4 = inlined_call_operand.vmem [shape: bf16[32,32], index: 4, kind: input, shape index: {}]
  %s5 = inlined_call_operand.vmem [shape: f32[1,32], index: 5, kind: input, shape index: {}]
  %s6 = inlined_call_operand.vmem [shape: f32[1,32], index: 6, kind: input, shape index: {}]
  %s7 = inlined_call_operand.vmem [shape: bf16[2,64,32], index: 7, kind: output, shape index: {}]
  %s8 = sld [smem:[#allocation0]]
  $region61: #{_lambda_.5} parent=0
    _
  %s10 = ssub.s32 1, %s8
  %s11 = scalar_select 0, %s10, %s8
  loop: start=0, step=1, limit=4
  $region2: #{_lambda_.5} parent=0 // loop_pre_header
    _
  $region3: #{_lambda_.5} parent=0 // loop_header
    %s13 = sphi 0, %s17
    %p14 = scmp.ge.s32.totalorder %s13, 4
    %s23 = sphi 0, %s25
    %s26 = sphi 0, %s23
    %s27 = sphi 0, %s26
    %s43 = sphi 0, %s27
    %s47 = sphi 0, %s47
    %s49 = sphi 0, %s47
    %s50 = sphi 0, %s49
    %s64 = sphi 0, %s50
    %s68 = sphi 0, %s68
    %s70 = sphi 0, %s68
    %s71 = sphi 0, %s70
    %s85 = sphi 0, %s71
    %s89 = sphi 0, %s89
    %s91 = sphi 0, %s89
    %s92 = sphi 0, %s91
    %s106 = sphi 0, %s92
    %s110 = sphi 0, %s110
    %s112 = sphi 0, %s110
    %s113 = sphi 0, %s112
    %s127 = sphi 0, %s113
    %s131 = sphi 0, %s131
    %s133 = sphi 0, %s131
    %s134 = sphi 0, %s133
    %s148 = sphi 0, %s134
    %s152 = sphi 0, %s152
    %s154 = sphi 0, %s152
    %s155 = sphi 0, %s154
    %s169 = sphi 0, %s155
    %s175 = sphi 0, %s177
    %s178 = sphi 0, %s175
    %s179 = sphi 0, %s178
    %s195 = sphi 0, %s179
  $region4: #{_lambda_.5} parent=0 // loop_header_branch
    %16 = sbr.rel (%p14) target = $region8
  $region5: #{_lambda_.5} parent=0 // loop_body
    %s18 = ssub.s32 %s13, 1
    %s19 = ssub.s32 %s13, 2
    %s20 = sadd.s32 %s13, 1
    %s21 = ssub.s32 %s13, %s20
    %p22 = scmp.eq.s32.totalorder %s21, 0
    %s24 = sadd.s32 %s23, 1
    %s25 = scalar_select %p22, %s23, %s24
    %p28 = pneg %p22
    %p29 = scmp.eq.s32.totalorder %s13, 1
    %p30 = por %p28, %p29
    %p31 = scmp.ne.s32.totalorder %s23, %s26
    %p32 = scmp.eq.s32.totalorder %s13, 0
    %p33 = por %p31, %p32
    %p34 = scmp.ne.s32.totalorder %s23, %s26
    %p35 = scmp.eq.s32.totalorder %s18, 1
    %p36 = por %p34, %p35
    %p37 = scmp.ne.s32.totalorder %s26, %s27
    %p38 = scmp.eq.s32.totalorder %s18, 0
    %p39 = por %p37, %p38
    %p40 = scmp.ne.s32.totalorder %s26, %s27
    %p41 = scmp.eq.s32.totalorder %s19, 1
    %p42 = por %p40, %p41
    %p44 = scmp.ne.s32.totalorder %s27, %s43
    %p45 = scmp.eq.s32.totalorder %s19, 0
    %p46 = por %p44, %p45
    %s48 = sadd.s32 %s47, 1
    %p51 = scmp.eq.s32.totalorder %s13, 1
    %p52 = scmp.ne.s32.totalorder %s47, %s49
    %p53 = scmp.eq.s32.totalorder %s13, 0
    %p54 = por %p52, %p53
    %p55 = scmp.ne.s32.totalorder %s47, %s49
    %p56 = scmp.eq.s32.totalorder %s18, 1
    %p57 = por %p55, %p56
    %p58 = scmp.ne.s32.totalorder %s49, %s50
    %p59 = scmp.eq.s32.totalorder %s18, 0
    %p60 = por %p58, %p59
    %p61 = scmp.ne.s32.totalorder %s49, %s50
    %p62 = scmp.eq.s32.totalorder %s19, 1
    %p63 = por %p61, %p62
    %p65 = scmp.ne.s32.totalorder %s50, %s64
    %p66 = scmp.eq.s32.totalorder %s19, 0
    %p67 = por %p65, %p66
    %s69 = sadd.s32 %s68, 1
    %p72 = scmp.eq.s32.totalorder %s13, 1
    %p73 = scmp.ne.s32.totalorder %s68, %s70
    %p74 = scmp.eq.s32.totalorder %s13, 0
    %p75 = por %p73, %p74
    %p76 = scmp.ne.s32.totalorder %s68, %s70
    %p77 = scmp.eq.s32.totalorder %s18, 1
    %p78 = por %p76, %p77
    %p79 = scmp.ne.s32.totalorder %s70, %s71
    %p80 = scmp.eq.s32.totalorder %s18, 0
    %p81 = por %p79, %p80
    %p82 = scmp.ne.s32.totalorder %s70, %s71
    %p83 = scmp.eq.s32.totalorder %s19, 1
    %p84 = por %p82, %p83
    %p86 = scmp.ne.s32.totalorder %s71, %s85
    %p87 = scmp.eq.s32.totalorder %s19, 0
    %p88 = por %p86, %p87
    %s90 = sadd.s32 %s89, 1
    %p93 = scmp.eq.s32.totalorder %s13, 1
    %p94 = scmp.ne.s32.totalorder %s89, %s91
    %p95 = scmp.eq.s32.totalorder %s13, 0
    %p96 = por %p94, %p95
    %p97 = scmp.ne.s32.totalorder %s89, %s91
    %p98 = scmp.eq.s32.totalorder %s18, 1
    %p99 = por %p97, %p98
    %p100 = scmp.ne.s32.totalorder %s91, %s92
    %p101 = scmp.eq.s32.totalorder %s18, 0
    %p102 = por %p100, %p101
    %p103 = scmp.ne.s32.totalorder %s91, %s92
    %p104 = scmp.eq.s32.totalorder %s19, 1
    %p105 = por %p103, %p104
    %p107 = scmp.ne.s32.totalorder %s92, %s106
    %p108 = scmp.eq.s32.totalorder %s19, 0
    %p109 = por %p107, %p108
    %s111 = sadd.s32 %s110, 1
    %p114 = scmp.eq.s32.totalorder %s13, 1
    %p115 = scmp.ne.s32.totalorder %s110, %s112
    %p116 = scmp.eq.s32.totalorder %s13, 0
    %p117 = por %p115, %p116
    %p118 = scmp.ne.s32.totalorder %s110, %s112
    %p119 = scmp.eq.s32.totalorder %s18, 1
    %p120 = por %p118, %p119
    %p121 = scmp.ne.s32.totalorder %s112, %s113
    %p122 = scmp.eq.s32.totalorder %s18, 0
    %p123 = por %p121, %p122
    %p124 = scmp.ne.s32.totalorder %s112, %s113
    %p125 = scmp.eq.s32.totalorder %s19, 1
    %p126 = por %p124, %p125
    %p128 = scmp.ne.s32.totalorder %s113, %s127
    %p129 = scmp.eq.s32.totalorder %s19, 0
    %p130 = por %p128, %p129
    %s132 = sadd.s32 %s131, 1
    %p135 = scmp.eq.s32.totalorder %s13, 1
    %p136 = scmp.ne.s32.totalorder %s131, %s133
    %p137 = scmp.eq.s32.totalorder %s13, 0
    %p138 = por %p136, %p137
    %p139 = scmp.ne.s32.totalorder %s131, %s133
    %p140 = scmp.eq.s32.totalorder %s18, 1
    %p141 = por %p139, %p140
    %p142 = scmp.ne.s32.totalorder %s133, %s134
    %p143 = scmp.eq.s32.totalorder %s18, 0
    %p144 = por %p142, %p143
    %p145 = scmp.ne.s32.totalorder %s133, %s134
    %p146 = scmp.eq.s32.totalorder %s19, 1
    %p147 = por %p145, %p146
    %p149 = scmp.ne.s32.totalorder %s134, %s148
    %p150 = scmp.eq.s32.totalorder %s19, 0
    %p151 = por %p149, %p150
    %s153 = sadd.s32 %s152, 1
    %p156 = scmp.eq.s32.totalorder %s13, 1
    %p157 = scmp.ne.s32.totalorder %s152, %s154
    %p158 = scmp.eq.s32.totalorder %s13, 0
    %p159 = por %p157, %p158
    %p160 = scmp.ne.s32.totalorder %s152, %s154
    %p161 = scmp.eq.s32.totalorder %s18, 1
    %p162 = por %p160, %p161
    %p163 = scmp.ne.s32.totalorder %s154, %s155
    %p164 = scmp.eq.s32.totalorder %s18, 0
    %p165 = por %p163, %p164
    %p166 = scmp.ne.s32.totalorder %s154, %s155
    %p167 = scmp.eq.s32.totalorder %s19, 1
    %p168 = por %p166, %p167
    %p170 = scmp.ne.s32.totalorder %s155, %s169
    %p171 = scmp.eq.s32.totalorder %s19, 0
    %p172 = por %p170, %p171
    %s173 = ssub.s32 %s13, %s20
    %p174 = scmp.eq.s32.totalorder %s173, 0
    %s176 = sadd.s32 %s175, 1
    %s177 = scalar_select %p174, %s175, %s176
    %p180 = pneg %p174
    %p181 = scmp.eq.s32.totalorder %s13, 1
    %p182 = por %p180, %p181
    %p183 = scmp.ne.s32.totalorder %s175, %s178
    %p184 = scmp.eq.s32.totalorder %s13, 0
    %p185 = por %p183, %p184
    %p186 = scmp.ne.s32.totalorder %s175, %s178
    %p187 = scmp.eq.s32.totalorder %s18, 1
    %p188 = por %p186, %p187
    %p189 = scmp.ne.s32.totalorder %s178, %s179
    %p190 = scmp.eq.s32.totalorder %s18, 0
    %p191 = por %p189, %p190
    %p192 = scmp.ne.s32.totalorder %s178, %s179
    %p193 = scmp.eq.s32.totalorder %s19, 1
    %p194 = por %p192, %p193
    %p196 = scmp.ne.s32.totalorder %s179, %s195
    %p197 = scmp.eq.s32.totalorder %s19, 0
    %p198 = por %p196, %p197
    %p199 = scmp.le.s32.totalorder 1, %s13
    %p200 = scmp.lt.s32.totalorder %s13, 3
    %p201 = pnand %p199, %p200
    %p202 = pneg %p201
    // Predicated region
    $region9: #{_lambda_.5} parent=5 // pred_check
      _
    $region10: #{_lambda_.5} parent=5 // pred_check_branch
      %204 = sbr.rel (%p201) target = $region12
    $region11: #{_lambda_.5} parent=5 // pred_region
      %s205 = ssub.s32 %s13, 1
      // Predicated region
      $region13: #{_lambda_.5} parent=11 // pred_check
        %p206 = pneg %p60
      $region14: #{_lambda_.5} parent=11 // pred_check_branch
        %208 = sbr.rel (%p206) target = $region16
      $region15: #{_lambda_.5} parent=11 // pred_region
        _
      $region16: #{_lambda_.5} parent=11 // pred_fallthru
        _
      // Predicated region
      $region17: #{_lambda_.5} parent=11 // pred_check
        %p209 = pneg %p81
      $region18: #{_lambda_.5} parent=11 // pred_check_branch
        %211 = sbr.rel (%p209) target = $region20
      $region19: #{_lambda_.5} parent=11 // pred_region
        _
      $region20: #{_lambda_.5} parent=11 // pred_fallthru
        _
      // Predicated region
      $region21: #{_lambda_.5} parent=11 // pred_check
        %p212 = pneg %p102
      $region22: #{_lambda_.5} parent=11 // pred_check_branch
        %214 = sbr.rel (%p212) target = $region24
      $region23: #{_lambda_.5} parent=11 // pred_region
        _
      $region24: #{_lambda_.5} parent=11 // pred_fallthru
        _
      // Predicated region
      $region25: #{_lambda_.5} parent=11 // pred_check
        %p215 = pneg %p123
      $region26: #{_lambda_.5} parent=11 // pred_check_branch
        %217 = sbr.rel (%p215) target = $region28
      $region27: #{_lambda_.5} parent=11 // pred_region
        _
      $region28: #{_lambda_.5} parent=11 // pred_fallthru
        _
      // Predicated region
      $region29: #{_lambda_.5} parent=11 // pred_check
        %p218 = pneg %p144
      $region30: #{_lambda_.5} parent=11 // pred_check_branch
        %220 = sbr.rel (%p218) target = $region32
      $region31: #{_lambda_.5} parent=11 // pred_region
        _
      $region32: #{_lambda_.5} parent=11 // pred_fallthru
        _
      // Predicated region
      $region33: #{_lambda_.5} parent=11 // pred_check
        %p221 = pneg %p165
      $region34: #{_lambda_.5} parent=11 // pred_check_branch
        %223 = sbr.rel (%p221) target = $region36
      $region35: #{_lambda_.5} parent=11 // pred_region
        _
      $region36: #{_lambda_.5} parent=11 // pred_fallthru
        _
    $region12: #{_lambda_.5} parent=5 // pred_fallthru
      _
    %p224 = scmp.lt.s32.totalorder %s13, 2
    // Predicated region
    $region37: #{_lambda_.5} parent=5 // pred_check
      %p225 = pneg %p224
    $region38: #{_lambda_.5} parent=5 // pred_check_branch
      %227 = sbr.rel (%p225) target = $region40
    $region39: #{_lambda_.5} parent=5 // pred_region
      // Predicated region
      $region41: #{_lambda_.5} parent=39 // pred_check
        %p228 = pneg %p33
      $region42: #{_lambda_.5} parent=39 // pred_check_branch
        %230 = sbr.rel (%p228) target = $region44
      $region43: #{_lambda_.5} parent=39 // pred_region
        %p231 = scmp.lt.s32.totalorder %s13, 1
        %s232 = scalar_select %p231, %s13, 1
        %s233 = smul.addr %s232, 8
        %s234 = smul.addr %s233, 4
        %s235 = scalar_lea.vmem %s0, %s234
      $region44: #{_lambda_.5} parent=39 // pred_fallthru
        _
    $region40: #{_lambda_.5} parent=5 // pred_fallthru
      _
    %p236 = scmp.le.s32.totalorder 1, %s13
    %p237 = scmp.lt.s32.totalorder %s13, 3
    %p238 = pnand %p236, %p237
    %p239 = pneg %p238
    // Predicated region
    $region45: #{_lambda_.5} parent=5 // pred_check
      _
    $region46: #{_lambda_.5} parent=5 // pred_check_branch
      %241 = sbr.rel (%p238) target = $region48
    $region47: #{_lambda_.5} parent=5 // pred_region
      %s242 = ssub.s32 %s13, 1
      %p243 = scmp.lt.s32.totalorder %s18, 1
      %s244 = scalar_select %p243, %s18, 1
      %s245 = smul.addr %s244, 8
      %s246 = smul.addr %s245, 4
      %s247 = scalar_lea.vmem %s0, %s246
      %p248 = pneg %p39
      %p249 = pneg %p36
      %p250 = pneg %p60
      %p251 = pneg %p57
      %p252 = pneg %p81
      %p253 = pneg %p78
      %p254 = pneg %p102
      %p255 = pneg %p99
      %p256 = pneg %p123
      %p257 = pneg %p120
      %p258 = pneg %p144
      %p259 = pneg %p141
      %p260 = pneg %p165
      %p261 = pneg %p162
      %p262 = pneg %p191
      %p263 = pneg %p188
      %p264 = scmp.lt.s32.totalorder %s18, 1
      %s265 = scalar_select %p264, %s18, 1
      %s266 = smul.addr %s265, 8
      %s267 = smul.addr %s266, 4
      %s268 = scalar_lea.vmem %s7, %s267
      %p269 = scmp.lt.s32.totalorder %s18, 1
      %s270 = scalar_select %p269, %s18, 1
      %s271 = smul.addr %s270, 8
      %s272 = smul.addr %s271, 4
      %s273 = scalar_lea.vmem %s0, %s272
      %p274 = scmp.lt.s32.totalorder %s18, 1
      %s275 = scalar_select %p274, %s18, 1
      %s276 = smul.addr %s275, 8
      %s277 = smul.addr %s276, 4
      %s278 = scalar_lea.vmem %s7, %s277
      %v280 = vld [vmem:[%s273] sm:$0xf]
      %v281 = vld [vmem:[%s273 + $0x4] sm:$0xf]
      %v282 = vld [vmem:[%s273 + $0x8] sm:$0xf]
      %v283 = vld [vmem:[%s273 + $0xc] sm:$0xf]
      %v284 = vld [vmem:[%s273 + $0x10] sm:$0xf]
      %v285 = vld [vmem:[%s273 + $0x14] sm:$0xf]
      %v286 = vld [vmem:[%s273 + $0x18] sm:$0xf]
      %v287 = vld [vmem:[%s273 + $0x1c] sm:$0xf]
      %v288 = vunpack.c.l.bf16 %v280
      %v289 = vunpack.c.l.bf16 %v281
      %v290 = vunpack.c.l.bf16 %v282
      %v291 = vunpack.c.l.bf16 %v283
      %v292 = vunpack.c.l.bf16 %v284
      %v293 = vunpack.c.l.bf16 %v285
      %v294 = vunpack.c.l.bf16 %v286
      %v295 = vunpack.c.l.bf16 %v287
      %vm296 = vcmp.gt.f32.partialorder %v288, 0.0
      %vm297 = vcmp.gt.f32.partialorder %v289, 0.0
      %vm298 = vcmp.gt.f32.partialorder %v290, 0.0
      %vm299 = vcmp.gt.f32.partialorder %v291, 0.0
      %vm300 = vcmp.gt.f32.partialorder %v292, 0.0
      %vm301 = vcmp.gt.f32.partialorder %v293, 0.0
      %vm302 = vcmp.gt.f32.partialorder %v294, 0.0
      %vm303 = vcmp.gt.f32.partialorder %v295, 0.0
      %v304 = vmul.f32 %v288, 0.01
      %v305 = vmul.f32 %v289, 0.01
      %v306 = vmul.f32 %v290, 0.01
      %v307 = vmul.f32 %v291, 0.01
      %v308 = vmul.f32 %v292, 0.01
      %v309 = vmul.f32 %v293, 0.01
      %v310 = vmul.f32 %v294, 0.01
      %v311 = vmul.f32 %v295, 0.01
      %v312 = vsel %vm296, %v288, %v304
      %v313 = vsel %vm297, %v289, %v305
      %v314 = vsel %vm298, %v290, %v306
      %v315 = vsel %vm299, %v291, %v307
      %v316 = vsel %vm300, %v292, %v308
      %v317 = vsel %vm301, %v293, %v309
      %v318 = vsel %vm302, %v294, %v310
      %v319 = vsel %vm303, %v295, %v311
      %v320 = vpack.c.bf16 %v312, %v312
      %v321 = vpack.c.bf16 %v313, %v313
      %v322 = vpack.c.bf16 %v314, %v314
      %v323 = vpack.c.bf16 %v315, %v315
      %v324 = vpack.c.bf16 %v316, %v316
      %v325 = vpack.c.bf16 %v317, %v317
      %v326 = vpack.c.bf16 %v318, %v318
      %v327 = vpack.c.bf16 %v319, %v319
      %v336 = vunpack.c.l.b16 %v320
      %v337 = vunpack.c.l.b16 %v321
      %v338 = vunpack.c.l.b16 %v322
      %v339 = vunpack.c.l.b16 %v323
      %v340 = vunpack.c.l.b16 %v324
      %v341 = vunpack.c.l.b16 %v325
      %v342 = vunpack.c.l.b16 %v326
      %v343 = vunpack.c.l.b16 %v327
      %v344 = vpack.c.b16 %v337, %v336
      %v345 = vpack.c.b16 %v339, %v338
      %v346 = vpack.c.b16 %v341, %v340
      %v347 = vpack.c.b16 %v343, %v342
      %vm348 = vsmask.f32 3328
      %v350 = vshrl.u32 %v344, 16
      %v352 = vrot.slane %v350, 4
      %v353 = vshll.u32 %v344, 16
      %v355 = vrot.slane %v353, 5
      %v356 = vor.u32 %v352, %v355
      %v358 = vshrl.u32 %v345, 16
      %v360 = vrot.slane %v358, 4
      %v361 = vshll.u32 %v345, 16
      %v363 = vrot.slane %v361, 5
      %v364 = vor.u32 %v360, %v363
      %v365 = vsel %vm348, %v356, %v364
      %v367 = vshrl.u32 %v346, 16
      %v369 = vrot.slane %v367, 4
      %v370 = vshll.u32 %v346, 16
      %v372 = vrot.slane %v370, 5
      %v373 = vor.u32 %v369, %v372
      %v374 = vsel %vm348, %v364, %v373
      %v376 = vshrl.u32 %v347, 16
      %v378 = vrot.slane %v376, 4
      %v379 = vshll.u32 %v347, 16
      %v381 = vrot.slane %v379, 5
      %v382 = vor.u32 %v378, %v381
      %v383 = vsel %vm348, %v373, %v382
      %vm385 = vcmask 1043456
      %vm386 = vmand %vm385, %vm348
      %v387 = vsel %vm386, 0, %v356
      %v388 = vld [vmem:[%s2] sm:$0xf]
      %v389 = vld [vmem:[%s2 + $0x4] sm:$0xf]
      %v390 = vld [vmem:[%s2 + $0x8] sm:$0xf]
      %v391 = vld [vmem:[%s2 + $0xc] sm:$0xf]
      %vm392 = vcmask 1042432
      %v393 = vrot.slane %v344, 5
      %v394 = vrot.slane %v345, 5
      %v395 = vsel %vm392, %v393, %v394
      %v396 = vrot.slane %v346, 5
      %v397 = vsel %vm392, %v394, %v396
      %v398 = vrot.slane %v347, 5
      %v399 = vsel %vm392, %v396, %v398
      %vm400 = vcmask 1042432
      %v403 = vsel %vm400, 0, %v393
      %s404 = scalar_lea.vmem %s2, 16
      %v405 = vld [vmem:[%s404] sm:$0xf]
      %v406 = vld [vmem:[%s404 + $0x4] sm:$0xf]
      %v407 = vld [vmem:[%s404 + $0x8] sm:$0xf]
      %v408 = vld [vmem:[%s404 + $0xc] sm:$0xf]
      %v413 = vunpack.c.l.b16 %v405
      %v414 = vunpack.c.l.b16 %v406
      %v415 = vunpack.c.l.b16 %v407
      %v416 = vunpack.c.l.b16 %v408
      %v417 = vpack.c.b16 %v414, %v413
      %v418 = vpack.c.b16 %v416, %v415
      %vm421 = vcmask 261120
      %v422 = vsel %vm421, %v403, 0
      %v425 = vsel %vm421, %v395, 0
      %v428 = vsel %vm421, %v397, 0
      %v431 = vsel %vm421, %v399, 0
      %433 = vmatpush.bf16.msra.mxu0 0
      %434 = vmatpush.bf16.msra.mxu0 0
      %435 = vmatpush.bf16.msra.mxu0 0
      %436 = vmatpush.bf16.msra.mxu0 0
      %437 = vmatpush.bf16.msra.mxu0 0
      %438 = vmatpush.bf16.msra.mxu0 0
      %439 = vmatpush.bf16.msra.mxu0 %v418
      %440 = vmatpush.bf16.msra.mxu0 %v417
      %441 = vmatmul.bf16.gmra.mxu0 %v422
      %v442 = vpop.f32.mrf.mxu0
      %v443 = vadd.f32 0.0, %v442
      %v444 = vpop.f32.mrf.mxu0
      %v445 = vadd.f32 0.0, %v444
      %446 = vmatmul.bf16.gmra.mxu0 %v425
      %v447 = vpop.f32.mrf.mxu0
      %v448 = vadd.f32 0.0, %v447
      %v449 = vpop.f32.mrf.mxu0
      %v450 = vadd.f32 0.0, %v449
      %451 = vmatmul.bf16.gmra.mxu0 %v428
      %v452 = vpop.f32.mrf.mxu0
      %v453 = vadd.f32 0.0, %v452
      %v454 = vpop.f32.mrf.mxu0
      %v455 = vadd.f32 0.0, %v454
      %456 = vmatmul.bf16.gmra.mxu0 %v431
      %v457 = vpop.f32.mrf.mxu0
      %v458 = vadd.f32 0.0, %v457
      %v459 = vpop.f32.mrf.mxu0
      %v460 = vadd.f32 0.0, %v459
      %461 = vdwg.mxu0
      %v466 = vunpack.c.l.b16 %v388
      %v467 = vunpack.c.l.b16 %v389
      %v468 = vunpack.c.l.b16 %v390
      %v469 = vunpack.c.l.b16 %v391
      %v470 = vpack.c.b16 %v467, %v466
      %v471 = vpack.c.b16 %v469, %v468
      %v475 = vsel %vm421, %v387, 0
      %v478 = vsel %vm421, %v365, 0
      %v481 = vsel %vm421, %v374, 0
      %v484 = vsel %vm421, %v383, 0
      %486 = vmatpush.bf16.msra.mxu0 0
      %487 = vmatpush.bf16.msra.mxu0 0
      %488 = vmatpush.bf16.msra.mxu0 0
      %489 = vmatpush.bf16.msra.mxu0 0
      %490 = vmatpush.bf16.msra.mxu0 0
      %491 = vmatpush.bf16.msra.mxu0 0
      %492 = vmatpush.bf16.msra.mxu0 %v471
      %493 = vmatpush.bf16.msra.mxu0 %v470
      %494 = vmatmul.bf16.gmra.mxu0 %v475
      %v495 = vpop.f32.mrf.mxu0
      %v496 = vadd.f32 %v443, %v495
      %v497 = vpop.f32.mrf.mxu0
      %v498 = vadd.f32 %v445, %v497
      %499 = vmatmul.bf16.gmra.mxu0 %v478
      %v500 = vpop.f32.mrf.mxu0
      %v501 = vadd.f32 %v448, %v500
      %v502 = vpop.f32.mrf.mxu0
      %v503 = vadd.f32 %v450, %v502
      %504 = vmatmul.bf16.gmra.mxu0 %v481
      %v505 = vpop.f32.mrf.mxu0
      %v506 = vadd.f32 %v453, %v505
      %v507 = vpop.f32.mrf.mxu0
      %v508 = vadd.f32 %v455, %v507
      %509 = vmatmul.bf16.gmra.mxu0 %v484
      %v510 = vpop.f32.mrf.mxu0
      %v511 = vadd.f32 %v458, %v510
      %v512 = vpop.f32.mrf.mxu0
      %v513 = vadd.f32 %v460, %v512
      %514 = vdwg.mxu0
      %vm515 = vsmask.f32 2304
      %v516 = vrot.slane %v350, 5
      %v517 = vrot.slane %v353, 6
      %v518 = vor.u32 %v516, %v517
      %v519 = vrot.slane %v358, 5
      %v520 = vrot.slane %v361, 6
      %v521 = vor.u32 %v519, %v520
      %v522 = vsel %vm515, %v518, %v521
      %v523 = vrot.slane %v367, 5
      %v524 = vrot.slane %v370, 6
      %v525 = vor.u32 %v523, %v524
      %v526 = vsel %vm515, %v521, %v525
      %v527 = vrot.slane %v376, 5
      %v528 = vrot.slane %v379, 6
      %v529 = vor.u32 %v527, %v528
      %v530 = vsel %vm515, %v525, %v529
      %vm532 = vmand %vm392, %vm515
      %v533 = vsel %vm532, 0, %v518
      %s534 = scalar_lea.vmem %s2, 32
      %v535 = vld [vmem:[%s534] sm:$0xf]
      %v536 = vld [vmem:[%s534 + $0x4] sm:$0xf]
      %v537 = vld [vmem:[%s534 + $0x8] sm:$0xf]
      %v538 = vld [vmem:[%s534 + $0xc] sm:$0xf]
      %v543 = vunpack.c.l.b16 %v535
      %v544 = vunpack.c.l.b16 %v536
      %v545 = vunpack.c.l.b16 %v537
      %v546 = vunpack.c.l.b16 %v538
      %v547 = vpack.c.b16 %v544, %v543
      %v548 = vpack.c.b16 %v546, %v545
      %v552 = vsel %vm421, %v533, 0
      %v555 = vsel %vm421, %v522, 0
      %v558 = vsel %vm421, %v526, 0
      %v561 = vsel %vm421, %v530, 0
      %563 = vmatpush.bf16.msra.mxu0 0
      %564 = vmatpush.bf16.msra.mxu0 0
      %565 = vmatpush.bf16.msra.mxu0 0
      %566 = vmatpush.bf16.msra.mxu0 0
      %567 = vmatpush.bf16.msra.mxu0 0
      %568 = vmatpush.bf16.msra.mxu0 0
      %569 = vmatpush.bf16.msra.mxu0 %v548
      %570 = vmatpush.bf16.msra.mxu0 %v547
      %571 = vmatmul.bf16.gmra.mxu0 %v552
      %v572 = vpop.f32.mrf.mxu0
      %v573 = vadd.f32 0.0, %v572
      %v574 = vpop.f32.mrf.mxu0
      %v575 = vadd.f32 0.0, %v574
      %576 = vmatmul.bf16.gmra.mxu0 %v555
      %v577 = vpop.f32.mrf.mxu0
      %v578 = vadd.f32 0.0, %v577
      %v579 = vpop.f32.mrf.mxu0
      %v580 = vadd.f32 0.0, %v579
      %581 = vmatmul.bf16.gmra.mxu0 %v558
      %v582 = vpop.f32.mrf.mxu0
      %v583 = vadd.f32 0.0, %v582
      %v584 = vpop.f32.mrf.mxu0
      %v585 = vadd.f32 0.0, %v584
      %586 = vmatmul.bf16.gmra.mxu0 %v561
      %v587 = vpop.f32.mrf.mxu0
      %v588 = vadd.f32 0.0, %v587
      %v589 = vpop.f32.mrf.mxu0
      %v590 = vadd.f32 0.0, %v589
      %591 = vdwg.mxu0
      %v592 = vadd.f32 %v496, %v573
      %v593 = vadd.f32 %v498, %v575
      %v594 = vadd.f32 %v501, %v578
      %v595 = vadd.f32 %v503, %v580
      %v596 = vadd.f32 %v506, %v583
      %v597 = vadd.f32 %v508, %v585
      %v598 = vadd.f32 %v511, %v588
      %v599 = vadd.f32 %v513, %v590
      %vm600 = vsmask.f32 256
      %v601 = vrot.slane %v350, 7
      %v602 = vor.u32 %v601, %v353
      %v603 = vrot.slane %v358, 7
      %v604 = vor.u32 %v603, %v361
      %v605 = vsel %vm600, %v601, %v604
      %v606 = vrot.slane %v367, 7
      %v607 = vor.u32 %v606, %v370
      %v608 = vsel %vm600, %v603, %v607
      %v609 = vrot.slane %v376, 7
      %v610 = vor.u32 %v609, %v379
      %v611 = vsel %vm600, %v606, %v610
      %vm613 = vcmask 1040384
      %vm614 = vmand %vm613, %vm600
      %v615 = vsel %vm614, 0, %v602
      %s616 = scalar_lea.vmem %s2, 48
      %v617 = vld [vmem:[%s616] sm:$0xf]
      %v618 = vld [vmem:[%s616 + $0x4] sm:$0xf]
      %v619 = vld [vmem:[%s616 + $0x8] sm:$0xf]
      %v620 = vld [vmem:[%s616 + $0xc] sm:$0xf]
      %v625 = vunpack.c.l.b16 %v617
      %v626 = vunpack.c.l.b16 %v618
      %v627 = vunpack.c.l.b16 %v619
      %v628 = vunpack.c.l.b16 %v620
      %v629 = vpack.c.b16 %v626, %v625
      %v630 = vpack.c.b16 %v628, %v627
      %v634 = vsel %vm421, %v615, 0
      %v637 = vsel %vm421, %v605, 0
      %v640 = vsel %vm421, %v608, 0
      %v643 = vsel %vm421, %v611, 0
      %645 = vmatpush.bf16.msra.mxu0 0
      %646 = vmatpush.bf16.msra.mxu0 0
      %647 = vmatpush.bf16.msra.mxu0 0
      %648 = vmatpush.bf16.msra.mxu0 0
      %649 = vmatpush.bf16.msra.mxu0 0
      %650 = vmatpush.bf16.msra.mxu0 0
      %651 = vmatpush.bf16.msra.mxu0 %v630
      %652 = vmatpush.bf16.msra.mxu0 %v629
      %653 = vmatmul.bf16.gmra.mxu0 %v634
      %v654 = vpop.f32.mrf.mxu0
      %v655 = vadd.f32 0.0, %v654
      %v656 = vpop.f32.mrf.mxu0
      %v657 = vadd.f32 0.0, %v656
      %658 = vmatmul.bf16.gmra.mxu0 %v637
      %v659 = vpop.f32.mrf.mxu0
      %v660 = vadd.f32 0.0, %v659
      %v661 = vpop.f32.mrf.mxu0
      %v662 = vadd.f32 0.0, %v661
      %663 = vmatmul.bf16.gmra.mxu0 %v640
      %v664 = vpop.f32.mrf.mxu0
      %v665 = vadd.f32 0.0, %v664
      %v666 = vpop.f32.mrf.mxu0
      %v667 = vadd.f32 0.0, %v666
      %668 = vmatmul.bf16.gmra.mxu0 %v643
      %v669 = vpop.f32.mrf.mxu0
      %v670 = vadd.f32 0.0, %v669
      %v671 = vpop.f32.mrf.mxu0
      %v672 = vadd.f32 0.0, %v671
      %673 = vdwg.mxu0
      %v674 = vadd.f32 %v592, %v655
      %v675 = vadd.f32 %v593, %v657
      %v676 = vadd.f32 %v594, %v660
      %v677 = vadd.f32 %v595, %v662
      %v678 = vadd.f32 %v596, %v665
      %v679 = vadd.f32 %v597, %v667
      %v680 = vadd.f32 %v598, %v670
      %v681 = vadd.f32 %v599, %v672
      %s682 = scalar_lea.vmem %s2, 64
      %v683 = vld [vmem:[%s682] sm:$0xf]
      %v684 = vld [vmem:[%s682 + $0x4] sm:$0xf]
      %v685 = vld [vmem:[%s682 + $0x8] sm:$0xf]
      %v686 = vld [vmem:[%s682 + $0xc] sm:$0xf]
      %v691 = vunpack.c.l.b16 %v683
      %v692 = vunpack.c.l.b16 %v684
      %v693 = vunpack.c.l.b16 %v685
      %v694 = vunpack.c.l.b16 %v686
      %v695 = vpack.c.b16 %v692, %v691
      %v696 = vpack.c.b16 %v694, %v693
      %v699 = vsel %vm421, %v344, 0
      %v701 = vsel %vm421, %v345, 0
      %v703 = vsel %vm421, %v346, 0
      %v705 = vsel %vm421, %v347, 0
      %707 = vmatpush.bf16.msra.mxu0 0
      %708 = vmatpush.bf16.msra.mxu0 0
      %709 = vmatpush.bf16.msra.mxu0 0
      %710 = vmatpush.bf16.msra.mxu0 0
      %711 = vmatpush.bf16.msra.mxu0 0
      %712 = vmatpush.bf16.msra.mxu0 0
      %713 = vmatpush.bf16.msra.mxu0 %v696
      %714 = vmatpush.bf16.msra.mxu0 %v695
      %715 = vmatmul.bf16.gmra.mxu0 %v699
      %v716 = vpop.f32.mrf.mxu0
      %v717 = vadd.f32 0.0, %v716
      %v718 = vpop.f32.mrf.mxu0
      %v719 = vadd.f32 0.0, %v718
      %720 = vmatmul.bf16.gmra.mxu0 %v701
      %v721 = vpop.f32.mrf.mxu0
      %v722 = vadd.f32 0.0, %v721
      %v723 = vpop.f32.mrf.mxu0
      %v724 = vadd.f32 0.0, %v723
      %725 = vmatmul.bf16.gmra.mxu0 %v703
      %v726 = vpop.f32.mrf.mxu0
      %v727 = vadd.f32 0.0, %v726
      %v728 = vpop.f32.mrf.mxu0
      %v729 = vadd.f32 0.0, %v728
      %730 = vmatmul.bf16.gmra.mxu0 %v705
      %v731 = vpop.f32.mrf.mxu0
      %v732 = vadd.f32 0.0, %v731
      %v733 = vpop.f32.mrf.mxu0
      %v734 = vadd.f32 0.0, %v733
      %735 = vdwg.mxu0
      %v736 = vadd.f32 %v674, %v717
      %v737 = vadd.f32 %v675, %v719
      %v738 = vadd.f32 %v676, %v722
      %v739 = vadd.f32 %v677, %v724
      %v740 = vadd.f32 %v678, %v727
      %v741 = vadd.f32 %v679, %v729
      %v742 = vadd.f32 %v680, %v732
      %v743 = vadd.f32 %v681, %v734
      %vm744 = vsmask.f32 7424
      %v745 = vrot.slane %v353, 1
      %v746 = vor.u32 %v350, %v745
      %v747 = vrot.slane %v361, 1
      %v748 = vsel %vm744, %v746, %v747
      %v749 = vor.u32 %v358, %v747
      %v750 = vrot.slane %v370, 1
      %v751 = vsel %vm744, %v749, %v750
      %v752 = vor.u32 %v367, %v750
      %v753 = vrot.slane %v379, 1
      %v754 = vsel %vm744, %v752, %v753
      %v755 = vor.u32 %v376, %v753
      %vm757 = vcmask 1047552
      %vm758 = vmand %vm757, %vm744
      %v759 = vsel %vm758, %v755, 0
      %s760 = scalar_lea.vmem %s2, 80
      %v761 = vld [vmem:[%s760] sm:$0xf]
      %v762 = vld [vmem:[%s760 + $0x4] sm:$0xf]
      %v763 = vld [vmem:[%s760 + $0x8] sm:$0xf]
      %v764 = vld [vmem:[%s760 + $0xc] sm:$0xf]
      %v769 = vunpack.c.l.b16 %v761
      %v770 = vunpack.c.l.b16 %v762
      %v771 = vunpack.c.l.b16 %v763
      %v772 = vunpack.c.l.b16 %v764
      %v773 = vpack.c.b16 %v770, %v769
      %v774 = vpack.c.b16 %v772, %v771
      %v778 = vsel %vm421, %v748, 0
      %v781 = vsel %vm421, %v751, 0
      %v784 = vsel %vm421, %v754, 0
      %v787 = vsel %vm421, %v759, 0
      %789 = vmatpush.bf16.msra.mxu0 0
      %790 = vmatpush.bf16.msra.mxu0 0
      %791 = vmatpush.bf16.msra.mxu0 0
      %792 = vmatpush.bf16.msra.mxu0 0
      %793 = vmatpush.bf16.msra.mxu0 0
      %794 = vmatpush.bf16.msra.mxu0 0
      %795 = vmatpush.bf16.msra.mxu0 %v774
      %796 = vmatpush.bf16.msra.mxu0 %v773
      %797 = vmatmul.bf16.gmra.mxu0 %v778
      %v798 = vpop.f32.mrf.mxu0
      %v799 = vadd.f32 0.0, %v798
      %v800 = vpop.f32.mrf.mxu0
      %v801 = vadd.f32 0.0, %v800
      %802 = vmatmul.bf16.gmra.mxu0 %v781
      %v803 = vpop.f32.mrf.mxu0
      %v804 = vadd.f32 0.0, %v803
      %v805 = vpop.f32.mrf.mxu0
      %v806 = vadd.f32 0.0, %v805
      %807 = vmatmul.bf16.gmra.mxu0 %v784
      %v808 = vpop.f32.mrf.mxu0
      %v809 = vadd.f32 0.0, %v808
      %v810 = vpop.f32.mrf.mxu0
      %v811 = vadd.f32 0.0, %v810
      %812 = vmatmul.bf16.gmra.mxu0 %v787
      %v813 = vpop.f32.mrf.mxu0
      %v814 = vadd.f32 0.0, %v813
      %v815 = vpop.f32.mrf.mxu0
      %v816 = vadd.f32 0.0, %v815
      %817 = vdwg.mxu0
      %v818 = vadd.f32 %v736, %v799
      %v819 = vadd.f32 %v737, %v801
      %v820 = vadd.f32 %v738, %v804
      %v821 = vadd.f32 %v739, %v806
      %v822 = vadd.f32 %v740, %v809
      %v823 = vadd.f32 %v741, %v811
      %v824 = vadd.f32 %v742, %v814
      %v825 = vadd.f32 %v743, %v816
      %vm826 = vsmask.f32 5376
      %v827 = vrot.slane %v350, 2
      %v828 = vrot.slane %v353, 3
      %v829 = vor.u32 %v827, %v828
      %v830 = vrot.slane %v358, 2
      %v831 = vrot.slane %v361, 3
      %v832 = vor.u32 %v830, %v831
      %v833 = vsel %vm826, %v829, %v832
      %v834 = vrot.slane %v367, 2
      %v835 = vrot.slane %v370, 3
      %v836 = vor.u32 %v834, %v835
      %v837 = vsel %vm826, %v832, %v836
      %v838 = vrot.slane %v376, 2
      %v839 = vrot.slane %v379, 3
      %v840 = vor.u32 %v838, %v839
      %v841 = vsel %vm826, %v836, %v840
      %vm843 = vcmask 1045504
      %vm844 = vmand %vm843, %vm826
      %v845 = vsel %vm844, %v840, 0
      %s846 = scalar_lea.vmem %s2, 96
      %v847 = vld [vmem:[%s846] sm:$0xf]
      %v848 = vld [vmem:[%s846 + $0x4] sm:$0xf]
      %v849 = vld [vmem:[%s846 + $0x8] sm:$0xf]
      %v850 = vld [vmem:[%s846 + $0xc] sm:$0xf]
      %v855 = vunpack.c.l.b16 %v847
      %v856 = vunpack.c.l.b16 %v848
      %v857 = vunpack.c.l.b16 %v849
      %v858 = vunpack.c.l.b16 %v850
      %v859 = vpack.c.b16 %v856, %v855
      %v860 = vpack.c.b16 %v858, %v857
      %v864 = vsel %vm421, %v833, 0
      %v867 = vsel %vm421, %v837, 0
      %v870 = vsel %vm421, %v841, 0
      %v873 = vsel %vm421, %v845, 0
      %875 = vmatpush.bf16.msra.mxu0 0
      %876 = vmatpush.bf16.msra.mxu0 0
      %877 = vmatpush.bf16.msra.mxu0 0
      %878 = vmatpush.bf16.msra.mxu0 0
      %879 = vmatpush.bf16.msra.mxu0 0
      %880 = vmatpush.bf16.msra.mxu0 0
      %881 = vmatpush.bf16.msra.mxu0 %v860
      %882 = vmatpush.bf16.msra.mxu0 %v859
      %883 = vmatmul.bf16.gmra.mxu0 %v864
      %v884 = vpop.f32.mrf.mxu0
      %v885 = vadd.f32 0.0, %v884
      %v886 = vpop.f32.mrf.mxu0
      %v887 = vadd.f32 0.0, %v886
      %888 = vmatmul.bf16.gmra.mxu0 %v867
      %v889 = vpop.f32.mrf.mxu0
      %v890 = vadd.f32 0.0, %v889
      %v891 = vpop.f32.mrf.mxu0
      %v892 = vadd.f32 0.0, %v891
      %893 = vmatmul.bf16.gmra.mxu0 %v870
      %v894 = vpop.f32.mrf.mxu0
      %v895 = vadd.f32 0.0, %v894
      %v896 = vpop.f32.mrf.mxu0
      %v897 = vadd.f32 0.0, %v896
      %898 = vmatmul.bf16.gmra.mxu0 %v873
      %v899 = vpop.f32.mrf.mxu0
      %v900 = vadd.f32 0.0, %v899
      %v901 = vpop.f32.mrf.mxu0
      %v902 = vadd.f32 0.0, %v901
      %903 = vdwg.mxu0
      %v904 = vadd.f32 %v818, %v885
      %v905 = vadd.f32 %v819, %v887
      %v906 = vadd.f32 %v820, %v890
      %v907 = vadd.f32 %v821, %v892
      %v908 = vadd.f32 %v822, %v895
      %v909 = vadd.f32 %v823, %v897
      %v910 = vadd.f32 %v824, %v900
      %v911 = vadd.f32 %v825, %v902
      %vm912 = vcmask 1044480
      %v913 = vrot.slane %v344, 3
      %v914 = vrot.slane %v345, 3
      %v915 = vsel %vm912, %v913, %v914
      %v916 = vrot.slane %v346, 3
      %v917 = vsel %vm912, %v914, %v916
      %v918 = vrot.slane %v347, 3
      %v919 = vsel %vm912, %v916, %v918
      %vm920 = vcmask 1044480
      %v922 = vsel %vm920, %v918, 0
      %s923 = scalar_lea.vmem %s2, 112
      %v924 = vld [vmem:[%s923] sm:$0xf]
      %v925 = vld [vmem:[%s923 + $0x4] sm:$0xf]
      %v926 = vld [vmem:[%s923 + $0x8] sm:$0xf]
      %v927 = vld [vmem:[%s923 + $0xc] sm:$0xf]
      %v932 = vunpack.c.l.b16 %v924
      %v933 = vunpack.c.l.b16 %v925
      %v934 = vunpack.c.l.b16 %v926
      %v935 = vunpack.c.l.b16 %v927
      %v936 = vpack.c.b16 %v933, %v932
      %v937 = vpack.c.b16 %v935, %v934
      %v941 = vsel %vm421, %v915, 0
      %v944 = vsel %vm421, %v917, 0
      %v947 = vsel %vm421, %v919, 0
      %v949 = vsel %vm421, %v922, 0
      %951 = vmatpush.bf16.msra.mxu0 0
      %952 = vmatpush.bf16.msra.mxu0 0
      %953 = vmatpush.bf16.msra.mxu0 0
      %954 = vmatpush.bf16.msra.mxu0 0
      %955 = vmatpush.bf16.msra.mxu0 0
      %956 = vmatpush.bf16.msra.mxu0 0
      %957 = vmatpush.bf16.msra.mxu0 %v937
      %958 = vmatpush.bf16.msra.mxu0 %v936
      %959 = vmatmul.bf16.gmra.mxu0 %v941
      %v960 = vpop.f32.mrf.mxu0
      %v961 = vadd.f32 0.0, %v960
      %v962 = vpop.f32.mrf.mxu0
      %v963 = vadd.f32 0.0, %v962
      %964 = vmatmul.bf16.gmra.mxu0 %v944
      %v965 = vpop.f32.mrf.mxu0
      %v966 = vadd.f32 0.0, %v965
      %v967 = vpop.f32.mrf.mxu0
      %v968 = vadd.f32 0.0, %v967
      %969 = vmatmul.bf16.gmra.mxu0 %v947
      %v970 = vpop.f32.mrf.mxu0
      %v971 = vadd.f32 0.0, %v970
      %v972 = vpop.f32.mrf.mxu0
      %v973 = vadd.f32 0.0, %v972
      %974 = vmatmul.bf16.gmra.mxu0 %v949
      %v975 = vpop.f32.mrf.mxu0
      %v976 = vadd.f32 0.0, %v975
      %v977 = vpop.f32.mrf.mxu0
      %v978 = vadd.f32 0.0, %v977
      %979 = vdwg.mxu0
      %v980 = vadd.f32 %v904, %v961
      %v981 = vadd.f32 %v905, %v963
      %v982 = vadd.f32 %v906, %v966
      %v983 = vadd.f32 %v907, %v968
      %v984 = vadd.f32 %v908, %v971
      %v985 = vadd.f32 %v909, %v973
      %v986 = vadd.f32 %v910, %v976
      %v987 = vadd.f32 %v911, %v978
      %vm988 = vsmask.f32 4352
      %v989 = vrot.slane %v350, 3
      %v990 = vrot.slane %v353, 4
      %v991 = vor.u32 %v989, %v990
      %v992 = vrot.slane %v358, 3
      %v993 = vrot.slane %v361, 4
      %v994 = vor.u32 %v992, %v993
      %v995 = vsel %vm988, %v991, %v994
      %v996 = vrot.slane %v367, 3
      %v997 = vrot.slane %v370, 4
      %v998 = vor.u32 %v996, %v997
      %v999 = vsel %vm988, %v994, %v998
      %v1000 = vrot.slane %v376, 3
      %v1001 = vrot.slane %v379, 4
      %v1002 = vor.u32 %v1000, %v1001
      %v1003 = vsel %vm988, %v998, %v1002
      %vm1005 = vmand %vm912, %vm988
      %v1006 = vsel %vm1005, %v1002, 0
      %s1007 = scalar_lea.vmem %s2, 128
      %v1008 = vld [vmem:[%s1007] sm:$0xf]
      %v1009 = vld [vmem:[%s1007 + $0x4] sm:$0xf]
      %v1010 = vld [vmem:[%s1007 + $0x8] sm:$0xf]
      %v1011 = vld [vmem:[%s1007 + $0xc] sm:$0xf]
      %v1016 = vunpack.c.l.b16 %v1008
      %v1017 = vunpack.c.l.b16 %v1009
      %v1018 = vunpack.c.l.b16 %v1010
      %v1019 = vunpack.c.l.b16 %v1011
      %v1020 = vpack.c.b16 %v1017, %v1016
      %v1021 = vpack.c.b16 %v1019, %v1018
      %v1025 = vsel %vm421, %v995, 0
      %v1028 = vsel %vm421, %v999, 0
      %v1031 = vsel %vm421, %v1003, 0
      %v1034 = vsel %vm421, %v1006, 0
      %1036 = vmatpush.bf16.msra.mxu0 0
      %1037 = vmatpush.bf16.msra.mxu0 0
      %1038 = vmatpush.bf16.msra.mxu0 0
      %1039 = vmatpush.bf16.msra.mxu0 0
      %1040 = vmatpush.bf16.msra.mxu0 0
      %1041 = vmatpush.bf16.msra.mxu0 0
      %1042 = vmatpush.bf16.msra.mxu0 %v1021
      %1043 = vmatpush.bf16.msra.mxu0 %v1020
      %1044 = vmatmul.bf16.gmra.mxu0 %v1025
      %v1045 = vpop.f32.mrf.mxu0
      %v1046 = vadd.f32 0.0, %v1045
      %v1047 = vpop.f32.mrf.mxu0
      %v1048 = vadd.f32 0.0, %v1047
      %1049 = vmatmul.bf16.gmra.mxu0 %v1028
      %v1050 = vpop.f32.mrf.mxu0
      %v1051 = vadd.f32 0.0, %v1050
      %v1052 = vpop.f32.mrf.mxu0
      %v1053 = vadd.f32 0.0, %v1052
      %1054 = vmatmul.bf16.gmra.mxu0 %v1031
      %v1055 = vpop.f32.mrf.mxu0
      %v1056 = vadd.f32 0.0, %v1055
      %v1057 = vpop.f32.mrf.mxu0
      %v1058 = vadd.f32 0.0, %v1057
      %1059 = vmatmul.bf16.gmra.mxu0 %v1034
      %v1060 = vpop.f32.mrf.mxu0
      %v1061 = vadd.f32 0.0, %v1060
      %v1062 = vpop.f32.mrf.mxu0
      %v1063 = vadd.f32 0.0, %v1062
      %1064 = vdwg.mxu0
      %v1065 = vadd.f32 %v980, %v1046
      %v1066 = vadd.f32 %v981, %v1048
      %v1067 = vadd.f32 %v982, %v1051
      %v1068 = vadd.f32 %v983, %v1053
      %v1069 = vadd.f32 %v984, %v1056
      %v1070 = vadd.f32 %v985, %v1058
      %v1071 = vadd.f32 %v986, %v1061
      %v1072 = vadd.f32 %v987, %v1063
      %v1073 = vld [vmem:[%s3] sm:$0x1]
      %v1075 = vperm.slane %v1073, 0
      %v1077 = vadd.f32 %v1065, %v1075
      %v1078 = vadd.f32 %v1066, %v1075
      %v1079 = vadd.f32 %v1067, %v1075
      %v1080 = vadd.f32 %v1068, %v1075
      %v1081 = vadd.f32 %v1069, %v1075
      %v1082 = vadd.f32 %v1070, %v1075
      %v1083 = vadd.f32 %v1071, %v1075
      %v1084 = vadd.f32 %v1072, %v1075
      %vm1085 = vcmp.gt.f32.partialorder %v1077, 0.0
      %vm1086 = vcmp.gt.f32.partialorder %v1078, 0.0
      %vm1087 = vcmp.gt.f32.partialorder %v1079, 0.0
      %vm1088 = vcmp.gt.f32.partialorder %v1080, 0.0
      %vm1089 = vcmp.gt.f32.partialorder %v1081, 0.0
      %vm1090 = vcmp.gt.f32.partialorder %v1082, 0.0
      %vm1091 = vcmp.gt.f32.partialorder %v1083, 0.0
      %vm1092 = vcmp.gt.f32.partialorder %v1084, 0.0
      %v1093 = vmul.f32 %v1077, 0.01
      %v1094 = vmul.f32 %v1078, 0.01
      %v1095 = vmul.f32 %v1079, 0.01
      %v1096 = vmul.f32 %v1080, 0.01
      %v1097 = vmul.f32 %v1081, 0.01
      %v1098 = vmul.f32 %v1082, 0.01
      %v1099 = vmul.f32 %v1083, 0.01
      %v1100 = vmul.f32 %v1084, 0.01
      %v1101 = vsel %vm1085, %v1077, %v1093
      %v1102 = vsel %vm1086, %v1078, %v1094
      %v1103 = vsel %vm1087, %v1079, %v1095
      %v1104 = vsel %vm1088, %v1080, %v1096
      %v1105 = vsel %vm1089, %v1081, %v1097
      %v1106 = vsel %vm1090, %v1082, %v1098
      %v1107 = vsel %vm1091, %v1083, %v1099
      %v1108 = vsel %vm1092, %v1084, %v1100
      %v1109 = vpack.c.bf16 %v1102, %v1101
      %v1110 = vpack.c.bf16 %v1104, %v1103
      %v1111 = vpack.c.bf16 %v1106, %v1105
      %v1112 = vpack.c.bf16 %v1108, %v1107
      %v1113 = vld [vmem:[%s4] sm:$0xf]
      %v1114 = vld [vmem:[%s4 + $0x4] sm:$0xf]
      %v1115 = vld [vmem:[%s4 + $0x8] sm:$0xf]
      %v1116 = vld [vmem:[%s4 + $0xc] sm:$0xf]
      %v1117 = vld [vmem:[%s5] sm:$0x1]
      %v1119 = vperm.slane %v1117, 0
      %v1125 = vunpack.c.l.b16 %v1113
      %v1126 = vunpack.c.l.b16 %v1114
      %v1127 = vunpack.c.l.b16 %v1115
      %v1128 = vunpack.c.l.b16 %v1116
      %v1129 = vpack.c.b16 %v1126, %v1125
      %v1130 = vpack.c.b16 %v1128, %v1127
      %v1134 = vsel %vm421, %v1109, 0
      %v1137 = vsel %vm421, %v1110, 0
      %v1140 = vsel %vm421, %v1111, 0
      %v1143 = vsel %vm421, %v1112, 0
      %1145 = vmatpush.bf16.msra.mxu0 0
      %1146 = vmatpush.bf16.msra.mxu0 0
      %1147 = vmatpush.bf16.msra.mxu0 0
      %1148 = vmatpush.bf16.msra.mxu0 0
      %1149 = vmatpush.bf16.msra.mxu0 0
      %1150 = vmatpush.bf16.msra.mxu0 0
      %1151 = vmatpush.bf16.msra.mxu0 %v1130
      %1152 = vmatpush.bf16.msra.mxu0 %v1129
      %1153 = vmatmul.bf16.gmra.mxu0 %v1134
      %v1154 = vpop.f32.mrf.mxu0
      %v1155 = vadd.f32 %v1119, %v1154
      %v1156 = vpop.f32.mrf.mxu0
      %v1157 = vadd.f32 %v1119, %v1156
      %1158 = vmatmul.bf16.gmra.mxu0 %v1137
      %v1159 = vpop.f32.mrf.mxu0
      %v1160 = vadd.f32 %v1119, %v1159
      %v1161 = vpop.f32.mrf.mxu0
      %v1162 = vadd.f32 %v1119, %v1161
      %1163 = vmatmul.bf16.gmra.mxu0 %v1140
      %v1164 = vpop.f32.mrf.mxu0
      %v1165 = vadd.f32 %v1119, %v1164
      %v1166 = vpop.f32.mrf.mxu0
      %v1167 = vadd.f32 %v1119, %v1166
      %1168 = vmatmul.bf16.gmra.mxu0 %v1143
      %v1169 = vpop.f32.mrf.mxu0
      %v1170 = vadd.f32 %v1119, %v1169
      %v1171 = vpop.f32.mrf.mxu0
      %v1172 = vadd.f32 %v1119, %v1171
      %1173 = vdwg.mxu0
      %v1174 = vld [vmem:[%s6] sm:$0x1]
      %v1176 = vperm.slane %v1174, 0
      %v1178 = vmul.f32 %v288, %v1176
      %v1179 = vmul.f32 %v289, %v1176
      %v1180 = vmul.f32 %v290, %v1176
      %v1181 = vmul.f32 %v291, %v1176
      %v1182 = vmul.f32 %v292, %v1176
      %v1183 = vmul.f32 %v293, %v1176
      %v1184 = vmul.f32 %v294, %v1176
      %v1185 = vmul.f32 %v295, %v1176
      %v1186 = vadd.f32 %v1155, %v1178
      %v1187 = vadd.f32 %v1157, %v1179
      %v1188 = vadd.f32 %v1160, %v1180
      %v1189 = vadd.f32 %v1162, %v1181
      %v1190 = vadd.f32 %v1165, %v1182
      %v1191 = vadd.f32 %v1167, %v1183
      %v1192 = vadd.f32 %v1170, %v1184
      %v1193 = vadd.f32 %v1172, %v1185
      %v1194 = vld [vmem:[%s1] sm:$0xff]
      %v1195 = vld [vmem:[%s1 + $0x8] sm:$0xff]
      %v1196 = vld [vmem:[%s1 + $0x10] sm:$0xff]
      %v1197 = vld [vmem:[%s1 + $0x18] sm:$0xff]
      %v1198 = vld [vmem:[%s1 + $0x20] sm:$0xff]
      %v1199 = vld [vmem:[%s1 + $0x28] sm:$0xff]
      %v1200 = vld [vmem:[%s1 + $0x30] sm:$0xff]
      %v1201 = vld [vmem:[%s1 + $0x38] sm:$0xff]
      %1203 = vset.pattern.permute.xlu0 0
      %1204 = vperm.xlu0 %1203, %v1194
      %v1205 = vpop.permute.xlu0 %1204
      %1208 = vset.pattern.permute.xlu0 0
      %1209 = vperm.xlu0 %1208, %v1195
      %v1210 = vpop.permute.xlu0 %1209
      %1213 = vset.pattern.permute.xlu0 0
      %1214 = vperm.xlu0 %1213, %v1196
      %v1215 = vpop.permute.xlu0 %1214
      %1218 = vset.pattern.permute.xlu0 0
      %1219 = vperm.xlu0 %1218, %v1197
      %v1220 = vpop.permute.xlu0 %1219
      %1223 = vset.pattern.permute.xlu0 0
      %1224 = vperm.xlu0 %1223, %v1198
      %v1225 = vpop.permute.xlu0 %1224
      %1228 = vset.pattern.permute.xlu0 0
      %1229 = vperm.xlu0 %1228, %v1199
      %v1230 = vpop.permute.xlu0 %1229
      %1233 = vset.pattern.permute.xlu0 0
      %1234 = vperm.xlu0 %1233, %v1200
      %v1235 = vpop.permute.xlu0 %1234
      %1238 = vset.pattern.permute.xlu0 0
      %1239 = vperm.xlu0 %1238, %v1201
      %v1240 = vpop.permute.xlu0 %1239
      %v1242 = vmul.f32 %v1186, %v1205
      %v1243 = vmul.f32 %v1187, %v1210
      %v1244 = vmul.f32 %v1188, %v1215
      %v1245 = vmul.f32 %v1189, %v1220
      %v1246 = vmul.f32 %v1190, %v1225
      %v1247 = vmul.f32 %v1191, %v1230
      %v1248 = vmul.f32 %v1192, %v1235
      %v1249 = vmul.f32 %v1193, %v1240
      %v1250 = vpack.c.bf16 %v1242, %v1242
      %v1251 = vpack.c.bf16 %v1243, %v1243
      %v1252 = vpack.c.bf16 %v1244, %v1244
      %v1253 = vpack.c.bf16 %v1245, %v1245
      %v1254 = vpack.c.bf16 %v1246, %v1246
      %v1255 = vpack.c.bf16 %v1247, %v1247
      %v1256 = vpack.c.bf16 %v1248, %v1248
      %v1257 = vpack.c.bf16 %v1249, %v1249
      %vm1258 = vcmask 257024
      %1259 = vst.msk [vmem:[%s278] sm:$0xf] %vm1258, %v1250
      %1260 = vst.msk [vmem:[%s278 + $0x4] sm:$0xf] %vm1258, %v1251
      %1261 = vst.msk [vmem:[%s278 + $0x8] sm:$0xf] %vm1258, %v1252
      %1262 = vst.msk [vmem:[%s278 + $0xc] sm:$0xf] %vm1258, %v1253
      %1263 = vst.msk [vmem:[%s278 + $0x10] sm:$0xf] %vm1258, %v1254
      %1264 = vst.msk [vmem:[%s278 + $0x14] sm:$0xf] %vm1258, %v1255
      %1265 = vst.msk [vmem:[%s278 + $0x18] sm:$0xf] %vm1258, %v1256
      %1266 = vst.msk [vmem:[%s278 + $0x1c] sm:$0xf] %vm1258, %v1257
      %p1267 = scmp.lt.s32.totalorder %s18, 1
      %s1268 = scalar_select %p1267, %s18, 1
      %s1269 = smul.addr %s1268, 8
      %s1270 = smul.addr %s1269, 4
      %s1271 = scalar_lea.vmem %s7, %s1270
      // Predicated region
      $region49: #{_lambda_.5} parent=47 // pred_check
        %p1272 = pneg %p188
      $region50: #{_lambda_.5} parent=47 // pred_check_branch
        %1274 = sbr.rel (%p1272) target = $region52
      $region51: #{_lambda_.5} parent=47 // pred_region
        _
      $region52: #{_lambda_.5} parent=47 // pred_fallthru
        _
    $region48: #{_lambda_.5} parent=5 // pred_fallthru
      _
    %p1275 = scmp.le.s32.totalorder 2, %s13
    // Predicated region
    $region53: #{_lambda_.5} parent=5 // pred_check
      %p1276 = pneg %p1275
    $region54: #{_lambda_.5} parent=5 // pred_check_branch
      %1278 = sbr.rel (%p1276) target = $region56
    $region55: #{_lambda_.5} parent=5 // pred_region
      %s1279 = ssub.s32 %s13, 2
      // Predicated region
      $region57: #{_lambda_.5} parent=55 // pred_check
        %p1280 = pneg %p194
      $region58: #{_lambda_.5} parent=55 // pred_check_branch
        %1282 = sbr.rel (%p1280) target = $region60
      $region59: #{_lambda_.5} parent=55 // pred_region
        %p1283 = scmp.lt.s32.totalorder %s19, 1
        %s1284 = scalar_select %p1283, %s19, 1
        %s1285 = smul.addr %s1284, 8
        %s1286 = smul.addr %s1285, 4
        %s1287 = scalar_lea.vmem %s7, %s1286
      $region60: #{_lambda_.5} parent=55 // pred_fallthru
        _
    $region56: #{_lambda_.5} parent=5 // pred_fallthru
      _
  $region6: #{_lambda_.5} parent=0 // loop_footer
    %s17 = sadd.s32 1, %s13
  $region7: #{_lambda_.5} parent=0 // loop_footer_branch
    %12 = sbr.rel target = $region3
  $region8: #{_lambda_.5} parent=0 // loop_exit
    _

// kernel: _lambda_.6
$region0: #{_lambda_.6}
  #allocation0 [shape = 'u32[]', space=smem, size = 0x4, offset = 0x4, fixed_abs, tag = 'smem constant byte address 0x4 - core index']
  #allocation1 [shape = 'u32[72,128]{1,0:T(1,128)}', space=vmem, size = 0x9000, scoped, tag = 'internal scratch']
  %s0 = inlined_call_operand.vmem [shape: bf16[2,64,32], index: 0, kind: input, shape index: {}]
  %s1 = inlined_call_operand.vmem [shape: bf16[9,32,64], index: 1, kind: input, shape index: {}]
  %s2 = inlined_call_operand.vmem [shape: f32[1,64], index: 2, kind: input, shape index: {}]
  %s3 = inlined_call_operand.vmem [shape: bf16[2,64,64], index: 3, kind: output, shape index: {}]
  %s4 = sld [smem:[#allocation0]]
  $region45: #{_lambda_.6} parent=0
    _
  %s6 = ssub.s32 1, %s4
  %s7 = scalar_select 0, %s6, %s4
  loop: start=0, step=1, limit=4
  $region2: #{_lambda_.6} parent=0 // loop_pre_header
    _
  $region3: #{_lambda_.6} parent=0 // loop_header
    %s9 = sphi 0, %s13
    %p10 = scmp.ge.s32.totalorder %s9, 4
    %s19 = sphi 0, %s21
    %s22 = sphi 0, %s19
    %s23 = sphi 0, %s22
    %s39 = sphi 0, %s23
    %s43 = sphi 0, %s43
    %s45 = sphi 0, %s43
    %s46 = sphi 0, %s45
    %s60 = sphi 0, %s46
    %s64 = sphi 0, %s64
    %s66 = sphi 0, %s64
    %s67 = sphi 0, %s66
    %s81 = sphi 0, %s67
    %s87 = sphi 0, %s89
    %s90 = sphi 0, %s87
    %s91 = sphi 0, %s90
    %s107 = sphi 0, %s91
  $region4: #{_lambda_.6} parent=0 // loop_header_branch
    %12 = sbr.rel (%p10) target = $region8
  $region5: #{_lambda_.6} parent=0 // loop_body
    %s14 = ssub.s32 %s9, 1
    %s15 = ssub.s32 %s9, 2
    %s16 = sadd.s32 %s9, 1
    %s17 = ssub.s32 %s9, %s16
    %p18 = scmp.eq.s32.totalorder %s17, 0
    %s20 = sadd.s32 %s19, 1
    %s21 = scalar_select %p18, %s19, %s20
    %p24 = pneg %p18
    %p25 = scmp.eq.s32.totalorder %s9, 1
    %p26 = por %p24, %p25
    %p27 = scmp.ne.s32.totalorder %s19, %s22
    %p28 = scmp.eq.s32.totalorder %s9, 0
    %p29 = por %p27, %p28
    %p30 = scmp.ne.s32.totalorder %s19, %s22
    %p31 = scmp.eq.s32.totalorder %s14, 1
    %p32 = por %p30, %p31
    %p33 = scmp.ne.s32.totalorder %s22, %s23
    %p34 = scmp.eq.s32.totalorder %s14, 0
    %p35 = por %p33, %p34
    %p36 = scmp.ne.s32.totalorder %s22, %s23
    %p37 = scmp.eq.s32.totalorder %s15, 1
    %p38 = por %p36, %p37
    %p40 = scmp.ne.s32.totalorder %s23, %s39
    %p41 = scmp.eq.s32.totalorder %s15, 0
    %p42 = por %p40, %p41
    %s44 = sadd.s32 %s43, 1
    %p47 = scmp.eq.s32.totalorder %s9, 1
    %p48 = scmp.ne.s32.totalorder %s43, %s45
    %p49 = scmp.eq.s32.totalorder %s9, 0
    %p50 = por %p48, %p49
    %p51 = scmp.ne.s32.totalorder %s43, %s45
    %p52 = scmp.eq.s32.totalorder %s14, 1
    %p53 = por %p51, %p52
    %p54 = scmp.ne.s32.totalorder %s45, %s46
    %p55 = scmp.eq.s32.totalorder %s14, 0
    %p56 = por %p54, %p55
    %p57 = scmp.ne.s32.totalorder %s45, %s46
    %p58 = scmp.eq.s32.totalorder %s15, 1
    %p59 = por %p57, %p58
    %p61 = scmp.ne.s32.totalorder %s46, %s60
    %p62 = scmp.eq.s32.totalorder %s15, 0
    %p63 = por %p61, %p62
    %s65 = sadd.s32 %s64, 1
    %p68 = scmp.eq.s32.totalorder %s9, 1
    %p69 = scmp.ne.s32.totalorder %s64, %s66
    %p70 = scmp.eq.s32.totalorder %s9, 0
    %p71 = por %p69, %p70
    %p72 = scmp.ne.s32.totalorder %s64, %s66
    %p73 = scmp.eq.s32.totalorder %s14, 1
    %p74 = por %p72, %p73
    %p75 = scmp.ne.s32.totalorder %s66, %s67
    %p76 = scmp.eq.s32.totalorder %s14, 0
    %p77 = por %p75, %p76
    %p78 = scmp.ne.s32.totalorder %s66, %s67
    %p79 = scmp.eq.s32.totalorder %s15, 1
    %p80 = por %p78, %p79
    %p82 = scmp.ne.s32.totalorder %s67, %s81
    %p83 = scmp.eq.s32.totalorder %s15, 0
    %p84 = por %p82, %p83
    %s85 = ssub.s32 %s9, %s16
    %p86 = scmp.eq.s32.totalorder %s85, 0
    %s88 = sadd.s32 %s87, 1
    %s89 = scalar_select %p86, %s87, %s88
    %p92 = pneg %p86
    %p93 = scmp.eq.s32.totalorder %s9, 1
    %p94 = por %p92, %p93
    %p95 = scmp.ne.s32.totalorder %s87, %s90
    %p96 = scmp.eq.s32.totalorder %s9, 0
    %p97 = por %p95, %p96
    %p98 = scmp.ne.s32.totalorder %s87, %s90
    %p99 = scmp.eq.s32.totalorder %s14, 1
    %p100 = por %p98, %p99
    %p101 = scmp.ne.s32.totalorder %s90, %s91
    %p102 = scmp.eq.s32.totalorder %s14, 0
    %p103 = por %p101, %p102
    %p104 = scmp.ne.s32.totalorder %s90, %s91
    %p105 = scmp.eq.s32.totalorder %s15, 1
    %p106 = por %p104, %p105
    %p108 = scmp.ne.s32.totalorder %s91, %s107
    %p109 = scmp.eq.s32.totalorder %s15, 0
    %p110 = por %p108, %p109
    %p111 = scmp.le.s32.totalorder 1, %s9
    %p112 = scmp.lt.s32.totalorder %s9, 3
    %p113 = pnand %p111, %p112
    %p114 = pneg %p113
    // Predicated region
    $region9: #{_lambda_.6} parent=5 // pred_check
      _
    $region10: #{_lambda_.6} parent=5 // pred_check_branch
      %116 = sbr.rel (%p113) target = $region12
    $region11: #{_lambda_.6} parent=5 // pred_region
      %s117 = ssub.s32 %s9, 1
      // Predicated region
      $region13: #{_lambda_.6} parent=11 // pred_check
        %p118 = pneg %p56
      $region14: #{_lambda_.6} parent=11 // pred_check_branch
        %120 = sbr.rel (%p118) target = $region16
      $region15: #{_lambda_.6} parent=11 // pred_region
        _
      $region16: #{_lambda_.6} parent=11 // pred_fallthru
        _
      // Predicated region
      $region17: #{_lambda_.6} parent=11 // pred_check
        %p121 = pneg %p77
      $region18: #{_lambda_.6} parent=11 // pred_check_branch
        %123 = sbr.rel (%p121) target = $region20
      $region19: #{_lambda_.6} parent=11 // pred_region
        _
      $region20: #{_lambda_.6} parent=11 // pred_fallthru
        _
    $region12: #{_lambda_.6} parent=5 // pred_fallthru
      _
    %p124 = scmp.lt.s32.totalorder %s9, 2
    // Predicated region
    $region21: #{_lambda_.6} parent=5 // pred_check
      %p125 = pneg %p124
    $region22: #{_lambda_.6} parent=5 // pred_check_branch
      %127 = sbr.rel (%p125) target = $region24
    $region23: #{_lambda_.6} parent=5 // pred_region
      // Predicated region
      $region25: #{_lambda_.6} parent=23 // pred_check
        %p128 = pneg %p29
      $region26: #{_lambda_.6} parent=23 // pred_check_branch
        %130 = sbr.rel (%p128) target = $region28
      $region27: #{_lambda_.6} parent=23 // pred_region
        %p131 = scmp.lt.s32.totalorder %s9, 1
        %s132 = scalar_select %p131, %s9, 1
        %s133 = smul.addr %s132, 8
        %s134 = smul.addr %s133, 4
        %s135 = scalar_lea.vmem %s0, %s134
      $region28: #{_lambda_.6} parent=23 // pred_fallthru
        _
    $region24: #{_lambda_.6} parent=5 // pred_fallthru
      _
    %p136 = scmp.le.s32.totalorder 1, %s9
    %p137 = scmp.lt.s32.totalorder %s9, 3
    %p138 = pnand %p136, %p137
    %p139 = pneg %p138
    // Predicated region
    $region29: #{_lambda_.6} parent=5 // pred_check
      _
    $region30: #{_lambda_.6} parent=5 // pred_check_branch
      %141 = sbr.rel (%p138) target = $region32
    $region31: #{_lambda_.6} parent=5 // pred_region
      %s142 = ssub.s32 %s9, 1
      %p143 = scmp.lt.s32.totalorder %s14, 1
      %s144 = scalar_select %p143, %s14, 1
      %s145 = smul.addr %s144, 8
      %s146 = smul.addr %s145, 4
      %s147 = scalar_lea.vmem %s0, %s146
      %p148 = pneg %p35
      %p149 = pneg %p32
      %p150 = pneg %p56
      %p151 = pneg %p53
      %p152 = pneg %p77
      %p153 = pneg %p74
      %p154 = pneg %p103
      %p155 = pneg %p100
      %p156 = scmp.lt.s32.totalorder %s14, 1
      %s157 = scalar_select %p156, %s14, 1
      %s158 = smul.addr %s157, 8
      %s159 = smul.addr %s158, 4
      %s160 = scalar_lea.vmem %s3, %s159
      %p161 = scmp.lt.s32.totalorder %s14, 1
      %s162 = scalar_select %p161, %s14, 1
      %s163 = smul.addr %s162, 8
      %s164 = smul.addr %s163, 4
      %s165 = scalar_lea.vmem %s0, %s164
      %p166 = scmp.lt.s32.totalorder %s14, 1
      %s167 = scalar_select %p166, %s14, 1
      %s168 = smul.addr %s167, 8
      %s169 = smul.addr %s168, 4
      %s170 = scalar_lea.vmem %s3, %s169
      %v172 = vld [vmem:[%s165] sm:$0xf]
      %v173 = vld [vmem:[%s165 + $0x4] sm:$0xf]
      %v174 = vld [vmem:[%s165 + $0x8] sm:$0xf]
      %v175 = vld [vmem:[%s165 + $0xc] sm:$0xf]
      %v176 = vld [vmem:[%s165 + $0x10] sm:$0xf]
      %v177 = vld [vmem:[%s165 + $0x14] sm:$0xf]
      %v178 = vld [vmem:[%s165 + $0x18] sm:$0xf]
      %v179 = vld [vmem:[%s165 + $0x1c] sm:$0xf]
      %v188 = vunpack.c.l.b16 %v172
      %v189 = vunpack.c.l.b16 %v173
      %v190 = vunpack.c.l.b16 %v174
      %v191 = vunpack.c.l.b16 %v175
      %v192 = vunpack.c.l.b16 %v176
      %v193 = vunpack.c.l.b16 %v177
      %v194 = vunpack.c.l.b16 %v178
      %v195 = vunpack.c.l.b16 %v179
      %v196 = vpack.c.b16 %v189, %v188
      %v197 = vpack.c.b16 %v191, %v190
      %v198 = vpack.c.b16 %v193, %v192
      %v199 = vpack.c.b16 %v195, %v194
      %vm200 = vsmask.f32 3328
      %v202 = vshrl.u32 %v196, 16
      %v204 = vrot.slane %v202, 4
      %v205 = vshll.u32 %v196, 16
      %v207 = vrot.slane %v205, 5
      %v208 = vor.u32 %v204, %v207
      %v210 = vshrl.u32 %v197, 16
      %v212 = vrot.slane %v210, 4
      %v213 = vshll.u32 %v197, 16
      %v215 = vrot.slane %v213, 5
      %v216 = vor.u32 %v212, %v215
      %v217 = vsel %vm200, %v208, %v216
      %v219 = vshrl.u32 %v198, 16
      %v221 = vrot.slane %v219, 4
      %v222 = vshll.u32 %v198, 16
      %v224 = vrot.slane %v222, 5
      %v225 = vor.u32 %v221, %v224
      %v226 = vsel %vm200, %v216, %v225
      %v228 = vshrl.u32 %v199, 16
      %v230 = vrot.slane %v228, 4
      %v231 = vshll.u32 %v199, 16
      %v233 = vrot.slane %v231, 5
      %v234 = vor.u32 %v230, %v233
      %v235 = vsel %vm200, %v225, %v234
      %vm237 = vcmask 1043456
      %vm238 = vmand %vm237, %vm200
      %v239 = vsel %vm238, 0, %v208
      %v240 = vld [vmem:[%s1] sm:$0xf]
      %v241 = vld [vmem:[%s1 + $0x4] sm:$0xf]
      %v242 = vld [vmem:[%s1 + $0x8] sm:$0xf]
      %v243 = vld [vmem:[%s1 + $0xc] sm:$0xf]
      %vm244 = vcmask 1042432
      %v245 = vrot.slane %v196, 5
      %v246 = vrot.slane %v197, 5
      %v247 = vsel %vm244, %v245, %v246
      %v248 = vrot.slane %v198, 5
      %v249 = vsel %vm244, %v246, %v248
      %v250 = vrot.slane %v199, 5
      %v251 = vsel %vm244, %v248, %v250
      %vm252 = vcmask 1042432
      %v255 = vsel %vm252, 0, %v245
      %s256 = scalar_lea.vmem %s1, 16
      %v257 = vld [vmem:[%s256] sm:$0xf]
      %v258 = vld [vmem:[%s256 + $0x4] sm:$0xf]
      %v259 = vld [vmem:[%s256 + $0x8] sm:$0xf]
      %v260 = vld [vmem:[%s256 + $0xc] sm:$0xf]
      %v265 = vunpack.c.l.b16 %v257
      %v266 = vunpack.c.l.b16 %v258
      %v267 = vunpack.c.l.b16 %v259
      %v268 = vunpack.c.l.b16 %v260
      %v269 = vpack.c.b16 %v266, %v265
      %v270 = vpack.c.b16 %v268, %v267
      %vm273 = vcmask 261120
      %v274 = vsel %vm273, %v255, 0
      %v277 = vsel %vm273, %v247, 0
      %v280 = vsel %vm273, %v249, 0
      %v283 = vsel %vm273, %v251, 0
      %285 = vmatpush.bf16.msra.mxu0 0
      %286 = vmatpush.bf16.msra.mxu0 0
      %287 = vmatpush.bf16.msra.mxu0 0
      %288 = vmatpush.bf16.msra.mxu0 0
      %289 = vmatpush.bf16.msra.mxu0 0
      %290 = vmatpush.bf16.msra.mxu0 0
      %291 = vmatpush.bf16.msra.mxu0 %v270
      %292 = vmatpush.bf16.msra.mxu0 %v269
      %293 = vmatmul.bf16.gmra.mxu0 %v274
      %v294 = vpop.f32.mrf.mxu0
      %v295 = vadd.f32 0.0, %v294
      %v296 = vpop.f32.mrf.mxu0
      %v297 = vadd.f32 0.0, %v296
      %298 = vmatmul.bf16.gmra.mxu0 %v277
      %v299 = vpop.f32.mrf.mxu0
      %v300 = vadd.f32 0.0, %v299
      %v301 = vpop.f32.mrf.mxu0
      %v302 = vadd.f32 0.0, %v301
      %303 = vmatmul.bf16.gmra.mxu0 %v280
      %v304 = vpop.f32.mrf.mxu0
      %v305 = vadd.f32 0.0, %v304
      %v306 = vpop.f32.mrf.mxu0
      %v307 = vadd.f32 0.0, %v306
      %308 = vmatmul.bf16.gmra.mxu0 %v283
      %v309 = vpop.f32.mrf.mxu0
      %v310 = vadd.f32 0.0, %v309
      %v311 = vpop.f32.mrf.mxu0
      %v312 = vadd.f32 0.0, %v311
      %313 = vdwg.mxu0
      %v318 = vunpack.c.l.b16 %v240
      %v319 = vunpack.c.l.b16 %v241
      %v320 = vunpack.c.l.b16 %v242
      %v321 = vunpack.c.l.b16 %v243
      %v322 = vpack.c.b16 %v319, %v318
      %v323 = vpack.c.b16 %v321, %v320
      %v327 = vsel %vm273, %v239, 0
      %v330 = vsel %vm273, %v217, 0
      %v333 = vsel %vm273, %v226, 0
      %v336 = vsel %vm273, %v235, 0
      %338 = vmatpush.bf16.msra.mxu0 0
      %339 = vmatpush.bf16.msra.mxu0 0
      %340 = vmatpush.bf16.msra.mxu0 0
      %341 = vmatpush.bf16.msra.mxu0 0
      %342 = vmatpush.bf16.msra.mxu0 0
      %343 = vmatpush.bf16.msra.mxu0 0
      %344 = vmatpush.bf16.msra.mxu0 %v323
      %345 = vmatpush.bf16.msra.mxu0 %v322
      %346 = vmatmul.bf16.gmra.mxu0 %v327
      %v347 = vpop.f32.mrf.mxu0
      %v348 = vadd.f32 %v295, %v347
      %v349 = vpop.f32.mrf.mxu0
      %v350 = vadd.f32 %v297, %v349
      %351 = vmatmul.bf16.gmra.mxu0 %v330
      %v352 = vpop.f32.mrf.mxu0
      %v353 = vadd.f32 %v300, %v352
      %v354 = vpop.f32.mrf.mxu0
      %v355 = vadd.f32 %v302, %v354
      %356 = vmatmul.bf16.gmra.mxu0 %v333
      %v357 = vpop.f32.mrf.mxu0
      %v358 = vadd.f32 %v305, %v357
      %v359 = vpop.f32.mrf.mxu0
      %v360 = vadd.f32 %v307, %v359
      %361 = vmatmul.bf16.gmra.mxu0 %v336
      %v362 = vpop.f32.mrf.mxu0
      %v363 = vadd.f32 %v310, %v362
      %v364 = vpop.f32.mrf.mxu0
      %v365 = vadd.f32 %v312, %v364
      %366 = vdwg.mxu0
      %vm367 = vsmask.f32 2304
      %v368 = vrot.slane %v202, 5
      %v369 = vrot.slane %v205, 6
      %v370 = vor.u32 %v368, %v369
      %v371 = vrot.slane %v210, 5
      %v372 = vrot.slane %v213, 6
      %v373 = vor.u32 %v371, %v372
      %v374 = vsel %vm367, %v370, %v373
      %v375 = vrot.slane %v219, 5
      %v376 = vrot.slane %v222, 6
      %v377 = vor.u32 %v375, %v376
      %v378 = vsel %vm367, %v373, %v377
      %v379 = vrot.slane %v228, 5
      %v380 = vrot.slane %v231, 6
      %v381 = vor.u32 %v379, %v380
      %v382 = vsel %vm367, %v377, %v381
      %vm384 = vmand %vm244, %vm367
      %v385 = vsel %vm384, 0, %v370
      %s386 = scalar_lea.vmem %s1, 32
      %v387 = vld [vmem:[%s386] sm:$0xf]
      %v388 = vld [vmem:[%s386 + $0x4] sm:$0xf]
      %v389 = vld [vmem:[%s386 + $0x8] sm:$0xf]
      %v390 = vld [vmem:[%s386 + $0xc] sm:$0xf]
      %v395 = vunpack.c.l.b16 %v387
      %v396 = vunpack.c.l.b16 %v388
      %v397 = vunpack.c.l.b16 %v389
      %v398 = vunpack.c.l.b16 %v390
      %v399 = vpack.c.b16 %v396, %v395
      %v400 = vpack.c.b16 %v398, %v397
      %v404 = vsel %vm273, %v385, 0
      %v407 = vsel %vm273, %v374, 0
      %v410 = vsel %vm273, %v378, 0
      %v413 = vsel %vm273, %v382, 0
      %415 = vmatpush.bf16.msra.mxu0 0
      %416 = vmatpush.bf16.msra.mxu0 0
      %417 = vmatpush.bf16.msra.mxu0 0
      %418 = vmatpush.bf16.msra.mxu0 0
      %419 = vmatpush.bf16.msra.mxu0 0
      %420 = vmatpush.bf16.msra.mxu0 0
      %421 = vmatpush.bf16.msra.mxu0 %v400
      %422 = vmatpush.bf16.msra.mxu0 %v399
      %423 = vmatmul.bf16.gmra.mxu0 %v404
      %v424 = vpop.f32.mrf.mxu0
      %v425 = vadd.f32 0.0, %v424
      %v426 = vpop.f32.mrf.mxu0
      %v427 = vadd.f32 0.0, %v426
      %428 = vmatmul.bf16.gmra.mxu0 %v407
      %v429 = vpop.f32.mrf.mxu0
      %v430 = vadd.f32 0.0, %v429
      %v431 = vpop.f32.mrf.mxu0
      %v432 = vadd.f32 0.0, %v431
      %433 = vmatmul.bf16.gmra.mxu0 %v410
      %v434 = vpop.f32.mrf.mxu0
      %v435 = vadd.f32 0.0, %v434
      %v436 = vpop.f32.mrf.mxu0
      %v437 = vadd.f32 0.0, %v436
      %438 = vmatmul.bf16.gmra.mxu0 %v413
      %v439 = vpop.f32.mrf.mxu0
      %v440 = vadd.f32 0.0, %v439
      %v441 = vpop.f32.mrf.mxu0
      %v442 = vadd.f32 0.0, %v441
      %443 = vdwg.mxu0
      %v444 = vadd.f32 %v348, %v425
      %v445 = vadd.f32 %v350, %v427
      %v446 = vadd.f32 %v353, %v430
      %v447 = vadd.f32 %v355, %v432
      %v448 = vadd.f32 %v358, %v435
      %v449 = vadd.f32 %v360, %v437
      %v450 = vadd.f32 %v363, %v440
      %v451 = vadd.f32 %v365, %v442
      %vm452 = vsmask.f32 256
      %v453 = vrot.slane %v202, 7
      %v454 = vor.u32 %v453, %v205
      %v455 = vrot.slane %v210, 7
      %v456 = vor.u32 %v455, %v213
      %v457 = vsel %vm452, %v453, %v456
      %v458 = vrot.slane %v219, 7
      %v459 = vor.u32 %v458, %v222
      %v460 = vsel %vm452, %v455, %v459
      %v461 = vrot.slane %v228, 7
      %v462 = vor.u32 %v461, %v231
      %v463 = vsel %vm452, %v458, %v462
      %vm465 = vcmask 1040384
      %vm466 = vmand %vm465, %vm452
      %v467 = vsel %vm466, 0, %v454
      %s468 = scalar_lea.vmem %s1, 48
      %v469 = vld [vmem:[%s468] sm:$0xf]
      %v470 = vld [vmem:[%s468 + $0x4] sm:$0xf]
      %v471 = vld [vmem:[%s468 + $0x8] sm:$0xf]
      %v472 = vld [vmem:[%s468 + $0xc] sm:$0xf]
      %v477 = vunpack.c.l.b16 %v469
      %v478 = vunpack.c.l.b16 %v470
      %v479 = vunpack.c.l.b16 %v471
      %v480 = vunpack.c.l.b16 %v472
      %v481 = vpack.c.b16 %v478, %v477
      %v482 = vpack.c.b16 %v480, %v479
      %v486 = vsel %vm273, %v467, 0
      %v489 = vsel %vm273, %v457, 0
      %v492 = vsel %vm273, %v460, 0
      %v495 = vsel %vm273, %v463, 0
      %497 = vmatpush.bf16.msra.mxu0 0
      %498 = vmatpush.bf16.msra.mxu0 0
      %499 = vmatpush.bf16.msra.mxu0 0
      %500 = vmatpush.bf16.msra.mxu0 0
      %501 = vmatpush.bf16.msra.mxu0 0
      %502 = vmatpush.bf16.msra.mxu0 0
      %503 = vmatpush.bf16.msra.mxu0 %v482
      %504 = vmatpush.bf16.msra.mxu0 %v481
      %505 = vmatmul.bf16.gmra.mxu0 %v486
      %v506 = vpop.f32.mrf.mxu0
      %v507 = vadd.f32 0.0, %v506
      %v508 = vpop.f32.mrf.mxu0
      %v509 = vadd.f32 0.0, %v508
      %510 = vmatmul.bf16.gmra.mxu0 %v489
      %v511 = vpop.f32.mrf.mxu0
      %v512 = vadd.f32 0.0, %v511
      %v513 = vpop.f32.mrf.mxu0
      %v514 = vadd.f32 0.0, %v513
      %515 = vmatmul.bf16.gmra.mxu0 %v492
      %v516 = vpop.f32.mrf.mxu0
      %v517 = vadd.f32 0.0, %v516
      %v518 = vpop.f32.mrf.mxu0
      %v519 = vadd.f32 0.0, %v518
      %520 = vmatmul.bf16.gmra.mxu0 %v495
      %v521 = vpop.f32.mrf.mxu0
      %v522 = vadd.f32 0.0, %v521
      %v523 = vpop.f32.mrf.mxu0
      %v524 = vadd.f32 0.0, %v523
      %525 = vdwg.mxu0
      %v526 = vadd.f32 %v444, %v507
      %v527 = vadd.f32 %v445, %v509
      %v528 = vadd.f32 %v446, %v512
      %v529 = vadd.f32 %v447, %v514
      %v530 = vadd.f32 %v448, %v517
      %v531 = vadd.f32 %v449, %v519
      %v532 = vadd.f32 %v450, %v522
      %v533 = vadd.f32 %v451, %v524
      %s534 = scalar_lea.vmem %s1, 64
      %v535 = vld [vmem:[%s534] sm:$0xf]
      %v536 = vld [vmem:[%s534 + $0x4] sm:$0xf]
      %v537 = vld [vmem:[%s534 + $0x8] sm:$0xf]
      %v538 = vld [vmem:[%s534 + $0xc] sm:$0xf]
      %v543 = vunpack.c.l.b16 %v535
      %v544 = vunpack.c.l.b16 %v536
      %v545 = vunpack.c.l.b16 %v537
      %v546 = vunpack.c.l.b16 %v538
      %v547 = vpack.c.b16 %v544, %v543
      %v548 = vpack.c.b16 %v546, %v545
      %v551 = vsel %vm273, %v196, 0
      %v553 = vsel %vm273, %v197, 0
      %v555 = vsel %vm273, %v198, 0
      %v557 = vsel %vm273, %v199, 0
      %559 = vmatpush.bf16.msra.mxu0 0
      %560 = vmatpush.bf16.msra.mxu0 0
      %561 = vmatpush.bf16.msra.mxu0 0
      %562 = vmatpush.bf16.msra.mxu0 0
      %563 = vmatpush.bf16.msra.mxu0 0
      %564 = vmatpush.bf16.msra.mxu0 0
      %565 = vmatpush.bf16.msra.mxu0 %v548
      %566 = vmatpush.bf16.msra.mxu0 %v547
      %567 = vmatmul.bf16.gmra.mxu0 %v551
      %v568 = vpop.f32.mrf.mxu0
      %v569 = vadd.f32 0.0, %v568
      %v570 = vpop.f32.mrf.mxu0
      %v571 = vadd.f32 0.0, %v570
      %572 = vmatmul.bf16.gmra.mxu0 %v553
      %v573 = vpop.f32.mrf.mxu0
      %v574 = vadd.f32 0.0, %v573
      %v575 = vpop.f32.mrf.mxu0
      %v576 = vadd.f32 0.0, %v575
      %577 = vmatmul.bf16.gmra.mxu0 %v555
      %v578 = vpop.f32.mrf.mxu0
      %v579 = vadd.f32 0.0, %v578
      %v580 = vpop.f32.mrf.mxu0
      %v581 = vadd.f32 0.0, %v580
      %582 = vmatmul.bf16.gmra.mxu0 %v557
      %v583 = vpop.f32.mrf.mxu0
      %v584 = vadd.f32 0.0, %v583
      %v585 = vpop.f32.mrf.mxu0
      %v586 = vadd.f32 0.0, %v585
      %587 = vdwg.mxu0
      %v588 = vadd.f32 %v526, %v569
      %v589 = vadd.f32 %v527, %v571
      %v590 = vadd.f32 %v528, %v574
      %v591 = vadd.f32 %v529, %v576
      %v592 = vadd.f32 %v530, %v579
      %v593 = vadd.f32 %v531, %v581
      %v594 = vadd.f32 %v532, %v584
      %v595 = vadd.f32 %v533, %v586
      %vm596 = vsmask.f32 7424
      %v597 = vrot.slane %v205, 1
      %v598 = vor.u32 %v202, %v597
      %v599 = vrot.slane %v213, 1
      %v600 = vsel %vm596, %v598, %v599
      %v601 = vor.u32 %v210, %v599
      %v602 = vrot.slane %v222, 1
      %v603 = vsel %vm596, %v601, %v602
      %v604 = vor.u32 %v219, %v602
      %v605 = vrot.slane %v231, 1
      %v606 = vsel %vm596, %v604, %v605
      %v607 = vor.u32 %v228, %v605
      %vm609 = vcmask 1047552
      %vm610 = vmand %vm609, %vm596
      %v611 = vsel %vm610, %v607, 0
      %s612 = scalar_lea.vmem %s1, 80
      %v613 = vld [vmem:[%s612] sm:$0xf]
      %v614 = vld [vmem:[%s612 + $0x4] sm:$0xf]
      %v615 = vld [vmem:[%s612 + $0x8] sm:$0xf]
      %v616 = vld [vmem:[%s612 + $0xc] sm:$0xf]
      %v621 = vunpack.c.l.b16 %v613
      %v622 = vunpack.c.l.b16 %v614
      %v623 = vunpack.c.l.b16 %v615
      %v624 = vunpack.c.l.b16 %v616
      %v625 = vpack.c.b16 %v622, %v621
      %v626 = vpack.c.b16 %v624, %v623
      %v630 = vsel %vm273, %v600, 0
      %v633 = vsel %vm273, %v603, 0
      %v636 = vsel %vm273, %v606, 0
      %v639 = vsel %vm273, %v611, 0
      %641 = vmatpush.bf16.msra.mxu0 0
      %642 = vmatpush.bf16.msra.mxu0 0
      %643 = vmatpush.bf16.msra.mxu0 0
      %644 = vmatpush.bf16.msra.mxu0 0
      %645 = vmatpush.bf16.msra.mxu0 0
      %646 = vmatpush.bf16.msra.mxu0 0
      %647 = vmatpush.bf16.msra.mxu0 %v626
      %648 = vmatpush.bf16.msra.mxu0 %v625
      %649 = vmatmul.bf16.gmra.mxu0 %v630
      %v650 = vpop.f32.mrf.mxu0
      %v651 = vadd.f32 0.0, %v650
      %v652 = vpop.f32.mrf.mxu0
      %v653 = vadd.f32 0.0, %v652
      %654 = vmatmul.bf16.gmra.mxu0 %v633
      %v655 = vpop.f32.mrf.mxu0
      %v656 = vadd.f32 0.0, %v655
      %v657 = vpop.f32.mrf.mxu0
      %v658 = vadd.f32 0.0, %v657
      %659 = vmatmul.bf16.gmra.mxu0 %v636
      %v660 = vpop.f32.mrf.mxu0
      %v661 = vadd.f32 0.0, %v660
      %v662 = vpop.f32.mrf.mxu0
      %v663 = vadd.f32 0.0, %v662
      %664 = vmatmul.bf16.gmra.mxu0 %v639
      %v665 = vpop.f32.mrf.mxu0
      %v666 = vadd.f32 0.0, %v665
      %v667 = vpop.f32.mrf.mxu0
      %v668 = vadd.f32 0.0, %v667
      %669 = vdwg.mxu0
      %v670 = vadd.f32 %v588, %v651
      %v671 = vadd.f32 %v589, %v653
      %v672 = vadd.f32 %v590, %v656
      %v673 = vadd.f32 %v591, %v658
      %v674 = vadd.f32 %v592, %v661
      %v675 = vadd.f32 %v593, %v663
      %v676 = vadd.f32 %v594, %v666
      %v677 = vadd.f32 %v595, %v668
      %vm678 = vsmask.f32 5376
      %v679 = vrot.slane %v202, 2
      %v680 = vrot.slane %v205, 3
      %v681 = vor.u32 %v679, %v680
      %v682 = vrot.slane %v210, 2
      %v683 = vrot.slane %v213, 3
      %v684 = vor.u32 %v682, %v683
      %v685 = vsel %vm678, %v681, %v684
      %v686 = vrot.slane %v219, 2
      %v687 = vrot.slane %v222, 3
      %v688 = vor.u32 %v686, %v687
      %v689 = vsel %vm678, %v684, %v688
      %v690 = vrot.slane %v228, 2
      %v691 = vrot.slane %v231, 3
      %v692 = vor.u32 %v690, %v691
      %v693 = vsel %vm678, %v688, %v692
      %vm695 = vcmask 1045504
      %vm696 = vmand %vm695, %vm678
      %v697 = vsel %vm696, %v692, 0
      %s698 = scalar_lea.vmem %s1, 96
      %v699 = vld [vmem:[%s698] sm:$0xf]
      %v700 = vld [vmem:[%s698 + $0x4] sm:$0xf]
      %v701 = vld [vmem:[%s698 + $0x8] sm:$0xf]
      %v702 = vld [vmem:[%s698 + $0xc] sm:$0xf]
      %v707 = vunpack.c.l.b16 %v699
      %v708 = vunpack.c.l.b16 %v700
      %v709 = vunpack.c.l.b16 %v701
      %v710 = vunpack.c.l.b16 %v702
      %v711 = vpack.c.b16 %v708, %v707
      %v712 = vpack.c.b16 %v710, %v709
      %v716 = vsel %vm273, %v685, 0
      %v719 = vsel %vm273, %v689, 0
      %v722 = vsel %vm273, %v693, 0
      %v725 = vsel %vm273, %v697, 0
      %727 = vmatpush.bf16.msra.mxu0 0
      %728 = vmatpush.bf16.msra.mxu0 0
      %729 = vmatpush.bf16.msra.mxu0 0
      %730 = vmatpush.bf16.msra.mxu0 0
      %731 = vmatpush.bf16.msra.mxu0 0
      %732 = vmatpush.bf16.msra.mxu0 0
      %733 = vmatpush.bf16.msra.mxu0 %v712
      %734 = vmatpush.bf16.msra.mxu0 %v711
      %735 = vmatmul.bf16.gmra.mxu0 %v716
      %v736 = vpop.f32.mrf.mxu0
      %v737 = vadd.f32 0.0, %v736
      %v738 = vpop.f32.mrf.mxu0
      %v739 = vadd.f32 0.0, %v738
      %740 = vmatmul.bf16.gmra.mxu0 %v719
      %v741 = vpop.f32.mrf.mxu0
      %v742 = vadd.f32 0.0, %v741
      %v743 = vpop.f32.mrf.mxu0
      %v744 = vadd.f32 0.0, %v743
      %745 = vmatmul.bf16.gmra.mxu0 %v722
      %v746 = vpop.f32.mrf.mxu0
      %v747 = vadd.f32 0.0, %v746
      %v748 = vpop.f32.mrf.mxu0
      %v749 = vadd.f32 0.0, %v748
      %750 = vmatmul.bf16.gmra.mxu0 %v725
      %v751 = vpop.f32.mrf.mxu0
      %v752 = vadd.f32 0.0, %v751
      %v753 = vpop.f32.mrf.mxu0
      %v754 = vadd.f32 0.0, %v753
      %755 = vdwg.mxu0
      %v756 = vadd.f32 %v670, %v737
      %v757 = vadd.f32 %v671, %v739
      %v758 = vadd.f32 %v672, %v742
      %v759 = vadd.f32 %v673, %v744
      %v760 = vadd.f32 %v674, %v747
      %v761 = vadd.f32 %v675, %v749
      %v762 = vadd.f32 %v676, %v752
      %v763 = vadd.f32 %v677, %v754
      %vm764 = vcmask 1044480
      %v765 = vrot.slane %v196, 3
      %v766 = vrot.slane %v197, 3
      %v767 = vsel %vm764, %v765, %v766
      %v768 = vrot.slane %v198, 3
      %v769 = vsel %vm764, %v766, %v768
      %v770 = vrot.slane %v199, 3
      %v771 = vsel %vm764, %v768, %v770
      %vm772 = vcmask 1044480
      %v774 = vsel %vm772, %v770, 0
      %s775 = scalar_lea.vmem %s1, 112
      %v776 = vld [vmem:[%s775] sm:$0xf]
      %v777 = vld [vmem:[%s775 + $0x4] sm:$0xf]
      %v778 = vld [vmem:[%s775 + $0x8] sm:$0xf]
      %v779 = vld [vmem:[%s775 + $0xc] sm:$0xf]
      %v784 = vunpack.c.l.b16 %v776
      %v785 = vunpack.c.l.b16 %v777
      %v786 = vunpack.c.l.b16 %v778
      %v787 = vunpack.c.l.b16 %v779
      %v788 = vpack.c.b16 %v785, %v784
      %v789 = vpack.c.b16 %v787, %v786
      %v793 = vsel %vm273, %v767, 0
      %v796 = vsel %vm273, %v769, 0
      %v799 = vsel %vm273, %v771, 0
      %v801 = vsel %vm273, %v774, 0
      %803 = vmatpush.bf16.msra.mxu0 0
      %804 = vmatpush.bf16.msra.mxu0 0
      %805 = vmatpush.bf16.msra.mxu0 0
      %806 = vmatpush.bf16.msra.mxu0 0
      %807 = vmatpush.bf16.msra.mxu0 0
      %808 = vmatpush.bf16.msra.mxu0 0
      %809 = vmatpush.bf16.msra.mxu0 %v789
      %810 = vmatpush.bf16.msra.mxu0 %v788
      %811 = vmatmul.bf16.gmra.mxu0 %v793
      %v812 = vpop.f32.mrf.mxu0
      %v813 = vadd.f32 0.0, %v812
      %v814 = vpop.f32.mrf.mxu0
      %v815 = vadd.f32 0.0, %v814
      %816 = vmatmul.bf16.gmra.mxu0 %v796
      %v817 = vpop.f32.mrf.mxu0
      %v818 = vadd.f32 0.0, %v817
      %v819 = vpop.f32.mrf.mxu0
      %v820 = vadd.f32 0.0, %v819
      %821 = vmatmul.bf16.gmra.mxu0 %v799
      %v822 = vpop.f32.mrf.mxu0
      %v823 = vadd.f32 0.0, %v822
      %v824 = vpop.f32.mrf.mxu0
      %v825 = vadd.f32 0.0, %v824
      %826 = vmatmul.bf16.gmra.mxu0 %v801
      %v827 = vpop.f32.mrf.mxu0
      %v828 = vadd.f32 0.0, %v827
      %v829 = vpop.f32.mrf.mxu0
      %v830 = vadd.f32 0.0, %v829
      %831 = vdwg.mxu0
      %v832 = vadd.f32 %v756, %v813
      %v833 = vadd.f32 %v757, %v815
      %v834 = vadd.f32 %v758, %v818
      %v835 = vadd.f32 %v759, %v820
      %v836 = vadd.f32 %v760, %v823
      %v837 = vadd.f32 %v761, %v825
      %v838 = vadd.f32 %v762, %v828
      %v839 = vadd.f32 %v763, %v830
      %vm840 = vsmask.f32 4352
      %v841 = vrot.slane %v202, 3
      %v842 = vrot.slane %v205, 4
      %v843 = vor.u32 %v841, %v842
      %v844 = vrot.slane %v210, 3
      %v845 = vrot.slane %v213, 4
      %v846 = vor.u32 %v844, %v845
      %v847 = vsel %vm840, %v843, %v846
      %v848 = vrot.slane %v219, 3
      %v849 = vrot.slane %v222, 4
      %v850 = vor.u32 %v848, %v849
      %v851 = vsel %vm840, %v846, %v850
      %v852 = vrot.slane %v228, 3
      %v853 = vrot.slane %v231, 4
      %v854 = vor.u32 %v852, %v853
      %v855 = vsel %vm840, %v850, %v854
      %vm857 = vmand %vm764, %vm840
      %v858 = vsel %vm857, %v854, 0
      %s859 = scalar_lea.vmem %s1, 128
      %v860 = vld [vmem:[%s859] sm:$0xf]
      %v861 = vld [vmem:[%s859 + $0x4] sm:$0xf]
      %v862 = vld [vmem:[%s859 + $0x8] sm:$0xf]
      %v863 = vld [vmem:[%s859 + $0xc] sm:$0xf]
      %v868 = vunpack.c.l.b16 %v860
      %v869 = vunpack.c.l.b16 %v861
      %v870 = vunpack.c.l.b16 %v862
      %v871 = vunpack.c.l.b16 %v863
      %v872 = vpack.c.b16 %v869, %v868
      %v873 = vpack.c.b16 %v871, %v870
      %v877 = vsel %vm273, %v847, 0
      %v880 = vsel %vm273, %v851, 0
      %v883 = vsel %vm273, %v855, 0
      %v886 = vsel %vm273, %v858, 0
      %888 = vmatpush.bf16.msra.mxu0 0
      %889 = vmatpush.bf16.msra.mxu0 0
      %890 = vmatpush.bf16.msra.mxu0 0
      %891 = vmatpush.bf16.msra.mxu0 0
      %892 = vmatpush.bf16.msra.mxu0 0
      %893 = vmatpush.bf16.msra.mxu0 0
      %894 = vmatpush.bf16.msra.mxu0 %v873
      %895 = vmatpush.bf16.msra.mxu0 %v872
      %896 = vmatmul.bf16.gmra.mxu0 %v877
      %v897 = vpop.f32.mrf.mxu0
      %v898 = vadd.f32 0.0, %v897
      %v899 = vpop.f32.mrf.mxu0
      %v900 = vadd.f32 0.0, %v899
      %901 = vmatmul.bf16.gmra.mxu0 %v880
      %v902 = vpop.f32.mrf.mxu0
      %v903 = vadd.f32 0.0, %v902
      %v904 = vpop.f32.mrf.mxu0
      %v905 = vadd.f32 0.0, %v904
      %906 = vmatmul.bf16.gmra.mxu0 %v883
      %v907 = vpop.f32.mrf.mxu0
      %v908 = vadd.f32 0.0, %v907
      %v909 = vpop.f32.mrf.mxu0
      %v910 = vadd.f32 0.0, %v909
      %911 = vmatmul.bf16.gmra.mxu0 %v886
      %v912 = vpop.f32.mrf.mxu0
      %v913 = vadd.f32 0.0, %v912
      %v914 = vpop.f32.mrf.mxu0
      %v915 = vadd.f32 0.0, %v914
      %916 = vdwg.mxu0
      %v917 = vadd.f32 %v832, %v898
      %v918 = vadd.f32 %v833, %v900
      %v919 = vadd.f32 %v834, %v903
      %v920 = vadd.f32 %v835, %v905
      %v921 = vadd.f32 %v836, %v908
      %v922 = vadd.f32 %v837, %v910
      %v923 = vadd.f32 %v838, %v913
      %v924 = vadd.f32 %v839, %v915
      %v925 = vld [vmem:[%s2] sm:$0x1]
      %v927 = vperm.slane %v925, 0
      %v929 = vadd.f32 %v917, %v927
      %v930 = vadd.f32 %v918, %v927
      %v931 = vadd.f32 %v919, %v927
      %v932 = vadd.f32 %v920, %v927
      %v933 = vadd.f32 %v921, %v927
      %v934 = vadd.f32 %v922, %v927
      %v935 = vadd.f32 %v923, %v927
      %v936 = vadd.f32 %v924, %v927
      %vm937 = vcmp.gt.f32.partialorder %v929, 0.0
      %vm938 = vcmp.gt.f32.partialorder %v930, 0.0
      %vm939 = vcmp.gt.f32.partialorder %v931, 0.0
      %vm940 = vcmp.gt.f32.partialorder %v932, 0.0
      %vm941 = vcmp.gt.f32.partialorder %v933, 0.0
      %vm942 = vcmp.gt.f32.partialorder %v934, 0.0
      %vm943 = vcmp.gt.f32.partialorder %v935, 0.0
      %vm944 = vcmp.gt.f32.partialorder %v936, 0.0
      %v945 = vmul.f32 %v929, 0.01
      %v946 = vmul.f32 %v930, 0.01
      %v947 = vmul.f32 %v931, 0.01
      %v948 = vmul.f32 %v932, 0.01
      %v949 = vmul.f32 %v933, 0.01
      %v950 = vmul.f32 %v934, 0.01
      %v951 = vmul.f32 %v935, 0.01
      %v952 = vmul.f32 %v936, 0.01
      %v953 = vsel %vm937, %v929, %v945
      %v954 = vsel %vm938, %v930, %v946
      %v955 = vsel %vm939, %v931, %v947
      %v956 = vsel %vm940, %v932, %v948
      %v957 = vsel %vm941, %v933, %v949
      %v958 = vsel %vm942, %v934, %v950
      %v959 = vsel %vm943, %v935, %v951
      %v960 = vsel %vm944, %v936, %v952
      %v961 = vpack.c.bf16 %v953, %v953
      %v962 = vpack.c.bf16 %v954, %v954
      %v963 = vpack.c.bf16 %v955, %v955
      %v964 = vpack.c.bf16 %v956, %v956
      %v965 = vpack.c.bf16 %v957, %v957
      %v966 = vpack.c.bf16 %v958, %v958
      %v967 = vpack.c.bf16 %v959, %v959
      %v968 = vpack.c.bf16 %v960, %v960
      %vm969 = vcmask 519168
      %970 = vst.msk [vmem:[%s170] sm:$0xf] %vm969, %v961
      %971 = vst.msk [vmem:[%s170 + $0x4] sm:$0xf] %vm969, %v962
      %972 = vst.msk [vmem:[%s170 + $0x8] sm:$0xf] %vm969, %v963
      %973 = vst.msk [vmem:[%s170 + $0xc] sm:$0xf] %vm969, %v964
      %974 = vst.msk [vmem:[%s170 + $0x10] sm:$0xf] %vm969, %v965
      %975 = vst.msk [vmem:[%s170 + $0x14] sm:$0xf] %vm969, %v966
      %976 = vst.msk [vmem:[%s170 + $0x18] sm:$0xf] %vm969, %v967
      %977 = vst.msk [vmem:[%s170 + $0x1c] sm:$0xf] %vm969, %v968
      %p978 = scmp.lt.s32.totalorder %s14, 1
      %s979 = scalar_select %p978, %s14, 1
      %s980 = smul.addr %s979, 8
      %s981 = smul.addr %s980, 4
      %s982 = scalar_lea.vmem %s3, %s981
      // Predicated region
      $region33: #{_lambda_.6} parent=31 // pred_check
        %p983 = pneg %p100
      $region34: #{_lambda_.6} parent=31 // pred_check_branch
        %985 = sbr.rel (%p983) target = $region36
      $region35: #{_lambda_.6} parent=31 // pred_region
        _
      $region36: #{_lambda_.6} parent=31 // pred_fallthru
        _
    $region32: #{_lambda_.6} parent=5 // pred_fallthru
      _
    %p986 = scmp.le.s32.totalorder 2, %s9
    // Predicated region
    $region37: #{_lambda_.6} parent=5 // pred_check
      %p987 = pneg %p986
    $region38: #{_lambda_.6} parent=5 // pred_check_branch
      %989 = sbr.rel (%p987) target = $region40
    $region39: #{_lambda_.6} parent=5 // pred_region
      %s990 = ssub.s32 %s9, 2
      // Predicated region
      $region41: #{_lambda_.6} parent=39 // pred_check
        %p991 = pneg %p106
      $region42: #{_lambda_.6} parent=39 // pred_check_branch
        %993 = sbr.rel (%p991) target = $region44
      $region43: #{_lambda_.6} parent=39 // pred_region
        %p994 = scmp.lt.s32.totalorder %s15, 1
        %s995 = scalar_select %p994, %s15, 1
        %s996 = smul.addr %s995, 8
        %s997 = smul.addr %s996, 4
        %s998 = scalar_lea.vmem %s3, %s997
      $region44: #{_lambda_.6} parent=39 // pred_fallthru
        _
    $region40: #{_lambda_.6} parent=5 // pred_fallthru
      _
  $region6: #{_lambda_.6} parent=0 // loop_footer
    %s13 = sadd.s32 1, %s9
  $region7: #{_lambda_.6} parent=0 // loop_footer_branch
    %8 = sbr.rel target = $region3
  $region8: #{_lambda_.6} parent=0 // loop_exit
    _

// kernel: _lambda_.8
$region0: #{_lambda_.8}
  #allocation0 [shape = 'u32[]', space=smem, size = 0x4, offset = 0x4, fixed_abs, tag = 'smem constant byte address 0x4 - core index']
  #allocation1 [shape = 'u32[72,128]{1,0:T(1,128)}', space=vmem, size = 0x9000, scoped, tag = 'internal scratch']
  %s0 = inlined_call_operand.vmem [shape: bf16[2,184,4], index: 0, kind: input, shape index: {}]
  %s1 = inlined_call_operand.vmem [shape: bf16[9,4,8], index: 1, kind: input, shape index: {}]
  %s2 = inlined_call_operand.vmem [shape: f32[1,8], index: 2, kind: input, shape index: {}]
  %s3 = inlined_call_operand.vmem [shape: bf16[2,184,8], index: 3, kind: output, shape index: {}]
  %s4 = sld [smem:[#allocation0]]
  $region45: #{_lambda_.8} parent=0
    _
  %s6 = ssub.s32 1, %s4
  %s7 = scalar_select 0, %s6, %s4
  loop: start=0, step=1, limit=4
  $region2: #{_lambda_.8} parent=0 // loop_pre_header
    _
  $region3: #{_lambda_.8} parent=0 // loop_header
    %s9 = sphi 0, %s13
    %p10 = scmp.ge.s32.totalorder %s9, 4
    %s19 = sphi 0, %s21
    %s22 = sphi 0, %s19
    %s23 = sphi 0, %s22
    %s39 = sphi 0, %s23
    %s43 = sphi 0, %s43
    %s45 = sphi 0, %s43
    %s46 = sphi 0, %s45
    %s60 = sphi 0, %s46
    %s64 = sphi 0, %s64
    %s66 = sphi 0, %s64
    %s67 = sphi 0, %s66
    %s81 = sphi 0, %s67
    %s87 = sphi 0, %s89
    %s90 = sphi 0, %s87
    %s91 = sphi 0, %s90
    %s107 = sphi 0, %s91
  $region4: #{_lambda_.8} parent=0 // loop_header_branch
    %12 = sbr.rel (%p10) target = $region8
  $region5: #{_lambda_.8} parent=0 // loop_body
    %s14 = ssub.s32 %s9, 1
    %s15 = ssub.s32 %s9, 2
    %s16 = sadd.s32 %s9, 1
    %s17 = ssub.s32 %s9, %s16
    %p18 = scmp.eq.s32.totalorder %s17, 0
    %s20 = sadd.s32 %s19, 1
    %s21 = scalar_select %p18, %s19, %s20
    %p24 = pneg %p18
    %p25 = scmp.eq.s32.totalorder %s9, 1
    %p26 = por %p24, %p25
    %p27 = scmp.ne.s32.totalorder %s19, %s22
    %p28 = scmp.eq.s32.totalorder %s9, 0
    %p29 = por %p27, %p28
    %p30 = scmp.ne.s32.totalorder %s19, %s22
    %p31 = scmp.eq.s32.totalorder %s14, 1
    %p32 = por %p30, %p31
    %p33 = scmp.ne.s32.totalorder %s22, %s23
    %p34 = scmp.eq.s32.totalorder %s14, 0
    %p35 = por %p33, %p34
    %p36 = scmp.ne.s32.totalorder %s22, %s23
    %p37 = scmp.eq.s32.totalorder %s15, 1
    %p38 = por %p36, %p37
    %p40 = scmp.ne.s32.totalorder %s23, %s39
    %p41 = scmp.eq.s32.totalorder %s15, 0
    %p42 = por %p40, %p41
    %s44 = sadd.s32 %s43, 1
    %p47 = scmp.eq.s32.totalorder %s9, 1
    %p48 = scmp.ne.s32.totalorder %s43, %s45
    %p49 = scmp.eq.s32.totalorder %s9, 0
    %p50 = por %p48, %p49
    %p51 = scmp.ne.s32.totalorder %s43, %s45
    %p52 = scmp.eq.s32.totalorder %s14, 1
    %p53 = por %p51, %p52
    %p54 = scmp.ne.s32.totalorder %s45, %s46
    %p55 = scmp.eq.s32.totalorder %s14, 0
    %p56 = por %p54, %p55
    %p57 = scmp.ne.s32.totalorder %s45, %s46
    %p58 = scmp.eq.s32.totalorder %s15, 1
    %p59 = por %p57, %p58
    %p61 = scmp.ne.s32.totalorder %s46, %s60
    %p62 = scmp.eq.s32.totalorder %s15, 0
    %p63 = por %p61, %p62
    %s65 = sadd.s32 %s64, 1
    %p68 = scmp.eq.s32.totalorder %s9, 1
    %p69 = scmp.ne.s32.totalorder %s64, %s66
    %p70 = scmp.eq.s32.totalorder %s9, 0
    %p71 = por %p69, %p70
    %p72 = scmp.ne.s32.totalorder %s64, %s66
    %p73 = scmp.eq.s32.totalorder %s14, 1
    %p74 = por %p72, %p73
    %p75 = scmp.ne.s32.totalorder %s66, %s67
    %p76 = scmp.eq.s32.totalorder %s14, 0
    %p77 = por %p75, %p76
    %p78 = scmp.ne.s32.totalorder %s66, %s67
    %p79 = scmp.eq.s32.totalorder %s15, 1
    %p80 = por %p78, %p79
    %p82 = scmp.ne.s32.totalorder %s67, %s81
    %p83 = scmp.eq.s32.totalorder %s15, 0
    %p84 = por %p82, %p83
    %s85 = ssub.s32 %s9, %s16
    %p86 = scmp.eq.s32.totalorder %s85, 0
    %s88 = sadd.s32 %s87, 1
    %s89 = scalar_select %p86, %s87, %s88
    %p92 = pneg %p86
    %p93 = scmp.eq.s32.totalorder %s9, 1
    %p94 = por %p92, %p93
    %p95 = scmp.ne.s32.totalorder %s87, %s90
    %p96 = scmp.eq.s32.totalorder %s9, 0
    %p97 = por %p95, %p96
    %p98 = scmp.ne.s32.totalorder %s87, %s90
    %p99 = scmp.eq.s32.totalorder %s14, 1
    %p100 = por %p98, %p99
    %p101 = scmp.ne.s32.totalorder %s90, %s91
    %p102 = scmp.eq.s32.totalorder %s14, 0
    %p103 = por %p101, %p102
    %p104 = scmp.ne.s32.totalorder %s90, %s91
    %p105 = scmp.eq.s32.totalorder %s15, 1
    %p106 = por %p104, %p105
    %p108 = scmp.ne.s32.totalorder %s91, %s107
    %p109 = scmp.eq.s32.totalorder %s15, 0
    %p110 = por %p108, %p109
    %p111 = scmp.le.s32.totalorder 1, %s9
    %p112 = scmp.lt.s32.totalorder %s9, 3
    %p113 = pnand %p111, %p112
    %p114 = pneg %p113
    // Predicated region
    $region9: #{_lambda_.8} parent=5 // pred_check
      _
    $region10: #{_lambda_.8} parent=5 // pred_check_branch
      %116 = sbr.rel (%p113) target = $region12
    $region11: #{_lambda_.8} parent=5 // pred_region
      %s117 = ssub.s32 %s9, 1
      // Predicated region
      $region13: #{_lambda_.8} parent=11 // pred_check
        %p118 = pneg %p56
      $region14: #{_lambda_.8} parent=11 // pred_check_branch
        %120 = sbr.rel (%p118) target = $region16
      $region15: #{_lambda_.8} parent=11 // pred_region
        _
      $region16: #{_lambda_.8} parent=11 // pred_fallthru
        _
      // Predicated region
      $region17: #{_lambda_.8} parent=11 // pred_check
        %p121 = pneg %p77
      $region18: #{_lambda_.8} parent=11 // pred_check_branch
        %123 = sbr.rel (%p121) target = $region20
      $region19: #{_lambda_.8} parent=11 // pred_region
        _
      $region20: #{_lambda_.8} parent=11 // pred_fallthru
        _
    $region12: #{_lambda_.8} parent=5 // pred_fallthru
      _
    %p124 = scmp.lt.s32.totalorder %s9, 2
    // Predicated region
    $region21: #{_lambda_.8} parent=5 // pred_check
      %p125 = pneg %p124
    $region22: #{_lambda_.8} parent=5 // pred_check_branch
      %127 = sbr.rel (%p125) target = $region24
    $region23: #{_lambda_.8} parent=5 // pred_region
      // Predicated region
      $region25: #{_lambda_.8} parent=23 // pred_check
        %p128 = pneg %p29
      $region26: #{_lambda_.8} parent=23 // pred_check_branch
        %130 = sbr.rel (%p128) target = $region28
      $region27: #{_lambda_.8} parent=23 // pred_region
        %p131 = scmp.lt.s32.totalorder %s9, 1
        %s132 = scalar_select %p131, %s9, 1
        %s133 = smul.addr %s132, 23
        %s134 = smul.addr %s133, 4
        %s135 = scalar_lea.vmem %s0, %s134
      $region28: #{_lambda_.8} parent=23 // pred_fallthru
        _
    $region24: #{_lambda_.8} parent=5 // pred_fallthru
      _
    %p136 = scmp.le.s32.totalorder 1, %s9
    %p137 = scmp.lt.s32.totalorder %s9, 3
    %p138 = pnand %p136, %p137
    %p139 = pneg %p138
    // Predicated region
    $region29: #{_lambda_.8} parent=5 // pred_check
      _
    $region30: #{_lambda_.8} parent=5 // pred_check_branch
      %141 = sbr.rel (%p138) target = $region32
    $region31: #{_lambda_.8} parent=5 // pred_region
      %s142 = ssub.s32 %s9, 1
      %p143 = scmp.lt.s32.totalorder %s14, 1
      %s144 = scalar_select %p143, %s14, 1
      %s145 = smul.addr %s144, 23
      %s146 = smul.addr %s145, 4
      %s147 = scalar_lea.vmem %s0, %s146
      %p148 = pneg %p35
      %p149 = pneg %p32
      %p150 = pneg %p56
      %p151 = pneg %p53
      %p152 = pneg %p77
      %p153 = pneg %p74
      %p154 = pneg %p103
      %p155 = pneg %p100
      %p156 = scmp.lt.s32.totalorder %s14, 1
      %s157 = scalar_select %p156, %s14, 1
      %s158 = smul.addr %s157, 23
      %s159 = smul.addr %s158, 4
      %s160 = scalar_lea.vmem %s3, %s159
      %p161 = scmp.lt.s32.totalorder %s14, 1
      %s162 = scalar_select %p161, %s14, 1
      %s163 = smul.addr %s162, 23
      %s164 = smul.addr %s163, 4
      %s165 = scalar_lea.vmem %s0, %s164
      %p166 = scmp.lt.s32.totalorder %s14, 1
      %s167 = scalar_select %p166, %s14, 1
      %s168 = smul.addr %s167, 23
      %s169 = smul.addr %s168, 4
      %s170 = scalar_lea.vmem %s3, %s169
      %v172 = vld [vmem:[%s165] sm:$0xf]
      %v173 = vld [vmem:[%s165 + $0x4] sm:$0xf]
      %v174 = vld [vmem:[%s165 + $0x8] sm:$0xf]
      %v175 = vld [vmem:[%s165 + $0xc] sm:$0xf]
      %v176 = vld [vmem:[%s165 + $0x10] sm:$0xf]
      %v177 = vld [vmem:[%s165 + $0x14] sm:$0xf]
      %v178 = vld [vmem:[%s165 + $0x18] sm:$0xf]
      %v179 = vld [vmem:[%s165 + $0x1c] sm:$0xf]
      %v180 = vld [vmem:[%s165 + $0x20] sm:$0xf]
      %v181 = vld [vmem:[%s165 + $0x24] sm:$0xf]
      %v182 = vld [vmem:[%s165 + $0x28] sm:$0xf]
      %v183 = vld [vmem:[%s165 + $0x2c] sm:$0xf]
      %v184 = vld [vmem:[%s165 + $0x30] sm:$0xf]
      %v185 = vld [vmem:[%s165 + $0x34] sm:$0xf]
      %v186 = vld [vmem:[%s165 + $0x38] sm:$0xf]
      %v187 = vld [vmem:[%s165 + $0x3c] sm:$0xf]
      %v188 = vld [vmem:[%s165 + $0x40] sm:$0xf]
      %v189 = vld [vmem:[%s165 + $0x44] sm:$0xf]
      %v190 = vld [vmem:[%s165 + $0x48] sm:$0xf]
      %v191 = vld [vmem:[%s165 + $0x4c] sm:$0xf]
      %v192 = vld [vmem:[%s165 + $0x50] sm:$0xf]
      %v193 = vld [vmem:[%s165 + $0x54] sm:$0xf]
      %v194 = vld [vmem:[%s165 + $0x58] sm:$0xf]
      %v216 = vunpack.c.l.b16 %v172
      %v217 = vunpack.c.l.b16 %v173
      %v218 = vunpack.c.l.b16 %v174
      %v219 = vunpack.c.l.b16 %v175
      %v220 = vunpack.c.l.b16 %v176
      %v221 = vunpack.c.l.b16 %v177
      %v222 = vunpack.c.l.b16 %v178
      %v223 = vunpack.c.l.b16 %v179
      %v224 = vunpack.c.l.b16 %v180
      %v225 = vunpack.c.l.b16 %v181
      %v226 = vunpack.c.l.b16 %v182
      %v227 = vunpack.c.l.b16 %v183
      %v228 = vunpack.c.l.b16 %v184
      %v229 = vunpack.c.l.b16 %v185
      %v230 = vunpack.c.l.b16 %v186
      %v231 = vunpack.c.l.b16 %v187
      %v232 = vunpack.c.l.b16 %v188
      %v233 = vunpack.c.l.b16 %v189
      %v234 = vunpack.c.l.b16 %v190
      %v235 = vunpack.c.l.b16 %v191
      %v236 = vunpack.c.l.b16 %v192
      %v237 = vpack.c.b16 %v217, %v216
      %v238 = vpack.c.b16 %v219, %v218
      %v239 = vpack.c.b16 %v221, %v220
      %v240 = vpack.c.b16 %v223, %v222
      %v241 = vpack.c.b16 %v225, %v224
      %v242 = vpack.c.b16 %v227, %v226
      %v243 = vpack.c.b16 %v229, %v228
      %v244 = vpack.c.b16 %v231, %v230
      %v245 = vpack.c.b16 %v233, %v232
      %v246 = vpack.c.b16 %v235, %v234
      %v247 = vpack.c.b16 %v236, %v236
      %vm248 = vsmask.f32 1280
      %v250 = vshrl.u32 %v237, 16
      %v252 = vrot.slane %v250, 6
      %v253 = vshll.u32 %v237, 16
      %v255 = vrot.slane %v253, 7
      %v256 = vor.u32 %v252, %v255
      %v258 = vshrl.u32 %v238, 16
      %v260 = vrot.slane %v258, 6
      %v261 = vshll.u32 %v238, 16
      %v263 = vrot.slane %v261, 7
      %v264 = vor.u32 %v260, %v263
      %v265 = vsel %vm248, %v256, %v264
      %v267 = vshrl.u32 %v239, 16
      %v269 = vrot.slane %v267, 6
      %v270 = vshll.u32 %v239, 16
      %v272 = vrot.slane %v270, 7
      %v273 = vor.u32 %v269, %v272
      %v274 = vsel %vm248, %v264, %v273
      %v276 = vshrl.u32 %v240, 16
      %v278 = vrot.slane %v276, 6
      %v279 = vshll.u32 %v240, 16
      %v281 = vrot.slane %v279, 7
      %v282 = vor.u32 %v278, %v281
      %v283 = vsel %vm248, %v273, %v282
      %v285 = vshrl.u32 %v241, 16
      %v287 = vrot.slane %v285, 6
      %v288 = vshll.u32 %v241, 16
      %v290 = vrot.slane %v288, 7
      %v291 = vor.u32 %v287, %v290
      %v292 = vsel %vm248, %v282, %v291
      %v294 = vshrl.u32 %v242, 16
      %v296 = vrot.slane %v294, 6
      %v297 = vshll.u32 %v242, 16
      %v299 = vrot.slane %v297, 7
      %v300 = vor.u32 %v296, %v299
      %v301 = vsel %vm248, %v291, %v300
      %v303 = vshrl.u32 %v243, 16
      %v305 = vrot.slane %v303, 6
      %v306 = vshll.u32 %v243, 16
      %v308 = vrot.slane %v306, 7
      %v309 = vor.u32 %v305, %v308
      %v310 = vsel %vm248, %v300, %v309
      %v312 = vshrl.u32 %v244, 16
      %v314 = vrot.slane %v312, 6
      %v315 = vshll.u32 %v244, 16
      %v317 = vrot.slane %v315, 7
      %v318 = vor.u32 %v314, %v317
      %v319 = vsel %vm248, %v309, %v318
      %v321 = vshrl.u32 %v245, 16
      %v323 = vrot.slane %v321, 6
      %v324 = vshll.u32 %v245, 16
      %v326 = vrot.slane %v324, 7
      %v327 = vor.u32 %v323, %v326
      %v328 = vsel %vm248, %v318, %v327
      %v330 = vshrl.u32 %v246, 16
      %v332 = vrot.slane %v330, 6
      %v333 = vshll.u32 %v246, 16
      %v335 = vrot.slane %v333, 7
      %v336 = vor.u32 %v332, %v335
      %v337 = vsel %vm248, %v327, %v336
      %v339 = vshrl.u32 %v247, 16
      %v341 = vrot.slane %v339, 6
      %v342 = vshll.u32 %v247, 16
      %v344 = vrot.slane %v342, 7
      %v345 = vor.u32 %v341, %v344
      %v346 = vsel %vm248, %v336, %v345
      %vm348 = vcmask 1041408
      %vm349 = vmand %vm348, %vm248
      %v350 = vsel %vm349, 0, %v256
      %v351 = vld [vmem:[%s1] sm:$0x3]
      %vm352 = vcmask 1040384
      %v353 = vrot.slane %v237, 7
      %v354 = vrot.slane %v238, 7
      %v355 = vsel %vm352, %v353, %v354
      %v356 = vrot.slane %v239, 7
      %v357 = vsel %vm352, %v354, %v356
      %v358 = vrot.slane %v240, 7
      %v359 = vsel %vm352, %v356, %v358
      %v360 = vrot.slane %v241, 7
      %v361 = vsel %vm352, %v358, %v360
      %v362 = vrot.slane %v242, 7
      %v363 = vsel %vm352, %v360, %v362
      %v364 = vrot.slane %v243, 7
      %v365 = vsel %vm352, %v362, %v364
      %v366 = vrot.slane %v244, 7
      %v367 = vsel %vm352, %v364, %v366
      %v368 = vrot.slane %v245, 7
      %v369 = vsel %vm352, %v366, %v368
      %v370 = vrot.slane %v246, 7
      %v371 = vsel %vm352, %v368, %v370
      %v372 = vrot.slane %v247, 7
      %v373 = vsel %vm352, %v370, %v372
      %vm374 = vcmask 1040384
      %v377 = vsel %vm374, 0, %v353
      %s378 = scalar_lea.vmem %s1, 2
      %v379 = vld [vmem:[%s378] sm:$0x3]
      %vm380 = vcmask 31744
      %v381 = vsel %vm380, 0, 0
      %v383 = vsel %vm380, %v377, 0
      %v386 = vsel %vm380, %v355, 0
      %v389 = vsel %vm380, %v357, 0
      %v392 = vsel %vm380, %v359, 0
      %v395 = vsel %vm380, %v361, 0
      %v398 = vsel %vm380, %v363, 0
      %v401 = vsel %vm380, %v365, 0
      %v404 = vsel %vm380, %v367, 0
      %v407 = vsel %vm380, %v369, 0
      %v410 = vsel %vm380, %v371, 0
      %v413 = vsel %vm380, %v373, 0
      %vm415 = vcmask 1041408
      %v417 = vsel %vm415, %v379, 0
      %419 = vmatpush.bf16.msra.mxu0 0
      %420 = vmatpush.bf16.msra.mxu0 0
      %421 = vmatpush.bf16.msra.mxu0 0
      %422 = vmatpush.bf16.msra.mxu0 0
      %423 = vmatpush.bf16.msra.mxu0 0
      %424 = vmatpush.bf16.msra.mxu0 0
      %425 = vmatpush.bf16.msra.mxu0 0
      %426 = vmatpush.bf16.msra.mxu0 %v417
      %427 = vmatmul.bf16.gmra.mxu0 %v381
      %v428 = vpop.f32.mrf.mxu0
      %v429 = vadd.f32 0.0, %v428
      %v430 = vpop.f32.mrf.mxu0
      %v431 = vadd.f32 0.0, %v430
      %432 = vmatmul.bf16.gmra.mxu0 %v383
      %v433 = vpop.f32.mrf.mxu0
      %v434 = vadd.f32 0.0, %v433
      %v435 = vpop.f32.mrf.mxu0
      %v436 = vadd.f32 0.0, %v435
      %437 = vmatmul.bf16.gmra.mxu0 %v386
      %v438 = vpop.f32.mrf.mxu0
      %v439 = vadd.f32 0.0, %v438
      %v440 = vpop.f32.mrf.mxu0
      %v441 = vadd.f32 0.0, %v440
      %442 = vmatmul.bf16.gmra.mxu0 %v389
      %v443 = vpop.f32.mrf.mxu0
      %v444 = vadd.f32 0.0, %v443
      %v445 = vpop.f32.mrf.mxu0
      %v446 = vadd.f32 0.0, %v445
      %447 = vmatmul.bf16.gmra.mxu0 %v392
      %v448 = vpop.f32.mrf.mxu0
      %v449 = vadd.f32 0.0, %v448
      %v450 = vpop.f32.mrf.mxu0
      %v451 = vadd.f32 0.0, %v450
      %452 = vmatmul.bf16.gmra.mxu0 %v395
      %v453 = vpop.f32.mrf.mxu0
      %v454 = vadd.f32 0.0, %v453
      %v455 = vpop.f32.mrf.mxu0
      %v456 = vadd.f32 0.0, %v455
      %457 = vmatmul.bf16.gmra.mxu0 %v398
      %v458 = vpop.f32.mrf.mxu0
      %v459 = vadd.f32 0.0, %v458
      %v460 = vpop.f32.mrf.mxu0
      %v461 = vadd.f32 0.0, %v460
      %462 = vmatmul.bf16.gmra.mxu0 %v401
      %v463 = vpop.f32.mrf.mxu0
      %v464 = vadd.f32 0.0, %v463
      %v465 = vpop.f32.mrf.mxu0
      %v466 = vadd.f32 0.0, %v465
      %467 = vmatmul.bf16.gmra.mxu0 %v404
      %v468 = vpop.f32.mrf.mxu0
      %v469 = vadd.f32 0.0, %v468
      %v470 = vpop.f32.mrf.mxu0
      %v471 = vadd.f32 0.0, %v470
      %472 = vmatmul.bf16.gmra.mxu0 %v407
      %v473 = vpop.f32.mrf.mxu0
      %v474 = vadd.f32 0.0, %v473
      %v475 = vpop.f32.mrf.mxu0
      %v476 = vadd.f32 0.0, %v475
      %477 = vmatmul.bf16.gmra.mxu0 %v410
      %v478 = vpop.f32.mrf.mxu0
      %v479 = vadd.f32 0.0, %v478
      %v480 = vpop.f32.mrf.mxu0
      %v481 = vadd.f32 0.0, %v480
      %482 = vmatmul.bf16.gmra.mxu0 %v413
      %v483 = vpop.f32.mrf.mxu0
      %v484 = vadd.f32 0.0, %v483
      %v485 = vpop.f32.mrf.mxu0
      %486 = vdwg.mxu0
      %v488 = vsel %vm380, %v350, 0
      %v491 = vsel %vm380, %v265, 0
      %v494 = vsel %vm380, %v274, 0
      %v497 = vsel %vm380, %v283, 0
      %v500 = vsel %vm380, %v292, 0
      %v503 = vsel %vm380, %v301, 0
      %v506 = vsel %vm380, %v310, 0
      %v509 = vsel %vm380, %v319, 0
      %v512 = vsel %vm380, %v328, 0
      %v515 = vsel %vm380, %v337, 0
      %v518 = vsel %vm380, %v346, 0
      %v521 = vsel %vm415, %v351, 0
      %523 = vmatpush.bf16.msra.mxu0 0
      %524 = vmatpush.bf16.msra.mxu0 0
      %525 = vmatpush.bf16.msra.mxu0 0
      %526 = vmatpush.bf16.msra.mxu0 0
      %527 = vmatpush.bf16.msra.mxu0 0
      %528 = vmatpush.bf16.msra.mxu0 0
      %529 = vmatpush.bf16.msra.mxu0 0
      %530 = vmatpush.bf16.msra.mxu0 %v521
      %531 = vmatmul.bf16.gmra.mxu0 %v381
      %v532 = vpop.f32.mrf.mxu0
      %v533 = vadd.f32 %v429, %v532
      %v534 = vpop.f32.mrf.mxu0
      %v535 = vadd.f32 %v431, %v534
      %536 = vmatmul.bf16.gmra.mxu0 %v488
      %v537 = vpop.f32.mrf.mxu0
      %v538 = vadd.f32 %v434, %v537
      %v539 = vpop.f32.mrf.mxu0
      %v540 = vadd.f32 %v436, %v539
      %541 = vmatmul.bf16.gmra.mxu0 %v491
      %v542 = vpop.f32.mrf.mxu0
      %v543 = vadd.f32 %v439, %v542
      %v544 = vpop.f32.mrf.mxu0
      %v545 = vadd.f32 %v441, %v544
      %546 = vmatmul.bf16.gmra.mxu0 %v494
      %v547 = vpop.f32.mrf.mxu0
      %v548 = vadd.f32 %v444, %v547
      %v549 = vpop.f32.mrf.mxu0
      %v550 = vadd.f32 %v446, %v549
      %551 = vmatmul.bf16.gmra.mxu0 %v497
      %v552 = vpop.f32.mrf.mxu0
      %v553 = vadd.f32 %v449, %v552
      %v554 = vpop.f32.mrf.mxu0
      %v555 = vadd.f32 %v451, %v554
      %556 = vmatmul.bf16.gmra.mxu0 %v500
      %v557 = vpop.f32.mrf.mxu0
      %v558 = vadd.f32 %v454, %v557
      %v559 = vpop.f32.mrf.mxu0
      %v560 = vadd.f32 %v456, %v559
      %561 = vmatmul.bf16.gmra.mxu0 %v503
      %v562 = vpop.f32.mrf.mxu0
      %v563 = vadd.f32 %v459, %v562
      %v564 = vpop.f32.mrf.mxu0
      %v565 = vadd.f32 %v461, %v564
      %566 = vmatmul.bf16.gmra.mxu0 %v506
      %v567 = vpop.f32.mrf.mxu0
      %v568 = vadd.f32 %v464, %v567
      %v569 = vpop.f32.mrf.mxu0
      %v570 = vadd.f32 %v466, %v569
      %571 = vmatmul.bf16.gmra.mxu0 %v509
      %v572 = vpop.f32.mrf.mxu0
      %v573 = vadd.f32 %v469, %v572
      %v574 = vpop.f32.mrf.mxu0
      %v575 = vadd.f32 %v471, %v574
      %576 = vmatmul.bf16.gmra.mxu0 %v512
      %v577 = vpop.f32.mrf.mxu0
      %v578 = vadd.f32 %v474, %v577
      %v579 = vpop.f32.mrf.mxu0
      %v580 = vadd.f32 %v476, %v579
      %581 = vmatmul.bf16.gmra.mxu0 %v515
      %v582 = vpop.f32.mrf.mxu0
      %v583 = vadd.f32 %v479, %v582
      %v584 = vpop.f32.mrf.mxu0
      %v585 = vadd.f32 %v481, %v584
      %586 = vmatmul.bf16.gmra.mxu0 %v518
      %v587 = vpop.f32.mrf.mxu0
      %v588 = vadd.f32 %v484, %v587
      %v589 = vpop.f32.mrf.mxu0
      %590 = vdwg.mxu0
      %vm591 = vsmask.f32 256
      %v592 = vrot.slane %v250, 7
      %v593 = vor.u32 %v592, %v253
      %v594 = vrot.slane %v258, 7
      %v595 = vor.u32 %v594, %v261
      %v596 = vsel %vm591, %v592, %v595
      %v597 = vrot.slane %v267, 7
      %v598 = vor.u32 %v597, %v270
      %v599 = vsel %vm591, %v594, %v598
      %v600 = vrot.slane %v276, 7
      %v601 = vor.u32 %v600, %v279
      %v602 = vsel %vm591, %v597, %v601
      %v603 = vrot.slane %v285, 7
      %v604 = vor.u32 %v603, %v288
      %v605 = vsel %vm591, %v600, %v604
      %v606 = vrot.slane %v294, 7
      %v607 = vor.u32 %v606, %v297
      %v608 = vsel %vm591, %v603, %v607
      %v609 = vrot.slane %v303, 7
      %v610 = vor.u32 %v609, %v306
      %v611 = vsel %vm591, %v606, %v610
      %v612 = vrot.slane %v312, 7
      %v613 = vor.u32 %v612, %v315
      %v614 = vsel %vm591, %v609, %v613
      %v615 = vrot.slane %v321, 7
      %v616 = vor.u32 %v615, %v324
      %v617 = vsel %vm591, %v612, %v616
      %v618 = vrot.slane %v330, 7
      %v619 = vor.u32 %v618, %v333
      %v620 = vsel %vm591, %v615, %v619
      %v621 = vrot.slane %v339, 7
      %v622 = vor.u32 %v621, %v342
      %v623 = vsel %vm591, %v618, %v622
      %vm625 = vmand %vm352, %vm591
      %v626 = vsel %vm625, 0, %v593
      %s627 = scalar_lea.vmem %s1, 4
      %v628 = vld [vmem:[%s627] sm:$0x3]
      %v630 = vsel %vm380, %v626, 0
      %v633 = vsel %vm380, %v596, 0
      %v636 = vsel %vm380, %v599, 0
      %v639 = vsel %vm380, %v602, 0
      %v642 = vsel %vm380, %v605, 0
      %v645 = vsel %vm380, %v608, 0
      %v648 = vsel %vm380, %v611, 0
      %v651 = vsel %vm380, %v614, 0
      %v654 = vsel %vm380, %v617, 0
      %v657 = vsel %vm380, %v620, 0
      %v660 = vsel %vm380, %v623, 0
      %v663 = vsel %vm415, %v628, 0
      %665 = vmatpush.bf16.msra.mxu0 0
      %666 = vmatpush.bf16.msra.mxu0 0
      %667 = vmatpush.bf16.msra.mxu0 0
      %668 = vmatpush.bf16.msra.mxu0 0
      %669 = vmatpush.bf16.msra.mxu0 0
      %670 = vmatpush.bf16.msra.mxu0 0
      %671 = vmatpush.bf16.msra.mxu0 0
      %672 = vmatpush.bf16.msra.mxu0 %v663
      %673 = vmatmul.bf16.gmra.mxu0 %v381
      %v674 = vpop.f32.mrf.mxu0
      %v675 = vadd.f32 0.0, %v674
      %v676 = vpop.f32.mrf.mxu0
      %v677 = vadd.f32 0.0, %v676
      %678 = vmatmul.bf16.gmra.mxu0 %v630
      %v679 = vpop.f32.mrf.mxu0
      %v680 = vadd.f32 0.0, %v679
      %v681 = vpop.f32.mrf.mxu0
      %v682 = vadd.f32 0.0, %v681
      %683 = vmatmul.bf16.gmra.mxu0 %v633
      %v684 = vpop.f32.mrf.mxu0
      %v685 = vadd.f32 0.0, %v684
      %v686 = vpop.f32.mrf.mxu0
      %v687 = vadd.f32 0.0, %v686
      %688 = vmatmul.bf16.gmra.mxu0 %v636
      %v689 = vpop.f32.mrf.mxu0
      %v690 = vadd.f32 0.0, %v689
      %v691 = vpop.f32.mrf.mxu0
      %v692 = vadd.f32 0.0, %v691
      %693 = vmatmul.bf16.gmra.mxu0 %v639
      %v694 = vpop.f32.mrf.mxu0
      %v695 = vadd.f32 0.0, %v694
      %v696 = vpop.f32.mrf.mxu0
      %v697 = vadd.f32 0.0, %v696
      %698 = vmatmul.bf16.gmra.mxu0 %v642
      %v699 = vpop.f32.mrf.mxu0
      %v700 = vadd.f32 0.0, %v699
      %v701 = vpop.f32.mrf.mxu0
      %v702 = vadd.f32 0.0, %v701
      %703 = vmatmul.bf16.gmra.mxu0 %v645
      %v704 = vpop.f32.mrf.mxu0
      %v705 = vadd.f32 0.0, %v704
      %v706 = vpop.f32.mrf.mxu0
      %v707 = vadd.f32 0.0, %v706
      %708 = vmatmul.bf16.gmra.mxu0 %v648
      %v709 = vpop.f32.mrf.mxu0
      %v710 = vadd.f32 0.0, %v709
      %v711 = vpop.f32.mrf.mxu0
      %v712 = vadd.f32 0.0, %v711
      %713 = vmatmul.bf16.gmra.mxu0 %v651
      %v714 = vpop.f32.mrf.mxu0
      %v715 = vadd.f32 0.0, %v714
      %v716 = vpop.f32.mrf.mxu0
      %v717 = vadd.f32 0.0, %v716
      %718 = vmatmul.bf16.gmra.mxu0 %v654
      %v719 = vpop.f32.mrf.mxu0
      %v720 = vadd.f32 0.0, %v719
      %v721 = vpop.f32.mrf.mxu0
      %v722 = vadd.f32 0.0, %v721
      %723 = vmatmul.bf16.gmra.mxu0 %v657
      %v724 = vpop.f32.mrf.mxu0
      %v725 = vadd.f32 0.0, %v724
      %v726 = vpop.f32.mrf.mxu0
      %v727 = vadd.f32 0.0, %v726
      %728 = vmatmul.bf16.gmra.mxu0 %v660
      %v729 = vpop.f32.mrf.mxu0
      %v730 = vadd.f32 0.0, %v729
      %v731 = vpop.f32.mrf.mxu0
      %732 = vdwg.mxu0
      %v733 = vadd.f32 %v533, %v675
      %v734 = vadd.f32 %v535, %v677
      %v735 = vadd.f32 %v538, %v680
      %v736 = vadd.f32 %v540, %v682
      %v737 = vadd.f32 %v543, %v685
      %v738 = vadd.f32 %v545, %v687
      %v739 = vadd.f32 %v548, %v690
      %v740 = vadd.f32 %v550, %v692
      %v741 = vadd.f32 %v553, %v695
      %v742 = vadd.f32 %v555, %v697
      %v743 = vadd.f32 %v558, %v700
      %v744 = vadd.f32 %v560, %v702
      %v745 = vadd.f32 %v563, %v705
      %v746 = vadd.f32 %v565, %v707
      %v747 = vadd.f32 %v568, %v710
      %v748 = vadd.f32 %v570, %v712
      %v749 = vadd.f32 %v573, %v715
      %v750 = vadd.f32 %v575, %v717
      %v751 = vadd.f32 %v578, %v720
      %v752 = vadd.f32 %v580, %v722
      %v753 = vadd.f32 %v583, %v725
      %v754 = vadd.f32 %v585, %v727
      %v755 = vadd.f32 %v588, %v730
      %v758 = vunpack.c.l.b16 %v193
      %v759 = vunpack.c.l.b16 %v194
      %v760 = vpack.c.b16 %v758, %v236
      %v761 = vpack.c.b16 %v759, %v759
      %v763 = vshrl.u32 %v760, 16
      %v765 = vrot.slane %v763, 7
      %v766 = vshll.u32 %v760, 16
      %v768 = vor.u32 %v765, %v766
      %v769 = vsel %vm591, %v618, %v768
      %v771 = vshrl.u32 %v761, 16
      %v773 = vrot.slane %v771, 7
      %v774 = vshll.u32 %v761, 16
      %v776 = vor.u32 %v773, %v774
      %v777 = vsel %vm591, %v765, %v776
      %s778 = scalar_lea.vmem %s1, 6
      %v779 = vld [vmem:[%s778] sm:$0x3]
      %v781 = vsel %vm380, %v769, 0
      %v784 = vsel %vm380, %v777, 0
      %v787 = vsel %vm415, %v779, 0
      %789 = vmatpush.bf16.msra.mxu0 0
      %790 = vmatpush.bf16.msra.mxu0 0
      %791 = vmatpush.bf16.msra.mxu0 0
      %792 = vmatpush.bf16.msra.mxu0 0
      %793 = vmatpush.bf16.msra.mxu0 0
      %794 = vmatpush.bf16.msra.mxu0 0
      %795 = vmatpush.bf16.msra.mxu0 0
      %796 = vmatpush.bf16.msra.mxu0 %v787
      %797 = vmatmul.bf16.gmra.mxu0 %v630
      %v798 = vpop.f32.mrf.mxu0
      %v799 = vadd.f32 0.0, %v798
      %v800 = vpop.f32.mrf.mxu0
      %v801 = vadd.f32 0.0, %v800
      %802 = vmatmul.bf16.gmra.mxu0 %v633
      %v803 = vpop.f32.mrf.mxu0
      %v804 = vadd.f32 0.0, %v803
      %v805 = vpop.f32.mrf.mxu0
      %v806 = vadd.f32 0.0, %v805
      %807 = vmatmul.bf16.gmra.mxu0 %v636
      %v808 = vpop.f32.mrf.mxu0
      %v809 = vadd.f32 0.0, %v808
      %v810 = vpop.f32.mrf.mxu0
      %v811 = vadd.f32 0.0, %v810
      %812 = vmatmul.bf16.gmra.mxu0 %v639
      %v813 = vpop.f32.mrf.mxu0
      %v814 = vadd.f32 0.0, %v813
      %v815 = vpop.f32.mrf.mxu0
      %v816 = vadd.f32 0.0, %v815
      %817 = vmatmul.bf16.gmra.mxu0 %v642
      %v818 = vpop.f32.mrf.mxu0
      %v819 = vadd.f32 0.0, %v818
      %v820 = vpop.f32.mrf.mxu0
      %v821 = vadd.f32 0.0, %v820
      %822 = vmatmul.bf16.gmra.mxu0 %v645
      %v823 = vpop.f32.mrf.mxu0
      %v824 = vadd.f32 0.0, %v823
      %v825 = vpop.f32.mrf.mxu0
      %v826 = vadd.f32 0.0, %v825
      %827 = vmatmul.bf16.gmra.mxu0 %v648
      %v828 = vpop.f32.mrf.mxu0
      %v829 = vadd.f32 0.0, %v828
      %v830 = vpop.f32.mrf.mxu0
      %v831 = vadd.f32 0.0, %v830
      %832 = vmatmul.bf16.gmra.mxu0 %v651
      %v833 = vpop.f32.mrf.mxu0
      %v834 = vadd.f32 0.0, %v833
      %v835 = vpop.f32.mrf.mxu0
      %v836 = vadd.f32 0.0, %v835
      %837 = vmatmul.bf16.gmra.mxu0 %v654
      %v838 = vpop.f32.mrf.mxu0
      %v839 = vadd.f32 0.0, %v838
      %v840 = vpop.f32.mrf.mxu0
      %v841 = vadd.f32 0.0, %v840
      %842 = vmatmul.bf16.gmra.mxu0 %v657
      %v843 = vpop.f32.mrf.mxu0
      %v844 = vadd.f32 0.0, %v843
      %v845 = vpop.f32.mrf.mxu0
      %v846 = vadd.f32 0.0, %v845
      %847 = vmatmul.bf16.gmra.mxu0 %v781
      %v848 = vpop.f32.mrf.mxu0
      %v849 = vadd.f32 0.0, %v848
      %v850 = vpop.f32.mrf.mxu0
      %v851 = vadd.f32 0.0, %v850
      %852 = vmatmul.bf16.gmra.mxu0 %v784
      %v853 = vpop.f32.mrf.mxu0
      %v854 = vadd.f32 0.0, %v853
      %v855 = vpop.f32.mrf.mxu0
      %856 = vdwg.mxu0
      %v857 = vadd.f32 %v733, %v799
      %v858 = vadd.f32 %v734, %v801
      %v859 = vadd.f32 %v735, %v804
      %v860 = vadd.f32 %v736, %v806
      %v861 = vadd.f32 %v737, %v809
      %v862 = vadd.f32 %v738, %v811
      %v863 = vadd.f32 %v739, %v814
      %v864 = vadd.f32 %v740, %v816
      %v865 = vadd.f32 %v741, %v819
      %v866 = vadd.f32 %v742, %v821
      %v867 = vadd.f32 %v743, %v824
      %v868 = vadd.f32 %v744, %v826
      %v869 = vadd.f32 %v745, %v829
      %v870 = vadd.f32 %v746, %v831
      %v871 = vadd.f32 %v747, %v834
      %v872 = vadd.f32 %v748, %v836
      %v873 = vadd.f32 %v749, %v839
      %v874 = vadd.f32 %v750, %v841
      %v875 = vadd.f32 %v751, %v844
      %v876 = vadd.f32 %v752, %v846
      %v877 = vadd.f32 %v753, %v849
      %v878 = vadd.f32 %v754, %v851
      %v879 = vadd.f32 %v755, %v854
      %s880 = scalar_lea.vmem %s1, 8
      %v881 = vld [vmem:[%s880] sm:$0x3]
      %v882 = vsel %vm380, %v237, 0
      %v884 = vsel %vm380, %v238, 0
      %v886 = vsel %vm380, %v239, 0
      %v888 = vsel %vm380, %v240, 0
      %v890 = vsel %vm380, %v241, 0
      %v892 = vsel %vm380, %v242, 0
      %v894 = vsel %vm380, %v243, 0
      %v896 = vsel %vm380, %v244, 0
      %v898 = vsel %vm380, %v245, 0
      %v900 = vsel %vm380, %v246, 0
      %v902 = vsel %vm380, %v760, 0
      %v904 = vsel %vm380, %v761, 0
      %v907 = vsel %vm415, %v881, 0
      %909 = vmatpush.bf16.msra.mxu0 0
      %910 = vmatpush.bf16.msra.mxu0 0
      %911 = vmatpush.bf16.msra.mxu0 0
      %912 = vmatpush.bf16.msra.mxu0 0
      %913 = vmatpush.bf16.msra.mxu0 0
      %914 = vmatpush.bf16.msra.mxu0 0
      %915 = vmatpush.bf16.msra.mxu0 0
      %916 = vmatpush.bf16.msra.mxu0 %v907
      %917 = vmatmul.bf16.gmra.mxu0 %v882
      %v918 = vpop.f32.mrf.mxu0
      %v919 = vadd.f32 0.0, %v918
      %v920 = vpop.f32.mrf.mxu0
      %v921 = vadd.f32 0.0, %v920
      %922 = vmatmul.bf16.gmra.mxu0 %v884
      %v923 = vpop.f32.mrf.mxu0
      %v924 = vadd.f32 0.0, %v923
      %v925 = vpop.f32.mrf.mxu0
      %v926 = vadd.f32 0.0, %v925
      %927 = vmatmul.bf16.gmra.mxu0 %v886
      %v928 = vpop.f32.mrf.mxu0
      %v929 = vadd.f32 0.0, %v928
      %v930 = vpop.f32.mrf.mxu0
      %v931 = vadd.f32 0.0, %v930
      %932 = vmatmul.bf16.gmra.mxu0 %v888
      %v933 = vpop.f32.mrf.mxu0
      %v934 = vadd.f32 0.0, %v933
      %v935 = vpop.f32.mrf.mxu0
      %v936 = vadd.f32 0.0, %v935
      %937 = vmatmul.bf16.gmra.mxu0 %v890
      %v938 = vpop.f32.mrf.mxu0
      %v939 = vadd.f32 0.0, %v938
      %v940 = vpop.f32.mrf.mxu0
      %v941 = vadd.f32 0.0, %v940
      %942 = vmatmul.bf16.gmra.mxu0 %v892
      %v943 = vpop.f32.mrf.mxu0
      %v944 = vadd.f32 0.0, %v943
      %v945 = vpop.f32.mrf.mxu0
      %v946 = vadd.f32 0.0, %v945
      %947 = vmatmul.bf16.gmra.mxu0 %v894
      %v948 = vpop.f32.mrf.mxu0
      %v949 = vadd.f32 0.0, %v948
      %v950 = vpop.f32.mrf.mxu0
      %v951 = vadd.f32 0.0, %v950
      %952 = vmatmul.bf16.gmra.mxu0 %v896
      %v953 = vpop.f32.mrf.mxu0
      %v954 = vadd.f32 0.0, %v953
      %v955 = vpop.f32.mrf.mxu0
      %v956 = vadd.f32 0.0, %v955
      %957 = vmatmul.bf16.gmra.mxu0 %v898
      %v958 = vpop.f32.mrf.mxu0
      %v959 = vadd.f32 0.0, %v958
      %v960 = vpop.f32.mrf.mxu0
      %v961 = vadd.f32 0.0, %v960
      %962 = vmatmul.bf16.gmra.mxu0 %v900
      %v963 = vpop.f32.mrf.mxu0
      %v964 = vadd.f32 0.0, %v963
      %v965 = vpop.f32.mrf.mxu0
      %v966 = vadd.f32 0.0, %v965
      %967 = vmatmul.bf16.gmra.mxu0 %v902
      %v968 = vpop.f32.mrf.mxu0
      %v969 = vadd.f32 0.0, %v968
      %v970 = vpop.f32.mrf.mxu0
      %v971 = vadd.f32 0.0, %v970
      %972 = vmatmul.bf16.gmra.mxu0 %v904
      %v973 = vpop.f32.mrf.mxu0
      %v974 = vadd.f32 0.0, %v973
      %v975 = vpop.f32.mrf.mxu0
      %976 = vdwg.mxu0
      %v977 = vadd.f32 %v857, %v919
      %v978 = vadd.f32 %v858, %v921
      %v979 = vadd.f32 %v859, %v924
      %v980 = vadd.f32 %v860, %v926
      %v981 = vadd.f32 %v861, %v929
      %v982 = vadd.f32 %v862, %v931
      %v983 = vadd.f32 %v863, %v934
      %v984 = vadd.f32 %v864, %v936
      %v985 = vadd.f32 %v865, %v939
      %v986 = vadd.f32 %v866, %v941
      %v987 = vadd.f32 %v867, %v944
      %v988 = vadd.f32 %v868, %v946
      %v989 = vadd.f32 %v869, %v949
      %v990 = vadd.f32 %v870, %v951
      %v991 = vadd.f32 %v871, %v954
      %v992 = vadd.f32 %v872, %v956
      %v993 = vadd.f32 %v873, %v959
      %v994 = vadd.f32 %v874, %v961
      %v995 = vadd.f32 %v875, %v964
      %v996 = vadd.f32 %v876, %v966
      %v997 = vadd.f32 %v877, %v969
      %v998 = vadd.f32 %v878, %v971
      %v999 = vadd.f32 %v879, %v974
      %vm1000 = vsmask.f32 7424
      %v1001 = vrot.slane %v253, 1
      %v1002 = vor.u32 %v250, %v1001
      %v1003 = vrot.slane %v261, 1
      %v1004 = vsel %vm1000, %v1002, %v1003
      %v1005 = vor.u32 %v258, %v1003
      %v1006 = vrot.slane %v270, 1
      %v1007 = vsel %vm1000, %v1005, %v1006
      %v1008 = vor.u32 %v267, %v1006
      %v1009 = vrot.slane %v279, 1
      %v1010 = vsel %vm1000, %v1008, %v1009
      %v1011 = vor.u32 %v276, %v1009
      %v1012 = vrot.slane %v288, 1
      %v1013 = vsel %vm1000, %v1011, %v1012
      %v1014 = vor.u32 %v285, %v1012
      %v1015 = vrot.slane %v297, 1
      %v1016 = vsel %vm1000, %v1014, %v1015
      %v1017 = vor.u32 %v294, %v1015
      %v1018 = vrot.slane %v306, 1
      %v1019 = vsel %vm1000, %v1017, %v1018
      %v1020 = vor.u32 %v303, %v1018
      %v1021 = vrot.slane %v315, 1
      %v1022 = vsel %vm1000, %v1020, %v1021
      %v1023 = vor.u32 %v312, %v1021
      %v1024 = vrot.slane %v324, 1
      %v1025 = vsel %vm1000, %v1023, %v1024
      %v1026 = vor.u32 %v321, %v1024
      %v1027 = vrot.slane %v333, 1
      %v1028 = vsel %vm1000, %v1026, %v1027
      %v1029 = vor.u32 %v330, %v1027
      %v1030 = vrot.slane %v766, 1
      %v1031 = vsel %vm1000, %v1029, %v1030
      %v1032 = vor.u32 %v763, %v1030
      %v1033 = vrot.slane %v774, 1
      %v1034 = vsel %vm1000, %v1032, %v1033
      %v1035 = vor.u32 %v771, %v1033
      %vm1037 = vcmask 1043456
      %vm1038 = vsmask.f32 3328
      %vm1039 = vmand %vm1037, %vm1038
      %v1040 = vsel %vm1039, %v1035, 0
      %s1041 = scalar_lea.vmem %s1, 10
      %v1042 = vld [vmem:[%s1041] sm:$0x3]
      %v1044 = vsel %vm380, %v1004, 0
      %v1047 = vsel %vm380, %v1007, 0
      %v1050 = vsel %vm380, %v1010, 0
      %v1053 = vsel %vm380, %v1013, 0
      %v1056 = vsel %vm380, %v1016, 0
      %v1059 = vsel %vm380, %v1019, 0
      %v1062 = vsel %vm380, %v1022, 0
      %v1065 = vsel %vm380, %v1025, 0
      %v1068 = vsel %vm380, %v1028, 0
      %v1071 = vsel %vm380, %v1031, 0
      %v1074 = vsel %vm380, %v1034, 0
      %v1077 = vsel %vm380, %v1040, 0
      %v1080 = vsel %vm415, %v1042, 0
      %1082 = vmatpush.bf16.msra.mxu0 0
      %1083 = vmatpush.bf16.msra.mxu0 0
      %1084 = vmatpush.bf16.msra.mxu0 0
      %1085 = vmatpush.bf16.msra.mxu0 0
      %1086 = vmatpush.bf16.msra.mxu0 0
      %1087 = vmatpush.bf16.msra.mxu0 0
      %1088 = vmatpush.bf16.msra.mxu0 0
      %1089 = vmatpush.bf16.msra.mxu0 %v1080
      %1090 = vmatmul.bf16.gmra.mxu0 %v1044
      %v1091 = vpop.f32.mrf.mxu0
      %v1092 = vadd.f32 0.0, %v1091
      %v1093 = vpop.f32.mrf.mxu0
      %v1094 = vadd.f32 0.0, %v1093
      %1095 = vmatmul.bf16.gmra.mxu0 %v1047
      %v1096 = vpop.f32.mrf.mxu0
      %v1097 = vadd.f32 0.0, %v1096
      %v1098 = vpop.f32.mrf.mxu0
      %v1099 = vadd.f32 0.0, %v1098
      %1100 = vmatmul.bf16.gmra.mxu0 %v1050
      %v1101 = vpop.f32.mrf.mxu0
      %v1102 = vadd.f32 0.0, %v1101
      %v1103 = vpop.f32.mrf.mxu0
      %v1104 = vadd.f32 0.0, %v1103
      %1105 = vmatmul.bf16.gmra.mxu0 %v1053
      %v1106 = vpop.f32.mrf.mxu0
      %v1107 = vadd.f32 0.0, %v1106
      %v1108 = vpop.f32.mrf.mxu0
      %v1109 = vadd.f32 0.0, %v1108
      %1110 = vmatmul.bf16.gmra.mxu0 %v1056
      %v1111 = vpop.f32.mrf.mxu0
      %v1112 = vadd.f32 0.0, %v1111
      %v1113 = vpop.f32.mrf.mxu0
      %v1114 = vadd.f32 0.0, %v1113
      %1115 = vmatmul.bf16.gmra.mxu0 %v1059
      %v1116 = vpop.f32.mrf.mxu0
      %v1117 = vadd.f32 0.0, %v1116
      %v1118 = vpop.f32.mrf.mxu0
      %v1119 = vadd.f32 0.0, %v1118
      %1120 = vmatmul.bf16.gmra.mxu0 %v1062
      %v1121 = vpop.f32.mrf.mxu0
      %v1122 = vadd.f32 0.0, %v1121
      %v1123 = vpop.f32.mrf.mxu0
      %v1124 = vadd.f32 0.0, %v1123
      %1125 = vmatmul.bf16.gmra.mxu0 %v1065
      %v1126 = vpop.f32.mrf.mxu0
      %v1127 = vadd.f32 0.0, %v1126
      %v1128 = vpop.f32.mrf.mxu0
      %v1129 = vadd.f32 0.0, %v1128
      %1130 = vmatmul.bf16.gmra.mxu0 %v1068
      %v1131 = vpop.f32.mrf.mxu0
      %v1132 = vadd.f32 0.0, %v1131
      %v1133 = vpop.f32.mrf.mxu0
      %v1134 = vadd.f32 0.0, %v1133
      %1135 = vmatmul.bf16.gmra.mxu0 %v1071
      %v1136 = vpop.f32.mrf.mxu0
      %v1137 = vadd.f32 0.0, %v1136
      %v1138 = vpop.f32.mrf.mxu0
      %v1139 = vadd.f32 0.0, %v1138
      %1140 = vmatmul.bf16.gmra.mxu0 %v1074
      %v1141 = vpop.f32.mrf.mxu0
      %v1142 = vadd.f32 0.0, %v1141
      %v1143 = vpop.f32.mrf.mxu0
      %v1144 = vadd.f32 0.0, %v1143
      %1145 = vmatmul.bf16.gmra.mxu0 %v1077
      %v1146 = vpop.f32.mrf.mxu0
      %v1147 = vadd.f32 0.0, %v1146
      %v1148 = vpop.f32.mrf.mxu0
      %1149 = vdwg.mxu0
      %v1150 = vadd.f32 %v977, %v1092
      %v1151 = vadd.f32 %v978, %v1094
      %v1152 = vadd.f32 %v979, %v1097
      %v1153 = vadd.f32 %v980, %v1099
      %v1154 = vadd.f32 %v981, %v1102
      %v1155 = vadd.f32 %v982, %v1104
      %v1156 = vadd.f32 %v983, %v1107
      %v1157 = vadd.f32 %v984, %v1109
      %v1158 = vadd.f32 %v985, %v1112
      %v1159 = vadd.f32 %v986, %v1114
      %v1160 = vadd.f32 %v987, %v1117
      %v1161 = vadd.f32 %v988, %v1119
      %v1162 = vadd.f32 %v989, %v1122
      %v1163 = vadd.f32 %v990, %v1124
      %v1164 = vadd.f32 %v991, %v1127
      %v1165 = vadd.f32 %v992, %v1129
      %v1166 = vadd.f32 %v993, %v1132
      %v1167 = vadd.f32 %v994, %v1134
      %v1168 = vadd.f32 %v995, %v1137
      %v1169 = vadd.f32 %v996, %v1139
      %v1170 = vadd.f32 %v997, %v1142
      %v1171 = vadd.f32 %v998, %v1144
      %v1172 = vadd.f32 %v999, %v1147
      %s1173 = scalar_lea.vmem %s1, 12
      %v1174 = vld [vmem:[%s1173] sm:$0x3]
      %v1176 = vsel %vm415, %v1174, 0
      %1178 = vmatpush.bf16.msra.mxu0 0
      %1179 = vmatpush.bf16.msra.mxu0 0
      %1180 = vmatpush.bf16.msra.mxu0 0
      %1181 = vmatpush.bf16.msra.mxu0 0
      %1182 = vmatpush.bf16.msra.mxu0 0
      %1183 = vmatpush.bf16.msra.mxu0 0
      %1184 = vmatpush.bf16.msra.mxu0 0
      %1185 = vmatpush.bf16.msra.mxu0 %v1176
      %1186 = vmatmul.bf16.gmra.mxu0 %v1047
      %v1187 = vpop.f32.mrf.mxu0
      %v1188 = vadd.f32 0.0, %v1187
      %v1189 = vpop.f32.mrf.mxu0
      %v1190 = vadd.f32 0.0, %v1189
      %1191 = vmatmul.bf16.gmra.mxu0 %v1050
      %v1192 = vpop.f32.mrf.mxu0
      %v1193 = vadd.f32 0.0, %v1192
      %v1194 = vpop.f32.mrf.mxu0
      %v1195 = vadd.f32 0.0, %v1194
      %1196 = vmatmul.bf16.gmra.mxu0 %v1053
      %v1197 = vpop.f32.mrf.mxu0
      %v1198 = vadd.f32 0.0, %v1197
      %v1199 = vpop.f32.mrf.mxu0
      %v1200 = vadd.f32 0.0, %v1199
      %1201 = vmatmul.bf16.gmra.mxu0 %v1056
      %v1202 = vpop.f32.mrf.mxu0
      %v1203 = vadd.f32 0.0, %v1202
      %v1204 = vpop.f32.mrf.mxu0
      %v1205 = vadd.f32 0.0, %v1204
      %1206 = vmatmul.bf16.gmra.mxu0 %v1059
      %v1207 = vpop.f32.mrf.mxu0
      %v1208 = vadd.f32 0.0, %v1207
      %v1209 = vpop.f32.mrf.mxu0
      %v1210 = vadd.f32 0.0, %v1209
      %1211 = vmatmul.bf16.gmra.mxu0 %v1062
      %v1212 = vpop.f32.mrf.mxu0
      %v1213 = vadd.f32 0.0, %v1212
      %v1214 = vpop.f32.mrf.mxu0
      %v1215 = vadd.f32 0.0, %v1214
      %1216 = vmatmul.bf16.gmra.mxu0 %v1065
      %v1217 = vpop.f32.mrf.mxu0
      %v1218 = vadd.f32 0.0, %v1217
      %v1219 = vpop.f32.mrf.mxu0
      %v1220 = vadd.f32 0.0, %v1219
      %1221 = vmatmul.bf16.gmra.mxu0 %v1068
      %v1222 = vpop.f32.mrf.mxu0
      %v1223 = vadd.f32 0.0, %v1222
      %v1224 = vpop.f32.mrf.mxu0
      %v1225 = vadd.f32 0.0, %v1224
      %1226 = vmatmul.bf16.gmra.mxu0 %v1071
      %v1227 = vpop.f32.mrf.mxu0
      %v1228 = vadd.f32 0.0, %v1227
      %v1229 = vpop.f32.mrf.mxu0
      %v1230 = vadd.f32 0.0, %v1229
      %1231 = vmatmul.bf16.gmra.mxu0 %v1074
      %v1232 = vpop.f32.mrf.mxu0
      %v1233 = vadd.f32 0.0, %v1232
      %v1234 = vpop.f32.mrf.mxu0
      %v1235 = vadd.f32 0.0, %v1234
      %1236 = vmatmul.bf16.gmra.mxu0 %v1077
      %v1237 = vpop.f32.mrf.mxu0
      %v1238 = vadd.f32 0.0, %v1237
      %v1239 = vpop.f32.mrf.mxu0
      %v1240 = vadd.f32 0.0, %v1239
      %1241 = vmatmul.bf16.gmra.mxu0 %v381
      %v1242 = vpop.f32.mrf.mxu0
      %v1243 = vadd.f32 0.0, %v1242
      %v1244 = vpop.f32.mrf.mxu0
      %1245 = vdwg.mxu0
      %v1246 = vadd.f32 %v1150, %v1188
      %v1247 = vadd.f32 %v1151, %v1190
      %v1248 = vadd.f32 %v1152, %v1193
      %v1249 = vadd.f32 %v1153, %v1195
      %v1250 = vadd.f32 %v1154, %v1198
      %v1251 = vadd.f32 %v1155, %v1200
      %v1252 = vadd.f32 %v1156, %v1203
      %v1253 = vadd.f32 %v1157, %v1205
      %v1254 = vadd.f32 %v1158, %v1208
      %v1255 = vadd.f32 %v1159, %v1210
      %v1256 = vadd.f32 %v1160, %v1213
      %v1257 = vadd.f32 %v1161, %v1215
      %v1258 = vadd.f32 %v1162, %v1218
      %v1259 = vadd.f32 %v1163, %v1220
      %v1260 = vadd.f32 %v1164, %v1223
      %v1261 = vadd.f32 %v1165, %v1225
      %v1262 = vadd.f32 %v1166, %v1228
      %v1263 = vadd.f32 %v1167, %v1230
      %v1264 = vadd.f32 %v1168, %v1233
      %v1265 = vadd.f32 %v1169, %v1235
      %v1266 = vadd.f32 %v1170, %v1238
      %v1267 = vadd.f32 %v1171, %v1240
      %v1268 = vadd.f32 %v1172, %v1243
      %vm1269 = vcmask 1046528
      %v1270 = vrot.slane %v238, 1
      %v1271 = vrot.slane %v239, 1
      %v1272 = vsel %vm1269, %v1270, %v1271
      %v1273 = vrot.slane %v240, 1
      %v1274 = vsel %vm1269, %v1271, %v1273
      %v1275 = vrot.slane %v241, 1
      %v1276 = vsel %vm1269, %v1273, %v1275
      %v1277 = vrot.slane %v242, 1
      %v1278 = vsel %vm1269, %v1275, %v1277
      %v1279 = vrot.slane %v243, 1
      %v1280 = vsel %vm1269, %v1277, %v1279
      %v1281 = vrot.slane %v244, 1
      %v1282 = vsel %vm1269, %v1279, %v1281
      %v1283 = vrot.slane %v245, 1
      %v1284 = vsel %vm1269, %v1281, %v1283
      %v1285 = vrot.slane %v246, 1
      %v1286 = vsel %vm1269, %v1283, %v1285
      %v1287 = vrot.slane %v760, 1
      %v1288 = vsel %vm1269, %v1285, %v1287
      %v1289 = vrot.slane %v761, 1
      %v1290 = vsel %vm1269, %v1287, %v1289
      %vm1291 = vcmask 1042432
      %v1293 = vsel %vm1291, %v1289, 0
      %s1294 = scalar_lea.vmem %s1, 14
      %v1295 = vld [vmem:[%s1294] sm:$0x3]
      %v1297 = vsel %vm380, %v1272, 0
      %v1300 = vsel %vm380, %v1274, 0
      %v1303 = vsel %vm380, %v1276, 0
      %v1306 = vsel %vm380, %v1278, 0
      %v1309 = vsel %vm380, %v1280, 0
      %v1312 = vsel %vm380, %v1282, 0
      %v1315 = vsel %vm380, %v1284, 0
      %v1318 = vsel %vm380, %v1286, 0
      %v1321 = vsel %vm380, %v1288, 0
      %v1324 = vsel %vm380, %v1290, 0
      %v1326 = vsel %vm380, %v1293, 0
      %v1329 = vsel %vm415, %v1295, 0
      %1331 = vmatpush.bf16.msra.mxu0 0
      %1332 = vmatpush.bf16.msra.mxu0 0
      %1333 = vmatpush.bf16.msra.mxu0 0
      %1334 = vmatpush.bf16.msra.mxu0 0
      %1335 = vmatpush.bf16.msra.mxu0 0
      %1336 = vmatpush.bf16.msra.mxu0 0
      %1337 = vmatpush.bf16.msra.mxu0 0
      %1338 = vmatpush.bf16.msra.mxu0 %v1329
      %1339 = vmatmul.bf16.gmra.mxu0 %v1297
      %v1340 = vpop.f32.mrf.mxu0
      %v1341 = vadd.f32 0.0, %v1340
      %v1342 = vpop.f32.mrf.mxu0
      %v1343 = vadd.f32 0.0, %v1342
      %1344 = vmatmul.bf16.gmra.mxu0 %v1300
      %v1345 = vpop.f32.mrf.mxu0
      %v1346 = vadd.f32 0.0, %v1345
      %v1347 = vpop.f32.mrf.mxu0
      %v1348 = vadd.f32 0.0, %v1347
      %1349 = vmatmul.bf16.gmra.mxu0 %v1303
      %v1350 = vpop.f32.mrf.mxu0
      %v1351 = vadd.f32 0.0, %v1350
      %v1352 = vpop.f32.mrf.mxu0
      %v1353 = vadd.f32 0.0, %v1352
      %1354 = vmatmul.bf16.gmra.mxu0 %v1306
      %v1355 = vpop.f32.mrf.mxu0
      %v1356 = vadd.f32 0.0, %v1355
      %v1357 = vpop.f32.mrf.mxu0
      %v1358 = vadd.f32 0.0, %v1357
      %1359 = vmatmul.bf16.gmra.mxu0 %v1309
      %v1360 = vpop.f32.mrf.mxu0
      %v1361 = vadd.f32 0.0, %v1360
      %v1362 = vpop.f32.mrf.mxu0
      %v1363 = vadd.f32 0.0, %v1362
      %1364 = vmatmul.bf16.gmra.mxu0 %v1312
      %v1365 = vpop.f32.mrf.mxu0
      %v1366 = vadd.f32 0.0, %v1365
      %v1367 = vpop.f32.mrf.mxu0
      %v1368 = vadd.f32 0.0, %v1367
      %1369 = vmatmul.bf16.gmra.mxu0 %v1315
      %v1370 = vpop.f32.mrf.mxu0
      %v1371 = vadd.f32 0.0, %v1370
      %v1372 = vpop.f32.mrf.mxu0
      %v1373 = vadd.f32 0.0, %v1372
      %1374 = vmatmul.bf16.gmra.mxu0 %v1318
      %v1375 = vpop.f32.mrf.mxu0
      %v1376 = vadd.f32 0.0, %v1375
      %v1377 = vpop.f32.mrf.mxu0
      %v1378 = vadd.f32 0.0, %v1377
      %1379 = vmatmul.bf16.gmra.mxu0 %v1321
      %v1380 = vpop.f32.mrf.mxu0
      %v1381 = vadd.f32 0.0, %v1380
      %v1382 = vpop.f32.mrf.mxu0
      %v1383 = vadd.f32 0.0, %v1382
      %1384 = vmatmul.bf16.gmra.mxu0 %v1324
      %v1385 = vpop.f32.mrf.mxu0
      %v1386 = vadd.f32 0.0, %v1385
      %v1387 = vpop.f32.mrf.mxu0
      %v1388 = vadd.f32 0.0, %v1387
      %1389 = vmatmul.bf16.gmra.mxu0 %v1326
      %v1390 = vpop.f32.mrf.mxu0
      %v1391 = vadd.f32 0.0, %v1390
      %v1392 = vpop.f32.mrf.mxu0
      %v1393 = vadd.f32 0.0, %v1392
      %1394 = vmatmul.bf16.gmra.mxu0 %v381
      %v1395 = vpop.f32.mrf.mxu0
      %v1396 = vadd.f32 0.0, %v1395
      %v1397 = vpop.f32.mrf.mxu0
      %1398 = vdwg.mxu0
      %v1399 = vadd.f32 %v1246, %v1341
      %v1400 = vadd.f32 %v1247, %v1343
      %v1401 = vadd.f32 %v1248, %v1346
      %v1402 = vadd.f32 %v1249, %v1348
      %v1403 = vadd.f32 %v1250, %v1351
      %v1404 = vadd.f32 %v1251, %v1353
      %v1405 = vadd.f32 %v1252, %v1356
      %v1406 = vadd.f32 %v1253, %v1358
      %v1407 = vadd.f32 %v1254, %v1361
      %v1408 = vadd.f32 %v1255, %v1363
      %v1409 = vadd.f32 %v1256, %v1366
      %v1410 = vadd.f32 %v1257, %v1368
      %v1411 = vadd.f32 %v1258, %v1371
      %v1412 = vadd.f32 %v1259, %v1373
      %v1413 = vadd.f32 %v1260, %v1376
      %v1414 = vadd.f32 %v1261, %v1378
      %v1415 = vadd.f32 %v1262, %v1381
      %v1416 = vadd.f32 %v1263, %v1383
      %v1417 = vadd.f32 %v1264, %v1386
      %v1418 = vadd.f32 %v1265, %v1388
      %v1419 = vadd.f32 %v1266, %v1391
      %v1420 = vadd.f32 %v1267, %v1393
      %v1421 = vadd.f32 %v1268, %v1396
      %vm1422 = vsmask.f32 6400
      %v1423 = vrot.slane %v258, 1
      %v1424 = vrot.slane %v261, 2
      %v1425 = vor.u32 %v1423, %v1424
      %v1426 = vrot.slane %v267, 1
      %v1427 = vrot.slane %v270, 2
      %v1428 = vor.u32 %v1426, %v1427
      %v1429 = vsel %vm1422, %v1425, %v1428
      %v1430 = vrot.slane %v276, 1
      %v1431 = vrot.slane %v279, 2
      %v1432 = vor.u32 %v1430, %v1431
      %v1433 = vsel %vm1422, %v1428, %v1432
      %v1434 = vrot.slane %v285, 1
      %v1435 = vrot.slane %v288, 2
      %v1436 = vor.u32 %v1434, %v1435
      %v1437 = vsel %vm1422, %v1432, %v1436
      %v1438 = vrot.slane %v294, 1
      %v1439 = vrot.slane %v297, 2
      %v1440 = vor.u32 %v1438, %v1439
      %v1441 = vsel %vm1422, %v1436, %v1440
      %v1442 = vrot.slane %v303, 1
      %v1443 = vrot.slane %v306, 2
      %v1444 = vor.u32 %v1442, %v1443
      %v1445 = vsel %vm1422, %v1440, %v1444
      %v1446 = vrot.slane %v312, 1
      %v1447 = vrot.slane %v315, 2
      %v1448 = vor.u32 %v1446, %v1447
      %v1449 = vsel %vm1422, %v1444, %v1448
      %v1450 = vrot.slane %v321, 1
      %v1451 = vrot.slane %v324, 2
      %v1452 = vor.u32 %v1450, %v1451
      %v1453 = vsel %vm1422, %v1448, %v1452
      %v1454 = vrot.slane %v330, 1
      %v1455 = vrot.slane %v333, 2
      %v1456 = vor.u32 %v1454, %v1455
      %v1457 = vsel %vm1422, %v1452, %v1456
      %v1458 = vrot.slane %v763, 1
      %v1459 = vrot.slane %v766, 2
      %v1460 = vor.u32 %v1458, %v1459
      %v1461 = vsel %vm1422, %v1456, %v1460
      %v1462 = vrot.slane %v771, 1
      %v1463 = vrot.slane %v774, 2
      %v1464 = vor.u32 %v1462, %v1463
      %v1465 = vsel %vm1422, %v1460, %v1464
      %vm1467 = vcmask 1042432
      %vm1468 = vsmask.f32 2304
      %vm1469 = vmand %vm1467, %vm1468
      %v1470 = vsel %vm1469, %v1464, 0
      %s1471 = scalar_lea.vmem %s1, 16
      %v1472 = vld [vmem:[%s1471] sm:$0x3]
      %v1474 = vsel %vm380, %v1429, 0
      %v1477 = vsel %vm380, %v1433, 0
      %v1480 = vsel %vm380, %v1437, 0
      %v1483 = vsel %vm380, %v1441, 0
      %v1486 = vsel %vm380, %v1445, 0
      %v1489 = vsel %vm380, %v1449, 0
      %v1492 = vsel %vm380, %v1453, 0
      %v1495 = vsel %vm380, %v1457, 0
      %v1498 = vsel %vm380, %v1461, 0
      %v1501 = vsel %vm380, %v1465, 0
      %v1504 = vsel %vm380, %v1470, 0
      %v1507 = vsel %vm415, %v1472, 0
      %1509 = vmatpush.bf16.msra.mxu0 0
      %1510 = vmatpush.bf16.msra.mxu0 0
      %1511 = vmatpush.bf16.msra.mxu0 0
      %1512 = vmatpush.bf16.msra.mxu0 0
      %1513 = vmatpush.bf16.msra.mxu0 0
      %1514 = vmatpush.bf16.msra.mxu0 0
      %1515 = vmatpush.bf16.msra.mxu0 0
      %1516 = vmatpush.bf16.msra.mxu0 %v1507
      %1517 = vmatmul.bf16.gmra.mxu0 %v1474
      %v1518 = vpop.f32.mrf.mxu0
      %v1519 = vadd.f32 0.0, %v1518
      %v1520 = vpop.f32.mrf.mxu0
      %v1521 = vadd.f32 0.0, %v1520
      %1522 = vmatmul.bf16.gmra.mxu0 %v1477
      %v1523 = vpop.f32.mrf.mxu0
      %v1524 = vadd.f32 0.0, %v1523
      %v1525 = vpop.f32.mrf.mxu0
      %v1526 = vadd.f32 0.0, %v1525
      %1527 = vmatmul.bf16.gmra.mxu0 %v1480
      %v1528 = vpop.f32.mrf.mxu0
      %v1529 = vadd.f32 0.0, %v1528
      %v1530 = vpop.f32.mrf.mxu0
      %v1531 = vadd.f32 0.0, %v1530
      %1532 = vmatmul.bf16.gmra.mxu0 %v1483
      %v1533 = vpop.f32.mrf.mxu0
      %v1534 = vadd.f32 0.0, %v1533
      %v1535 = vpop.f32.mrf.mxu0
      %v1536 = vadd.f32 0.0, %v1535
      %1537 = vmatmul.bf16.gmra.mxu0 %v1486
      %v1538 = vpop.f32.mrf.mxu0
      %v1539 = vadd.f32 0.0, %v1538
      %v1540 = vpop.f32.mrf.mxu0
      %v1541 = vadd.f32 0.0, %v1540
      %1542 = vmatmul.bf16.gmra.mxu0 %v1489
      %v1543 = vpop.f32.mrf.mxu0
      %v1544 = vadd.f32 0.0, %v1543
      %v1545 = vpop.f32.mrf.mxu0
      %v1546 = vadd.f32 0.0, %v1545
      %1547 = vmatmul.bf16.gmra.mxu0 %v1492
      %v1548 = vpop.f32.mrf.mxu0
      %v1549 = vadd.f32 0.0, %v1548
      %v1550 = vpop.f32.mrf.mxu0
      %v1551 = vadd.f32 0.0, %v1550
      %1552 = vmatmul.bf16.gmra.mxu0 %v1495
      %v1553 = vpop.f32.mrf.mxu0
      %v1554 = vadd.f32 0.0, %v1553
      %v1555 = vpop.f32.mrf.mxu0
      %v1556 = vadd.f32 0.0, %v1555
      %1557 = vmatmul.bf16.gmra.mxu0 %v1498
      %v1558 = vpop.f32.mrf.mxu0
      %v1559 = vadd.f32 0.0, %v1558
      %v1560 = vpop.f32.mrf.mxu0
      %v1561 = vadd.f32 0.0, %v1560
      %1562 = vmatmul.bf16.gmra.mxu0 %v1501
      %v1563 = vpop.f32.mrf.mxu0
      %v1564 = vadd.f32 0.0, %v1563
      %v1565 = vpop.f32.mrf.mxu0
      %v1566 = vadd.f32 0.0, %v1565
      %1567 = vmatmul.bf16.gmra.mxu0 %v1504
      %v1568 = vpop.f32.mrf.mxu0
      %v1569 = vadd.f32 0.0, %v1568
      %v1570 = vpop.f32.mrf.mxu0
      %v1571 = vadd.f32 0.0, %v1570
      %1572 = vmatmul.bf16.gmra.mxu0 %v381
      %v1573 = vpop.f32.mrf.mxu0
      %v1574 = vadd.f32 0.0, %v1573
      %v1575 = vpop.f32.mrf.mxu0
      %1576 = vdwg.mxu0
      %v1577 = vadd.f32 %v1399, %v1519
      %v1578 = vadd.f32 %v1400, %v1521
      %v1579 = vadd.f32 %v1401, %v1524
      %v1580 = vadd.f32 %v1402, %v1526
      %v1581 = vadd.f32 %v1403, %v1529
      %v1582 = vadd.f32 %v1404, %v1531
      %v1583 = vadd.f32 %v1405, %v1534
      %v1584 = vadd.f32 %v1406, %v1536
      %v1585 = vadd.f32 %v1407, %v1539
      %v1586 = vadd.f32 %v1408, %v1541
      %v1587 = vadd.f32 %v1409, %v1544
      %v1588 = vadd.f32 %v1410, %v1546
      %v1589 = vadd.f32 %v1411, %v1549
      %v1590 = vadd.f32 %v1412, %v1551
      %v1591 = vadd.f32 %v1413, %v1554
      %v1592 = vadd.f32 %v1414, %v1556
      %v1593 = vadd.f32 %v1415, %v1559
      %v1594 = vadd.f32 %v1416, %v1561
      %v1595 = vadd.f32 %v1417, %v1564
      %v1596 = vadd.f32 %v1418, %v1566
      %v1597 = vadd.f32 %v1419, %v1569
      %v1598 = vadd.f32 %v1420, %v1571
      %v1599 = vadd.f32 %v1421, %v1574
      %v1600 = vld [vmem:[%s2] sm:$0x1]
      %v1602 = vperm.slane %v1600, 0
      %v1604 = vadd.f32 %v1577, %v1602
      %v1605 = vadd.f32 %v1578, %v1602
      %v1606 = vadd.f32 %v1579, %v1602
      %v1607 = vadd.f32 %v1580, %v1602
      %v1608 = vadd.f32 %v1581, %v1602
      %v1609 = vadd.f32 %v1582, %v1602
      %v1610 = vadd.f32 %v1583, %v1602
      %v1611 = vadd.f32 %v1584, %v1602
      %v1612 = vadd.f32 %v1585, %v1602
      %v1613 = vadd.f32 %v1586, %v1602
      %v1614 = vadd.f32 %v1587, %v1602
      %v1615 = vadd.f32 %v1588, %v1602
      %v1616 = vadd.f32 %v1589, %v1602
      %v1617 = vadd.f32 %v1590, %v1602
      %v1618 = vadd.f32 %v1591, %v1602
      %v1619 = vadd.f32 %v1592, %v1602
      %v1620 = vadd.f32 %v1593, %v1602
      %v1621 = vadd.f32 %v1594, %v1602
      %v1622 = vadd.f32 %v1595, %v1602
      %v1623 = vadd.f32 %v1596, %v1602
      %v1624 = vadd.f32 %v1597, %v1602
      %v1625 = vadd.f32 %v1598, %v1602
      %v1626 = vadd.f32 %v1599, %v1602
      %v1627 = vpack.c.bf16 %v1604, %v1604
      %v1628 = vpack.c.bf16 %v1605, %v1605
      %v1629 = vpack.c.bf16 %v1606, %v1606
      %v1630 = vpack.c.bf16 %v1607, %v1607
      %v1631 = vpack.c.bf16 %v1608, %v1608
      %v1632 = vpack.c.bf16 %v1609, %v1609
      %v1633 = vpack.c.bf16 %v1610, %v1610
      %v1634 = vpack.c.bf16 %v1611, %v1611
      %v1635 = vpack.c.bf16 %v1612, %v1612
      %v1636 = vpack.c.bf16 %v1613, %v1613
      %v1637 = vpack.c.bf16 %v1614, %v1614
      %v1638 = vpack.c.bf16 %v1615, %v1615
      %v1639 = vpack.c.bf16 %v1616, %v1616
      %v1640 = vpack.c.bf16 %v1617, %v1617
      %v1641 = vpack.c.bf16 %v1618, %v1618
      %v1642 = vpack.c.bf16 %v1619, %v1619
      %v1643 = vpack.c.bf16 %v1620, %v1620
      %v1644 = vpack.c.bf16 %v1621, %v1621
      %v1645 = vpack.c.bf16 %v1622, %v1622
      %v1646 = vpack.c.bf16 %v1623, %v1623
      %v1647 = vpack.c.bf16 %v1624, %v1624
      %v1648 = vpack.c.bf16 %v1625, %v1625
      %v1649 = vpack.c.bf16 %v1626, %v1626
      %vm1650 = vcmask 60416
      %1651 = vst.msk [vmem:[%s170] sm:$0xf] %vm1650, %v1627
      %1652 = vst.msk [vmem:[%s170 + $0x4] sm:$0xf] %vm1650, %v1628
      %1653 = vst.msk [vmem:[%s170 + $0x8] sm:$0xf] %vm1650, %v1629
      %1654 = vst.msk [vmem:[%s170 + $0xc] sm:$0xf] %vm1650, %v1630
      %1655 = vst.msk [vmem:[%s170 + $0x10] sm:$0xf] %vm1650, %v1631
      %1656 = vst.msk [vmem:[%s170 + $0x14] sm:$0xf] %vm1650, %v1632
      %1657 = vst.msk [vmem:[%s170 + $0x18] sm:$0xf] %vm1650, %v1633
      %1658 = vst.msk [vmem:[%s170 + $0x1c] sm:$0xf] %vm1650, %v1634
      %1659 = vst.msk [vmem:[%s170 + $0x20] sm:$0xf] %vm1650, %v1635
      %1660 = vst.msk [vmem:[%s170 + $0x24] sm:$0xf] %vm1650, %v1636
      %1661 = vst.msk [vmem:[%s170 + $0x28] sm:$0xf] %vm1650, %v1637
      %1662 = vst.msk [vmem:[%s170 + $0x2c] sm:$0xf] %vm1650, %v1638
      %1663 = vst.msk [vmem:[%s170 + $0x30] sm:$0xf] %vm1650, %v1639
      %1664 = vst.msk [vmem:[%s170 + $0x34] sm:$0xf] %vm1650, %v1640
      %1665 = vst.msk [vmem:[%s170 + $0x38] sm:$0xf] %vm1650, %v1641
      %1666 = vst.msk [vmem:[%s170 + $0x3c] sm:$0xf] %vm1650, %v1642
      %1667 = vst.msk [vmem:[%s170 + $0x40] sm:$0xf] %vm1650, %v1643
      %1668 = vst.msk [vmem:[%s170 + $0x44] sm:$0xf] %vm1650, %v1644
      %1669 = vst.msk [vmem:[%s170 + $0x48] sm:$0xf] %vm1650, %v1645
      %1670 = vst.msk [vmem:[%s170 + $0x4c] sm:$0xf] %vm1650, %v1646
      %1671 = vst.msk [vmem:[%s170 + $0x50] sm:$0xf] %vm1650, %v1647
      %1672 = vst.msk [vmem:[%s170 + $0x54] sm:$0xf] %vm1650, %v1648
      %1673 = vst.msk [vmem:[%s170 + $0x58] sm:$0xf] %vm1650, %v1649
      %p1674 = scmp.lt.s32.totalorder %s14, 1
      %s1675 = scalar_select %p1674, %s14, 1
      %s1676 = smul.addr %s1675, 23
      %s1677 = smul.addr %s1676, 4
      %s1678 = scalar_lea.vmem %s3, %s1677
      // Predicated region
      $region33: #{_lambda_.8} parent=31 // pred_check
        %p1679 = pneg %p100
      $region34: #{_lambda_.8} parent=31 // pred_check_branch
        %1681 = sbr.rel (%p1679) target = $region36
      $region35: #{_lambda_.8} parent=31 // pred_region
        _
      $region36: #{_lambda_.8} parent=31 // pred_fallthru
        _
    $region32: #{_lambda_.8} parent=5 // pred_fallthru
      _
    %p1682 = scmp.le.s32.totalorder 2, %s9
    // Predicated region
    $region37: #{_lambda_.8} parent=5 // pred_check
      %p1683 = pneg %p1682
    $region38: #{_lambda_.8} parent=5 // pred_check_branch
      %1685 = sbr.rel (%p1683) target = $region40
    $region39: #{_lambda_.8} parent=5 // pred_region
      %s1686 = ssub.s32 %s9, 2
      // Predicated region
      $region41: #{_lambda_.8} parent=39 // pred_check
        %p1687 = pneg %p106
      $region42: #{_lambda_.8} parent=39 // pred_check_branch
        %1689 = sbr.rel (%p1687) target = $region44
      $region43: #{_lambda_.8} parent=39 // pred_region
        %p1690 = scmp.lt.s32.totalorder %s15, 1
        %s1691 = scalar_select %p1690, %s15, 1
        %s1692 = smul.addr %s1691, 23
        %s1693 = smul.addr %s1692, 4
        %s1694 = scalar_lea.vmem %s3, %s1693
      $region44: #{_lambda_.8} parent=39 // pred_fallthru
        _
    $region40: #{_lambda_.8} parent=5 // pred_fallthru
      _
  $region6: #{_lambda_.8} parent=0 // loop_footer
    %s13 = sadd.s32 1, %s9
  $region7: #{_lambda_.8} parent=0 // loop_footer_branch
    %8 = sbr.rel target = $region3
  $region8: #{_lambda_.8} parent=0 // loop_exit
    _

// kernel: _lambda_.9
$region0: #{_lambda_.9}
  #allocation0 [shape = 'u32[]', space=smem, size = 0x4, offset = 0x4, fixed_abs, tag = 'smem constant byte address 0x4 - core index']
  #allocation1 [shape = 'u32[72,128]{1,0:T(1,128)}', space=vmem, size = 0x9000, scoped, tag = 'internal scratch']
  %s0 = inlined_call_operand.vmem [shape: bf16[8,8,32], index: 0, kind: input, shape index: {}]
  %s1 = inlined_call_operand.vmem [shape: bf16[12,8], index: 1, kind: input, shape index: {}]
  %s2 = inlined_call_operand.vmem [shape: bf16[32,40], index: 2, kind: input, shape index: {}]
  %s3 = inlined_call_operand.vmem [shape: f32[8,12,40], index: 3, kind: output, shape index: {}]
  %s4 = sld [smem:[#allocation0]]
  $region45: #{_lambda_.9} parent=0
    _
  %s6 = ssub.s32 1, %s4
  %s7 = scalar_select 0, %s6, %s4
  loop: start=0, step=1, limit=10
  $region2: #{_lambda_.9} parent=0 // loop_pre_header
    _
  $region3: #{_lambda_.9} parent=0 // loop_header
    %s9 = sphi 0, %s13
    %p10 = scmp.ge.s32.totalorder %s9, 10
    %s19 = sphi 0, %s21
    %s22 = sphi 0, %s19
    %s23 = sphi 0, %s22
    %s39 = sphi 0, %s23
    %s43 = sphi 0, %s43
    %s45 = sphi 0, %s43
    %s46 = sphi 0, %s45
    %s60 = sphi 0, %s46
    %s64 = sphi 0, %s64
    %s66 = sphi 0, %s64
    %s67 = sphi 0, %s66
    %s81 = sphi 0, %s67
    %s87 = sphi 0, %s89
    %s90 = sphi 0, %s87
    %s91 = sphi 0, %s90
    %s107 = sphi 0, %s91
  $region4: #{_lambda_.9} parent=0 // loop_header_branch
    %12 = sbr.rel (%p10) target = $region8
  $region5: #{_lambda_.9} parent=0 // loop_body
    %s14 = ssub.s32 %s9, 1
    %s15 = ssub.s32 %s9, 2
    %s16 = sadd.s32 %s9, 1
    %s17 = ssub.s32 %s9, %s16
    %p18 = scmp.eq.s32.totalorder %s17, 0
    %s20 = sadd.s32 %s19, 1
    %s21 = scalar_select %p18, %s19, %s20
    %p24 = pneg %p18
    %p25 = scmp.eq.s32.totalorder %s9, 7
    %p26 = por %p24, %p25
    %p27 = scmp.ne.s32.totalorder %s19, %s22
    %p28 = scmp.eq.s32.totalorder %s9, 0
    %p29 = por %p27, %p28
    %p30 = scmp.ne.s32.totalorder %s19, %s22
    %p31 = scmp.eq.s32.totalorder %s14, 7
    %p32 = por %p30, %p31
    %p33 = scmp.ne.s32.totalorder %s22, %s23
    %p34 = scmp.eq.s32.totalorder %s14, 0
    %p35 = por %p33, %p34
    %p36 = scmp.ne.s32.totalorder %s22, %s23
    %p37 = scmp.eq.s32.totalorder %s15, 7
    %p38 = por %p36, %p37
    %p40 = scmp.ne.s32.totalorder %s23, %s39
    %p41 = scmp.eq.s32.totalorder %s15, 0
    %p42 = por %p40, %p41
    %s44 = sadd.s32 %s43, 1
    %p47 = scmp.eq.s32.totalorder %s9, 7
    %p48 = scmp.ne.s32.totalorder %s43, %s45
    %p49 = scmp.eq.s32.totalorder %s9, 0
    %p50 = por %p48, %p49
    %p51 = scmp.ne.s32.totalorder %s43, %s45
    %p52 = scmp.eq.s32.totalorder %s14, 7
    %p53 = por %p51, %p52
    %p54 = scmp.ne.s32.totalorder %s45, %s46
    %p55 = scmp.eq.s32.totalorder %s14, 0
    %p56 = por %p54, %p55
    %p57 = scmp.ne.s32.totalorder %s45, %s46
    %p58 = scmp.eq.s32.totalorder %s15, 7
    %p59 = por %p57, %p58
    %p61 = scmp.ne.s32.totalorder %s46, %s60
    %p62 = scmp.eq.s32.totalorder %s15, 0
    %p63 = por %p61, %p62
    %s65 = sadd.s32 %s64, 1
    %p68 = scmp.eq.s32.totalorder %s9, 7
    %p69 = scmp.ne.s32.totalorder %s64, %s66
    %p70 = scmp.eq.s32.totalorder %s9, 0
    %p71 = por %p69, %p70
    %p72 = scmp.ne.s32.totalorder %s64, %s66
    %p73 = scmp.eq.s32.totalorder %s14, 7
    %p74 = por %p72, %p73
    %p75 = scmp.ne.s32.totalorder %s66, %s67
    %p76 = scmp.eq.s32.totalorder %s14, 0
    %p77 = por %p75, %p76
    %p78 = scmp.ne.s32.totalorder %s66, %s67
    %p79 = scmp.eq.s32.totalorder %s15, 7
    %p80 = por %p78, %p79
    %p82 = scmp.ne.s32.totalorder %s67, %s81
    %p83 = scmp.eq.s32.totalorder %s15, 0
    %p84 = por %p82, %p83
    %s85 = ssub.s32 %s9, %s16
    %p86 = scmp.eq.s32.totalorder %s85, 0
    %s88 = sadd.s32 %s87, 1
    %s89 = scalar_select %p86, %s87, %s88
    %p92 = pneg %p86
    %p93 = scmp.eq.s32.totalorder %s9, 7
    %p94 = por %p92, %p93
    %p95 = scmp.ne.s32.totalorder %s87, %s90
    %p96 = scmp.eq.s32.totalorder %s9, 0
    %p97 = por %p95, %p96
    %p98 = scmp.ne.s32.totalorder %s87, %s90
    %p99 = scmp.eq.s32.totalorder %s14, 7
    %p100 = por %p98, %p99
    %p101 = scmp.ne.s32.totalorder %s90, %s91
    %p102 = scmp.eq.s32.totalorder %s14, 0
    %p103 = por %p101, %p102
    %p104 = scmp.ne.s32.totalorder %s90, %s91
    %p105 = scmp.eq.s32.totalorder %s15, 7
    %p106 = por %p104, %p105
    %p108 = scmp.ne.s32.totalorder %s91, %s107
    %p109 = scmp.eq.s32.totalorder %s15, 0
    %p110 = por %p108, %p109
    %p111 = scmp.le.s32.totalorder 1, %s9
    %p112 = scmp.lt.s32.totalorder %s9, 9
    %p113 = pnand %p111, %p112
    %p114 = pneg %p113
    // Predicated region
    $region9: #{_lambda_.9} parent=5 // pred_check
      _
    $region10: #{_lambda_.9} parent=5 // pred_check_branch
      %116 = sbr.rel (%p113) target = $region12
    $region11: #{_lambda_.9} parent=5 // pred_region
      %s117 = ssub.s32 %s9, 1
      // Predicated region
      $region13: #{_lambda_.9} parent=11 // pred_check
        %p118 = pneg %p56
      $region14: #{_lambda_.9} parent=11 // pred_check_branch
        %120 = sbr.rel (%p118) target = $region16
      $region15: #{_lambda_.9} parent=11 // pred_region
        _
      $region16: #{_lambda_.9} parent=11 // pred_fallthru
        _
      // Predicated region
      $region17: #{_lambda_.9} parent=11 // pred_check
        %p121 = pneg %p77
      $region18: #{_lambda_.9} parent=11 // pred_check_branch
        %123 = sbr.rel (%p121) target = $region20
      $region19: #{_lambda_.9} parent=11 // pred_region
        _
      $region20: #{_lambda_.9} parent=11 // pred_fallthru
        _
    $region12: #{_lambda_.9} parent=5 // pred_fallthru
      _
    %p124 = scmp.lt.s32.totalorder %s9, 8
    // Predicated region
    $region21: #{_lambda_.9} parent=5 // pred_check
      %p125 = pneg %p124
    $region22: #{_lambda_.9} parent=5 // pred_check_branch
      %127 = sbr.rel (%p125) target = $region24
    $region23: #{_lambda_.9} parent=5 // pred_region
      // Predicated region
      $region25: #{_lambda_.9} parent=23 // pred_check
        %p128 = pneg %p29
      $region26: #{_lambda_.9} parent=23 // pred_check_branch
        %130 = sbr.rel (%p128) target = $region28
      $region27: #{_lambda_.9} parent=23 // pred_region
        %p131 = scmp.lt.s32.totalorder %s9, 7
        %s132 = scalar_select %p131, %s9, 7
        %s133 = smul.addr %s132, 4
        %s134 = scalar_lea.vmem %s0, %s133
      $region28: #{_lambda_.9} parent=23 // pred_fallthru
        _
    $region24: #{_lambda_.9} parent=5 // pred_fallthru
      _
    %p135 = scmp.le.s32.totalorder 1, %s9
    %p136 = scmp.lt.s32.totalorder %s9, 9
    %p137 = pnand %p135, %p136
    %p138 = pneg %p137
    // Predicated region
    $region29: #{_lambda_.9} parent=5 // pred_check
      _
    $region30: #{_lambda_.9} parent=5 // pred_check_branch
      %140 = sbr.rel (%p137) target = $region32
    $region31: #{_lambda_.9} parent=5 // pred_region
      %s141 = ssub.s32 %s9, 1
      %p142 = scmp.lt.s32.totalorder %s14, 7
      %s143 = scalar_select %p142, %s14, 7
      %s144 = smul.addr %s143, 4
      %s145 = scalar_lea.vmem %s0, %s144
      %p146 = pneg %p35
      %p147 = pneg %p32
      %p148 = pneg %p56
      %p149 = pneg %p53
      %p150 = pneg %p77
      %p151 = pneg %p74
      %p152 = pneg %p103
      %p153 = pneg %p100
      %p154 = scmp.lt.s32.totalorder %s14, 7
      %s155 = scalar_select %p154, %s14, 7
      %s156 = smul.addr %s155, 2
      %s157 = smul.addr %s156, 8
      %s158 = scalar_lea.vmem %s3, %s157
      %p159 = scmp.lt.s32.totalorder %s14, 7
      %s160 = scalar_select %p159, %s14, 7
      %s161 = smul.addr %s160, 4
      %s162 = scalar_lea.vmem %s0, %s161
      %p163 = scmp.lt.s32.totalorder %s14, 7
      %s164 = scalar_select %p163, %s14, 7
      %s165 = smul.addr %s164, 2
      %s166 = smul.addr %s165, 8
      %s167 = scalar_lea.vmem %s3, %s166
      %v169 = vld [vmem:[%s1] sm:$0xf]
      %v170 = vld [vmem:[%s1 + $0x4] sm:$0x3]
      %v171 = vld [vmem:[%s162] sm:$0xf]
      %v174 = vunpack.c.l.b16 %v169
      %v175 = vunpack.c.l.b16 %v170
      %v176 = vpack.c.b16 %v175, %v174
      %vm177 = vcmask 64512
      %v179 = vsel %vm177, %v176, 0
      %vm181 = vcmask 1043456
      %v183 = vsel %vm181, %v171, 0
      %185 = vmatpush.bf16.msra.mxu0 0
      %186 = vmatpush.bf16.msra.mxu0 0
      %187 = vmatpush.bf16.msra.mxu0 0
      %188 = vmatpush.bf16.msra.mxu0 0
      %189 = vmatpush.bf16.msra.mxu0 0
      %190 = vmatpush.bf16.msra.mxu0 0
      %191 = vmatpush.bf16.msra.mxu0 0
      %192 = vmatpush.bf16.msra.mxu0 %v183
      %193 = vmatmul.bf16.gmra.mxu0 %v179
      %v194 = vpop.f32.mrf.mxu0
      %v195 = vadd.f32 0.0, %v194
      %v196 = vpop.f32.mrf.mxu0
      %v197 = vadd.f32 0.0, %v196
      %198 = vdwg.mxu0
      %v199 = vpack.c.bf16 %v197, %v195
      %v200 = vld [vmem:[%s2] sm:$0xf]
      %v201 = vld [vmem:[%s2 + $0x4] sm:$0xf]
      %v202 = vld [vmem:[%s2 + $0x8] sm:$0xf]
      %v203 = vld [vmem:[%s2 + $0xc] sm:$0xf]
      %v208 = vunpack.c.l.b16 %v200
      %v209 = vunpack.c.l.b16 %v201
      %v210 = vunpack.c.l.b16 %v202
      %v211 = vunpack.c.l.b16 %v203
      %v212 = vpack.c.b16 %v209, %v208
      %v213 = vpack.c.b16 %v211, %v210
      %vm216 = vcmask 261120
      %v218 = vsel %vm216, %v199, 0
      %220 = vmatpush.bf16.msra.mxu0 0
      %221 = vmatpush.bf16.msra.mxu0 0
      %222 = vmatpush.bf16.msra.mxu0 0
      %223 = vmatpush.bf16.msra.mxu0 0
      %224 = vmatpush.bf16.msra.mxu0 0
      %225 = vmatpush.bf16.msra.mxu0 0
      %226 = vmatpush.bf16.msra.mxu0 %v213
      %227 = vmatpush.bf16.msra.mxu0 %v212
      %228 = vmatmul.bf16.gmra.mxu0 %v218
      %v229 = vpop.f32.mrf.mxu0
      %v230 = vadd.f32 0.0, %v229
      %v231 = vpop.f32.mrf.mxu0
      %v232 = vadd.f32 0.0, %v231
      %233 = vdwg.mxu0
      %vm234 = vcmask 326656
      %235 = vst.msk [vmem:[%s167] sm:$0xff] %vm234, %v230
      %vm236 = vcmask 322560
      %237 = vst.msk [vmem:[%s167 + $0x8] sm:$0xf] %vm236, %v232
      %p238 = scmp.lt.s32.totalorder %s14, 7
      %s239 = scalar_select %p238, %s14, 7
      %s240 = smul.addr %s239, 2
      %s241 = smul.addr %s240, 8
      %s242 = scalar_lea.vmem %s3, %s241
      // Predicated region
      $region33: #{_lambda_.9} parent=31 // pred_check
        %p243 = pneg %p100
      $region34: #{_lambda_.9} parent=31 // pred_check_branch
        %245 = sbr.rel (%p243) target = $region36
      $region35: #{_lambda_.9} parent=31 // pred_region
        _
      $region36: #{_lambda_.9} parent=31 // pred_fallthru
        _
    $region32: #{_lambda_.9} parent=5 // pred_fallthru
      _
    %p246 = scmp.le.s32.totalorder 2, %s9
    // Predicated region
    $region37: #{_lambda_.9} parent=5 // pred_check
      %p247 = pneg %p246
    $region38: #{_lambda_.9} parent=5 // pred_check_branch
      %249 = sbr.rel (%p247) target = $region40
    $region39: #{_lambda_.9} parent=5 // pred_region
      %s250 = ssub.s32 %s9, 2
      // Predicated region
      $region41: #{_lambda_.9} parent=39 // pred_check
        %p251 = pneg %p106
      $region42: #{_lambda_.9} parent=39 // pred_check_branch
        %253 = sbr.rel (%p251) target = $region44
      $region43: #{_lambda_.9} parent=39 // pred_region
        %p254 = scmp.lt.s32.totalorder %s15, 7
        %s255 = scalar_select %p254, %s15, 7
        %s256 = smul.addr %s255, 2
        %s257 = smul.addr %s256, 8
        %s258 = scalar_lea.vmem %s3, %s257
      $region44: #{_lambda_.9} parent=39 // pred_fallthru
        _
    $region40: #{_lambda_.9} parent=5 // pred_fallthru
      _
  $region6: #{_lambda_.9} parent=0 // loop_footer
    %s13 = sadd.s32 1, %s9
  $region7: #{_lambda_.9} parent=0 // loop_footer_branch
    %8 = sbr.rel target = $region3
  $region8: #{_lambda_.9} parent=0 // loop_exit
    _

// kernel: _lambda_.7
$region0: #{_lambda_.7}
  #allocation0 [shape = 'u32[]', space=smem, size = 0x4, offset = 0x4, fixed_abs, tag = 'smem constant byte address 0x4 - core index']
  #allocation1 [shape = 'u32[72,128]{1,0:T(1,128)}', space=vmem, size = 0x9000, scoped, tag = 'internal scratch']
  %s0 = inlined_call_operand.vmem [shape: bf16[2,104,32], index: 0, kind: input, shape index: {}]
  %s1 = inlined_call_operand.vmem [shape: bf16[9,32,8], index: 1, kind: input, shape index: {}]
  %s2 = inlined_call_operand.vmem [shape: f32[1,8], index: 2, kind: input, shape index: {}]
  %s3 = inlined_call_operand.vmem [shape: bf16[2,104,8], index: 3, kind: output, shape index: {}]
  %s4 = sld [smem:[#allocation0]]
  $region45: #{_lambda_.7} parent=0
    _
  %s6 = ssub.s32 1, %s4
  %s7 = scalar_select 0, %s6, %s4
  loop: start=0, step=1, limit=4
  $region2: #{_lambda_.7} parent=0 // loop_pre_header
    _
  $region3: #{_lambda_.7} parent=0 // loop_header
    %s9 = sphi 0, %s13
    %p10 = scmp.ge.s32.totalorder %s9, 4
    %s19 = sphi 0, %s21
    %s22 = sphi 0, %s19
    %s23 = sphi 0, %s22
    %s39 = sphi 0, %s23
    %s43 = sphi 0, %s43
    %s45 = sphi 0, %s43
    %s46 = sphi 0, %s45
    %s60 = sphi 0, %s46
    %s64 = sphi 0, %s64
    %s66 = sphi 0, %s64
    %s67 = sphi 0, %s66
    %s81 = sphi 0, %s67
    %s87 = sphi 0, %s89
    %s90 = sphi 0, %s87
    %s91 = sphi 0, %s90
    %s107 = sphi 0, %s91
  $region4: #{_lambda_.7} parent=0 // loop_header_branch
    %12 = sbr.rel (%p10) target = $region8
  $region5: #{_lambda_.7} parent=0 // loop_body
    %s14 = ssub.s32 %s9, 1
    %s15 = ssub.s32 %s9, 2
    %s16 = sadd.s32 %s9, 1
    %s17 = ssub.s32 %s9, %s16
    %p18 = scmp.eq.s32.totalorder %s17, 0
    %s20 = sadd.s32 %s19, 1
    %s21 = scalar_select %p18, %s19, %s20
    %p24 = pneg %p18
    %p25 = scmp.eq.s32.totalorder %s9, 1
    %p26 = por %p24, %p25
    %p27 = scmp.ne.s32.totalorder %s19, %s22
    %p28 = scmp.eq.s32.totalorder %s9, 0
    %p29 = por %p27, %p28
    %p30 = scmp.ne.s32.totalorder %s19, %s22
    %p31 = scmp.eq.s32.totalorder %s14, 1
    %p32 = por %p30, %p31
    %p33 = scmp.ne.s32.totalorder %s22, %s23
    %p34 = scmp.eq.s32.totalorder %s14, 0
    %p35 = por %p33, %p34
    %p36 = scmp.ne.s32.totalorder %s22, %s23
    %p37 = scmp.eq.s32.totalorder %s15, 1
    %p38 = por %p36, %p37
    %p40 = scmp.ne.s32.totalorder %s23, %s39
    %p41 = scmp.eq.s32.totalorder %s15, 0
    %p42 = por %p40, %p41
    %s44 = sadd.s32 %s43, 1
    %p47 = scmp.eq.s32.totalorder %s9, 1
    %p48 = scmp.ne.s32.totalorder %s43, %s45
    %p49 = scmp.eq.s32.totalorder %s9, 0
    %p50 = por %p48, %p49
    %p51 = scmp.ne.s32.totalorder %s43, %s45
    %p52 = scmp.eq.s32.totalorder %s14, 1
    %p53 = por %p51, %p52
    %p54 = scmp.ne.s32.totalorder %s45, %s46
    %p55 = scmp.eq.s32.totalorder %s14, 0
    %p56 = por %p54, %p55
    %p57 = scmp.ne.s32.totalorder %s45, %s46
    %p58 = scmp.eq.s32.totalorder %s15, 1
    %p59 = por %p57, %p58
    %p61 = scmp.ne.s32.totalorder %s46, %s60
    %p62 = scmp.eq.s32.totalorder %s15, 0
    %p63 = por %p61, %p62
    %s65 = sadd.s32 %s64, 1
    %p68 = scmp.eq.s32.totalorder %s9, 1
    %p69 = scmp.ne.s32.totalorder %s64, %s66
    %p70 = scmp.eq.s32.totalorder %s9, 0
    %p71 = por %p69, %p70
    %p72 = scmp.ne.s32.totalorder %s64, %s66
    %p73 = scmp.eq.s32.totalorder %s14, 1
    %p74 = por %p72, %p73
    %p75 = scmp.ne.s32.totalorder %s66, %s67
    %p76 = scmp.eq.s32.totalorder %s14, 0
    %p77 = por %p75, %p76
    %p78 = scmp.ne.s32.totalorder %s66, %s67
    %p79 = scmp.eq.s32.totalorder %s15, 1
    %p80 = por %p78, %p79
    %p82 = scmp.ne.s32.totalorder %s67, %s81
    %p83 = scmp.eq.s32.totalorder %s15, 0
    %p84 = por %p82, %p83
    %s85 = ssub.s32 %s9, %s16
    %p86 = scmp.eq.s32.totalorder %s85, 0
    %s88 = sadd.s32 %s87, 1
    %s89 = scalar_select %p86, %s87, %s88
    %p92 = pneg %p86
    %p93 = scmp.eq.s32.totalorder %s9, 1
    %p94 = por %p92, %p93
    %p95 = scmp.ne.s32.totalorder %s87, %s90
    %p96 = scmp.eq.s32.totalorder %s9, 0
    %p97 = por %p95, %p96
    %p98 = scmp.ne.s32.totalorder %s87, %s90
    %p99 = scmp.eq.s32.totalorder %s14, 1
    %p100 = por %p98, %p99
    %p101 = scmp.ne.s32.totalorder %s90, %s91
    %p102 = scmp.eq.s32.totalorder %s14, 0
    %p103 = por %p101, %p102
    %p104 = scmp.ne.s32.totalorder %s90, %s91
    %p105 = scmp.eq.s32.totalorder %s15, 1
    %p106 = por %p104, %p105
    %p108 = scmp.ne.s32.totalorder %s91, %s107
    %p109 = scmp.eq.s32.totalorder %s15, 0
    %p110 = por %p108, %p109
    %p111 = scmp.le.s32.totalorder 1, %s9
    %p112 = scmp.lt.s32.totalorder %s9, 3
    %p113 = pnand %p111, %p112
    %p114 = pneg %p113
    // Predicated region
    $region9: #{_lambda_.7} parent=5 // pred_check
      _
    $region10: #{_lambda_.7} parent=5 // pred_check_branch
      %116 = sbr.rel (%p113) target = $region12
    $region11: #{_lambda_.7} parent=5 // pred_region
      %s117 = ssub.s32 %s9, 1
      // Predicated region
      $region13: #{_lambda_.7} parent=11 // pred_check
        %p118 = pneg %p56
      $region14: #{_lambda_.7} parent=11 // pred_check_branch
        %120 = sbr.rel (%p118) target = $region16
      $region15: #{_lambda_.7} parent=11 // pred_region
        _
      $region16: #{_lambda_.7} parent=11 // pred_fallthru
        _
      // Predicated region
      $region17: #{_lambda_.7} parent=11 // pred_check
        %p121 = pneg %p77
      $region18: #{_lambda_.7} parent=11 // pred_check_branch
        %123 = sbr.rel (%p121) target = $region20
      $region19: #{_lambda_.7} parent=11 // pred_region
        _
      $region20: #{_lambda_.7} parent=11 // pred_fallthru
        _
    $region12: #{_lambda_.7} parent=5 // pred_fallthru
      _
    %p124 = scmp.lt.s32.totalorder %s9, 2
    // Predicated region
    $region21: #{_lambda_.7} parent=5 // pred_check
      %p125 = pneg %p124
    $region22: #{_lambda_.7} parent=5 // pred_check_branch
      %127 = sbr.rel (%p125) target = $region24
    $region23: #{_lambda_.7} parent=5 // pred_region
      // Predicated region
      $region25: #{_lambda_.7} parent=23 // pred_check
        %p128 = pneg %p29
      $region26: #{_lambda_.7} parent=23 // pred_check_branch
        %130 = sbr.rel (%p128) target = $region28
      $region27: #{_lambda_.7} parent=23 // pred_region
        %p131 = scmp.lt.s32.totalorder %s9, 1
        %s132 = scalar_select %p131, %s9, 1
        %s133 = smul.addr %s132, 13
        %s134 = smul.addr %s133, 4
        %s135 = scalar_lea.vmem %s0, %s134
      $region28: #{_lambda_.7} parent=23 // pred_fallthru
        _
    $region24: #{_lambda_.7} parent=5 // pred_fallthru
      _
    %p136 = scmp.le.s32.totalorder 1, %s9
    %p137 = scmp.lt.s32.totalorder %s9, 3
    %p138 = pnand %p136, %p137
    %p139 = pneg %p138
    // Predicated region
    $region29: #{_lambda_.7} parent=5 // pred_check
      _
    $region30: #{_lambda_.7} parent=5 // pred_check_branch
      %141 = sbr.rel (%p138) target = $region32
    $region31: #{_lambda_.7} parent=5 // pred_region
      %s142 = ssub.s32 %s9, 1
      %p143 = scmp.lt.s32.totalorder %s14, 1
      %s144 = scalar_select %p143, %s14, 1
      %s145 = smul.addr %s144, 13
      %s146 = smul.addr %s145, 4
      %s147 = scalar_lea.vmem %s0, %s146
      %p148 = pneg %p35
      %p149 = pneg %p32
      %p150 = pneg %p56
      %p151 = pneg %p53
      %p152 = pneg %p77
      %p153 = pneg %p74
      %p154 = pneg %p103
      %p155 = pneg %p100
      %p156 = scmp.lt.s32.totalorder %s14, 1
      %s157 = scalar_select %p156, %s14, 1
      %s158 = smul.addr %s157, 13
      %s159 = smul.addr %s158, 4
      %s160 = scalar_lea.vmem %s3, %s159
      %p161 = scmp.lt.s32.totalorder %s14, 1
      %s162 = scalar_select %p161, %s14, 1
      %s163 = smul.addr %s162, 13
      %s164 = smul.addr %s163, 4
      %s165 = scalar_lea.vmem %s0, %s164
      %p166 = scmp.lt.s32.totalorder %s14, 1
      %s167 = scalar_select %p166, %s14, 1
      %s168 = smul.addr %s167, 13
      %s169 = smul.addr %s168, 4
      %s170 = scalar_lea.vmem %s3, %s169
      %v172 = vld [vmem:[%s165] sm:$0xf]
      %v173 = vld [vmem:[%s165 + $0x4] sm:$0xf]
      %v174 = vld [vmem:[%s165 + $0x8] sm:$0xf]
      %v175 = vld [vmem:[%s165 + $0xc] sm:$0xf]
      %v176 = vld [vmem:[%s165 + $0x10] sm:$0xf]
      %v177 = vld [vmem:[%s165 + $0x14] sm:$0xf]
      %v178 = vld [vmem:[%s165 + $0x18] sm:$0xf]
      %v179 = vld [vmem:[%s165 + $0x1c] sm:$0xf]
      %v180 = vld [vmem:[%s165 + $0x20] sm:$0xf]
      %v181 = vld [vmem:[%s165 + $0x24] sm:$0xf]
      %v182 = vld [vmem:[%s165 + $0x28] sm:$0xf]
      %v183 = vld [vmem:[%s165 + $0x2c] sm:$0xf]
      %v184 = vld [vmem:[%s165 + $0x30] sm:$0xf]
      %v197 = vunpack.c.l.b16 %v172
      %v198 = vunpack.c.l.b16 %v173
      %v199 = vunpack.c.l.b16 %v174
      %v200 = vunpack.c.l.b16 %v175
      %v201 = vunpack.c.l.b16 %v176
      %v202 = vunpack.c.l.b16 %v177
      %v203 = vunpack.c.l.b16 %v178
      %v204 = vunpack.c.l.b16 %v179
      %v205 = vunpack.c.l.b16 %v180
      %v206 = vunpack.c.l.b16 %v181
      %v207 = vunpack.c.l.b16 %v182
      %v208 = vunpack.c.l.b16 %v183
      %v209 = vpack.c.b16 %v198, %v197
      %v210 = vpack.c.b16 %v200, %v199
      %v211 = vpack.c.b16 %v202, %v201
      %v212 = vpack.c.b16 %v204, %v203
      %v213 = vpack.c.b16 %v206, %v205
      %v214 = vpack.c.b16 %v208, %v207
      %vm215 = vsmask.f32 5376
      %v217 = vshrl.u32 %v209, 16
      %v219 = vrot.slane %v217, 2
      %v220 = vshll.u32 %v209, 16
      %v222 = vrot.slane %v220, 3
      %v223 = vor.u32 %v219, %v222
      %v225 = vshrl.u32 %v210, 16
      %v227 = vrot.slane %v225, 2
      %v228 = vshll.u32 %v210, 16
      %v230 = vrot.slane %v228, 3
      %v231 = vor.u32 %v227, %v230
      %v232 = vsel %vm215, %v223, %v231
      %v234 = vshrl.u32 %v211, 16
      %v236 = vrot.slane %v234, 2
      %v237 = vshll.u32 %v211, 16
      %v239 = vrot.slane %v237, 3
      %v240 = vor.u32 %v236, %v239
      %v241 = vsel %vm215, %v231, %v240
      %v243 = vshrl.u32 %v212, 16
      %v245 = vrot.slane %v243, 2
      %v246 = vshll.u32 %v212, 16
      %v248 = vrot.slane %v246, 3
      %v249 = vor.u32 %v245, %v248
      %v250 = vsel %vm215, %v240, %v249
      %v252 = vshrl.u32 %v213, 16
      %v254 = vrot.slane %v252, 2
      %v255 = vshll.u32 %v213, 16
      %v257 = vrot.slane %v255, 3
      %v258 = vor.u32 %v254, %v257
      %v259 = vsel %vm215, %v249, %v258
      %v261 = vshrl.u32 %v214, 16
      %v263 = vrot.slane %v261, 2
      %v264 = vshll.u32 %v214, 16
      %v266 = vrot.slane %v264, 3
      %v267 = vor.u32 %v263, %v266
      %v268 = vsel %vm215, %v258, %v267
      %vm270 = vcmask 1045504
      %vm271 = vmand %vm270, %vm215
      %v272 = vsel %vm271, 0, %v223
      %v273 = vld [vmem:[%s1] sm:$0xf]
      %v274 = vld [vmem:[%s1 + $0x4] sm:$0xf]
      %v275 = vld [vmem:[%s1 + $0x8] sm:$0xf]
      %v276 = vld [vmem:[%s1 + $0xc] sm:$0xf]
      %vm277 = vcmask 1044480
      %v278 = vrot.slane %v209, 3
      %v279 = vrot.slane %v210, 3
      %v280 = vsel %vm277, %v278, %v279
      %v281 = vrot.slane %v211, 3
      %v282 = vsel %vm277, %v279, %v281
      %v283 = vrot.slane %v212, 3
      %v284 = vsel %vm277, %v281, %v283
      %v285 = vrot.slane %v213, 3
      %v286 = vsel %vm277, %v283, %v285
      %v287 = vrot.slane %v214, 3
      %v288 = vsel %vm277, %v285, %v287
      %vm289 = vcmask 1044480
      %v292 = vsel %vm289, 0, %v278
      %s293 = scalar_lea.vmem %s1, 16
      %v294 = vld [vmem:[%s293] sm:$0xf]
      %v295 = vld [vmem:[%s293 + $0x4] sm:$0xf]
      %v296 = vld [vmem:[%s293 + $0x8] sm:$0xf]
      %v297 = vld [vmem:[%s293 + $0xc] sm:$0xf]
      %v302 = vunpack.c.l.b16 %v294
      %v303 = vunpack.c.l.b16 %v295
      %v304 = vunpack.c.l.b16 %v296
      %v305 = vunpack.c.l.b16 %v297
      %v306 = vpack.c.b16 %v303, %v302
      %v307 = vpack.c.b16 %v305, %v304
      %vm310 = vcmask 261120
      %v311 = vsel %vm310, %v292, 0
      %v314 = vsel %vm310, %v280, 0
      %v317 = vsel %vm310, %v282, 0
      %v320 = vsel %vm310, %v284, 0
      %v323 = vsel %vm310, %v286, 0
      %v326 = vsel %vm310, %v288, 0
      %v329 = vsel %vm310, %v287, 0
      %331 = vmatpush.bf16.msra.mxu0 0
      %332 = vmatpush.bf16.msra.mxu0 0
      %333 = vmatpush.bf16.msra.mxu0 0
      %334 = vmatpush.bf16.msra.mxu0 0
      %335 = vmatpush.bf16.msra.mxu0 0
      %336 = vmatpush.bf16.msra.mxu0 0
      %337 = vmatpush.bf16.msra.mxu0 %v307
      %338 = vmatpush.bf16.msra.mxu0 %v306
      %339 = vmatmul.bf16.gmra.mxu0 %v311
      %v340 = vpop.f32.mrf.mxu0
      %v341 = vadd.f32 0.0, %v340
      %v342 = vpop.f32.mrf.mxu0
      %v343 = vadd.f32 0.0, %v342
      %344 = vmatmul.bf16.gmra.mxu0 %v314
      %v345 = vpop.f32.mrf.mxu0
      %v346 = vadd.f32 0.0, %v345
      %v347 = vpop.f32.mrf.mxu0
      %v348 = vadd.f32 0.0, %v347
      %349 = vmatmul.bf16.gmra.mxu0 %v317
      %v350 = vpop.f32.mrf.mxu0
      %v351 = vadd.f32 0.0, %v350
      %v352 = vpop.f32.mrf.mxu0
      %v353 = vadd.f32 0.0, %v352
      %354 = vmatmul.bf16.gmra.mxu0 %v320
      %v355 = vpop.f32.mrf.mxu0
      %v356 = vadd.f32 0.0, %v355
      %v357 = vpop.f32.mrf.mxu0
      %v358 = vadd.f32 0.0, %v357
      %359 = vmatmul.bf16.gmra.mxu0 %v323
      %v360 = vpop.f32.mrf.mxu0
      %v361 = vadd.f32 0.0, %v360
      %v362 = vpop.f32.mrf.mxu0
      %v363 = vadd.f32 0.0, %v362
      %364 = vmatmul.bf16.gmra.mxu0 %v326
      %v365 = vpop.f32.mrf.mxu0
      %v366 = vadd.f32 0.0, %v365
      %v367 = vpop.f32.mrf.mxu0
      %v368 = vadd.f32 0.0, %v367
      %369 = vmatmul.bf16.gmra.mxu0 %v329
      %v370 = vpop.f32.mrf.mxu0
      %v371 = vadd.f32 0.0, %v370
      %v372 = vpop.f32.mrf.mxu0
      %373 = vdwg.mxu0
      %v378 = vunpack.c.l.b16 %v273
      %v379 = vunpack.c.l.b16 %v274
      %v380 = vunpack.c.l.b16 %v275
      %v381 = vunpack.c.l.b16 %v276
      %v382 = vpack.c.b16 %v379, %v378
      %v383 = vpack.c.b16 %v381, %v380
      %v387 = vsel %vm310, %v272, 0
      %v390 = vsel %vm310, %v232, 0
      %v393 = vsel %vm310, %v241, 0
      %v396 = vsel %vm310, %v250, 0
      %v399 = vsel %vm310, %v259, 0
      %v402 = vsel %vm310, %v268, 0
      %v405 = vsel %vm310, %v267, 0
      %407 = vmatpush.bf16.msra.mxu0 0
      %408 = vmatpush.bf16.msra.mxu0 0
      %409 = vmatpush.bf16.msra.mxu0 0
      %410 = vmatpush.bf16.msra.mxu0 0
      %411 = vmatpush.bf16.msra.mxu0 0
      %412 = vmatpush.bf16.msra.mxu0 0
      %413 = vmatpush.bf16.msra.mxu0 %v383
      %414 = vmatpush.bf16.msra.mxu0 %v382
      %415 = vmatmul.bf16.gmra.mxu0 %v387
      %v416 = vpop.f32.mrf.mxu0
      %v417 = vadd.f32 %v341, %v416
      %v418 = vpop.f32.mrf.mxu0
      %v419 = vadd.f32 %v343, %v418
      %420 = vmatmul.bf16.gmra.mxu0 %v390
      %v421 = vpop.f32.mrf.mxu0
      %v422 = vadd.f32 %v346, %v421
      %v423 = vpop.f32.mrf.mxu0
      %v424 = vadd.f32 %v348, %v423
      %425 = vmatmul.bf16.gmra.mxu0 %v393
      %v426 = vpop.f32.mrf.mxu0
      %v427 = vadd.f32 %v351, %v426
      %v428 = vpop.f32.mrf.mxu0
      %v429 = vadd.f32 %v353, %v428
      %430 = vmatmul.bf16.gmra.mxu0 %v396
      %v431 = vpop.f32.mrf.mxu0
      %v432 = vadd.f32 %v356, %v431
      %v433 = vpop.f32.mrf.mxu0
      %v434 = vadd.f32 %v358, %v433
      %435 = vmatmul.bf16.gmra.mxu0 %v399
      %v436 = vpop.f32.mrf.mxu0
      %v437 = vadd.f32 %v361, %v436
      %v438 = vpop.f32.mrf.mxu0
      %v439 = vadd.f32 %v363, %v438
      %440 = vmatmul.bf16.gmra.mxu0 %v402
      %v441 = vpop.f32.mrf.mxu0
      %v442 = vadd.f32 %v366, %v441
      %v443 = vpop.f32.mrf.mxu0
      %v444 = vadd.f32 %v368, %v443
      %445 = vmatmul.bf16.gmra.mxu0 %v405
      %v446 = vpop.f32.mrf.mxu0
      %v447 = vadd.f32 %v371, %v446
      %v448 = vpop.f32.mrf.mxu0
      %449 = vdwg.mxu0
      %vm450 = vsmask.f32 4352
      %v451 = vrot.slane %v217, 3
      %v452 = vrot.slane %v220, 4
      %v453 = vor.u32 %v451, %v452
      %v454 = vrot.slane %v225, 3
      %v455 = vrot.slane %v228, 4
      %v456 = vor.u32 %v454, %v455
      %v457 = vsel %vm450, %v453, %v456
      %v458 = vrot.slane %v234, 3
      %v459 = vrot.slane %v237, 4
      %v460 = vor.u32 %v458, %v459
      %v461 = vsel %vm450, %v456, %v460
      %v462 = vrot.slane %v243, 3
      %v463 = vrot.slane %v246, 4
      %v464 = vor.u32 %v462, %v463
      %v465 = vsel %vm450, %v460, %v464
      %v466 = vrot.slane %v252, 3
      %v467 = vrot.slane %v255, 4
      %v468 = vor.u32 %v466, %v467
      %v469 = vsel %vm450, %v464, %v468
      %v470 = vrot.slane %v261, 3
      %v471 = vrot.slane %v264, 4
      %v472 = vor.u32 %v470, %v471
      %v473 = vsel %vm450, %v468, %v472
      %vm475 = vmand %vm277, %vm450
      %v476 = vsel %vm475, 0, %v453
      %s477 = scalar_lea.vmem %s1, 32
      %v478 = vld [vmem:[%s477] sm:$0xf]
      %v479 = vld [vmem:[%s477 + $0x4] sm:$0xf]
      %v480 = vld [vmem:[%s477 + $0x8] sm:$0xf]
      %v481 = vld [vmem:[%s477 + $0xc] sm:$0xf]
      %v486 = vunpack.c.l.b16 %v478
      %v487 = vunpack.c.l.b16 %v479
      %v488 = vunpack.c.l.b16 %v480
      %v489 = vunpack.c.l.b16 %v481
      %v490 = vpack.c.b16 %v487, %v486
      %v491 = vpack.c.b16 %v489, %v488
      %v495 = vsel %vm310, %v476, 0
      %v498 = vsel %vm310, %v457, 0
      %v501 = vsel %vm310, %v461, 0
      %v504 = vsel %vm310, %v465, 0
      %v507 = vsel %vm310, %v469, 0
      %v510 = vsel %vm310, %v473, 0
      %v513 = vsel %vm310, %v472, 0
      %515 = vmatpush.bf16.msra.mxu0 0
      %516 = vmatpush.bf16.msra.mxu0 0
      %517 = vmatpush.bf16.msra.mxu0 0
      %518 = vmatpush.bf16.msra.mxu0 0
      %519 = vmatpush.bf16.msra.mxu0 0
      %520 = vmatpush.bf16.msra.mxu0 0
      %521 = vmatpush.bf16.msra.mxu0 %v491
      %522 = vmatpush.bf16.msra.mxu0 %v490
      %523 = vmatmul.bf16.gmra.mxu0 %v495
      %v524 = vpop.f32.mrf.mxu0
      %v525 = vadd.f32 0.0, %v524
      %v526 = vpop.f32.mrf.mxu0
      %v527 = vadd.f32 0.0, %v526
      %528 = vmatmul.bf16.gmra.mxu0 %v498
      %v529 = vpop.f32.mrf.mxu0
      %v530 = vadd.f32 0.0, %v529
      %v531 = vpop.f32.mrf.mxu0
      %v532 = vadd.f32 0.0, %v531
      %533 = vmatmul.bf16.gmra.mxu0 %v501
      %v534 = vpop.f32.mrf.mxu0
      %v535 = vadd.f32 0.0, %v534
      %v536 = vpop.f32.mrf.mxu0
      %v537 = vadd.f32 0.0, %v536
      %538 = vmatmul.bf16.gmra.mxu0 %v504
      %v539 = vpop.f32.mrf.mxu0
      %v540 = vadd.f32 0.0, %v539
      %v541 = vpop.f32.mrf.mxu0
      %v542 = vadd.f32 0.0, %v541
      %543 = vmatmul.bf16.gmra.mxu0 %v507
      %v544 = vpop.f32.mrf.mxu0
      %v545 = vadd.f32 0.0, %v544
      %v546 = vpop.f32.mrf.mxu0
      %v547 = vadd.f32 0.0, %v546
      %548 = vmatmul.bf16.gmra.mxu0 %v510
      %v549 = vpop.f32.mrf.mxu0
      %v550 = vadd.f32 0.0, %v549
      %v551 = vpop.f32.mrf.mxu0
      %v552 = vadd.f32 0.0, %v551
      %553 = vmatmul.bf16.gmra.mxu0 %v513
      %v554 = vpop.f32.mrf.mxu0
      %v555 = vadd.f32 0.0, %v554
      %v556 = vpop.f32.mrf.mxu0
      %557 = vdwg.mxu0
      %v558 = vadd.f32 %v417, %v525
      %v559 = vadd.f32 %v419, %v527
      %v560 = vadd.f32 %v422, %v530
      %v561 = vadd.f32 %v424, %v532
      %v562 = vadd.f32 %v427, %v535
      %v563 = vadd.f32 %v429, %v537
      %v564 = vadd.f32 %v432, %v540
      %v565 = vadd.f32 %v434, %v542
      %v566 = vadd.f32 %v437, %v545
      %v567 = vadd.f32 %v439, %v547
      %v568 = vadd.f32 %v442, %v550
      %v569 = vadd.f32 %v444, %v552
      %v570 = vadd.f32 %v447, %v555
      %v572 = vunpack.c.l.b16 %v184
      %v573 = vpack.c.b16 %v572, %v572
      %vm574 = vsmask.f32 256
      %v575 = vrot.slane %v217, 7
      %v576 = vor.u32 %v575, %v220
      %v577 = vrot.slane %v225, 7
      %v578 = vor.u32 %v577, %v228
      %v579 = vsel %vm574, %v575, %v578
      %v580 = vrot.slane %v234, 7
      %v581 = vor.u32 %v580, %v237
      %v582 = vsel %vm574, %v577, %v581
      %v583 = vrot.slane %v243, 7
      %v584 = vor.u32 %v583, %v246
      %v585 = vsel %vm574, %v580, %v584
      %v586 = vrot.slane %v252, 7
      %v587 = vor.u32 %v586, %v255
      %v588 = vsel %vm574, %v583, %v587
      %v589 = vrot.slane %v261, 7
      %v590 = vor.u32 %v589, %v264
      %v591 = vsel %vm574, %v586, %v590
      %v593 = vshrl.u32 %v573, 16
      %v595 = vrot.slane %v593, 7
      %v596 = vshll.u32 %v573, 16
      %v598 = vor.u32 %v595, %v596
      %v599 = vsel %vm574, %v589, %v598
      %vm601 = vcmask 1040384
      %vm602 = vmand %vm601, %vm574
      %v603 = vsel %vm602, 0, %v576
      %s604 = scalar_lea.vmem %s1, 48
      %v605 = vld [vmem:[%s604] sm:$0xf]
      %v606 = vld [vmem:[%s604 + $0x4] sm:$0xf]
      %v607 = vld [vmem:[%s604 + $0x8] sm:$0xf]
      %v608 = vld [vmem:[%s604 + $0xc] sm:$0xf]
      %v613 = vunpack.c.l.b16 %v605
      %v614 = vunpack.c.l.b16 %v606
      %v615 = vunpack.c.l.b16 %v607
      %v616 = vunpack.c.l.b16 %v608
      %v617 = vpack.c.b16 %v614, %v613
      %v618 = vpack.c.b16 %v616, %v615
      %v622 = vsel %vm310, %v603, 0
      %v625 = vsel %vm310, %v579, 0
      %v628 = vsel %vm310, %v582, 0
      %v631 = vsel %vm310, %v585, 0
      %v634 = vsel %vm310, %v588, 0
      %v637 = vsel %vm310, %v591, 0
      %v640 = vsel %vm310, %v599, 0
      %642 = vmatpush.bf16.msra.mxu0 0
      %643 = vmatpush.bf16.msra.mxu0 0
      %644 = vmatpush.bf16.msra.mxu0 0
      %645 = vmatpush.bf16.msra.mxu0 0
      %646 = vmatpush.bf16.msra.mxu0 0
      %647 = vmatpush.bf16.msra.mxu0 0
      %648 = vmatpush.bf16.msra.mxu0 %v618
      %649 = vmatpush.bf16.msra.mxu0 %v617
      %650 = vmatmul.bf16.gmra.mxu0 %v622
      %v651 = vpop.f32.mrf.mxu0
      %v652 = vadd.f32 0.0, %v651
      %v653 = vpop.f32.mrf.mxu0
      %v654 = vadd.f32 0.0, %v653
      %655 = vmatmul.bf16.gmra.mxu0 %v625
      %v656 = vpop.f32.mrf.mxu0
      %v657 = vadd.f32 0.0, %v656
      %v658 = vpop.f32.mrf.mxu0
      %v659 = vadd.f32 0.0, %v658
      %660 = vmatmul.bf16.gmra.mxu0 %v628
      %v661 = vpop.f32.mrf.mxu0
      %v662 = vadd.f32 0.0, %v661
      %v663 = vpop.f32.mrf.mxu0
      %v664 = vadd.f32 0.0, %v663
      %665 = vmatmul.bf16.gmra.mxu0 %v631
      %v666 = vpop.f32.mrf.mxu0
      %v667 = vadd.f32 0.0, %v666
      %v668 = vpop.f32.mrf.mxu0
      %v669 = vadd.f32 0.0, %v668
      %670 = vmatmul.bf16.gmra.mxu0 %v634
      %v671 = vpop.f32.mrf.mxu0
      %v672 = vadd.f32 0.0, %v671
      %v673 = vpop.f32.mrf.mxu0
      %v674 = vadd.f32 0.0, %v673
      %675 = vmatmul.bf16.gmra.mxu0 %v637
      %v676 = vpop.f32.mrf.mxu0
      %v677 = vadd.f32 0.0, %v676
      %v678 = vpop.f32.mrf.mxu0
      %v679 = vadd.f32 0.0, %v678
      %680 = vmatmul.bf16.gmra.mxu0 %v640
      %v681 = vpop.f32.mrf.mxu0
      %v682 = vadd.f32 0.0, %v681
      %v683 = vpop.f32.mrf.mxu0
      %684 = vdwg.mxu0
      %v685 = vadd.f32 %v558, %v652
      %v686 = vadd.f32 %v559, %v654
      %v687 = vadd.f32 %v560, %v657
      %v688 = vadd.f32 %v561, %v659
      %v689 = vadd.f32 %v562, %v662
      %v690 = vadd.f32 %v563, %v664
      %v691 = vadd.f32 %v564, %v667
      %v692 = vadd.f32 %v565, %v669
      %v693 = vadd.f32 %v566, %v672
      %v694 = vadd.f32 %v567, %v674
      %v695 = vadd.f32 %v568, %v677
      %v696 = vadd.f32 %v569, %v679
      %v697 = vadd.f32 %v570, %v682
      %s698 = scalar_lea.vmem %s1, 64
      %v699 = vld [vmem:[%s698] sm:$0xf]
      %v700 = vld [vmem:[%s698 + $0x4] sm:$0xf]
      %v701 = vld [vmem:[%s698 + $0x8] sm:$0xf]
      %v702 = vld [vmem:[%s698 + $0xc] sm:$0xf]
      %v707 = vunpack.c.l.b16 %v699
      %v708 = vunpack.c.l.b16 %v700
      %v709 = vunpack.c.l.b16 %v701
      %v710 = vunpack.c.l.b16 %v702
      %v711 = vpack.c.b16 %v708, %v707
      %v712 = vpack.c.b16 %v710, %v709
      %v715 = vsel %vm310, %v209, 0
      %v717 = vsel %vm310, %v210, 0
      %v719 = vsel %vm310, %v211, 0
      %v721 = vsel %vm310, %v212, 0
      %v723 = vsel %vm310, %v213, 0
      %v725 = vsel %vm310, %v214, 0
      %v727 = vsel %vm310, %v573, 0
      %729 = vmatpush.bf16.msra.mxu0 0
      %730 = vmatpush.bf16.msra.mxu0 0
      %731 = vmatpush.bf16.msra.mxu0 0
      %732 = vmatpush.bf16.msra.mxu0 0
      %733 = vmatpush.bf16.msra.mxu0 0
      %734 = vmatpush.bf16.msra.mxu0 0
      %735 = vmatpush.bf16.msra.mxu0 %v712
      %736 = vmatpush.bf16.msra.mxu0 %v711
      %737 = vmatmul.bf16.gmra.mxu0 %v715
      %v738 = vpop.f32.mrf.mxu0
      %v739 = vadd.f32 0.0, %v738
      %v740 = vpop.f32.mrf.mxu0
      %v741 = vadd.f32 0.0, %v740
      %742 = vmatmul.bf16.gmra.mxu0 %v717
      %v743 = vpop.f32.mrf.mxu0
      %v744 = vadd.f32 0.0, %v743
      %v745 = vpop.f32.mrf.mxu0
      %v746 = vadd.f32 0.0, %v745
      %747 = vmatmul.bf16.gmra.mxu0 %v719
      %v748 = vpop.f32.mrf.mxu0
      %v749 = vadd.f32 0.0, %v748
      %v750 = vpop.f32.mrf.mxu0
      %v751 = vadd.f32 0.0, %v750
      %752 = vmatmul.bf16.gmra.mxu0 %v721
      %v753 = vpop.f32.mrf.mxu0
      %v754 = vadd.f32 0.0, %v753
      %v755 = vpop.f32.mrf.mxu0
      %v756 = vadd.f32 0.0, %v755
      %757 = vmatmul.bf16.gmra.mxu0 %v723
      %v758 = vpop.f32.mrf.mxu0
      %v759 = vadd.f32 0.0, %v758
      %v760 = vpop.f32.mrf.mxu0
      %v761 = vadd.f32 0.0, %v760
      %762 = vmatmul.bf16.gmra.mxu0 %v725
      %v763 = vpop.f32.mrf.mxu0
      %v764 = vadd.f32 0.0, %v763
      %v765 = vpop.f32.mrf.mxu0
      %v766 = vadd.f32 0.0, %v765
      %767 = vmatmul.bf16.gmra.mxu0 %v727
      %v768 = vpop.f32.mrf.mxu0
      %v769 = vadd.f32 0.0, %v768
      %v770 = vpop.f32.mrf.mxu0
      %771 = vdwg.mxu0
      %v772 = vadd.f32 %v685, %v739
      %v773 = vadd.f32 %v686, %v741
      %v774 = vadd.f32 %v687, %v744
      %v775 = vadd.f32 %v688, %v746
      %v776 = vadd.f32 %v689, %v749
      %v777 = vadd.f32 %v690, %v751
      %v778 = vadd.f32 %v691, %v754
      %v779 = vadd.f32 %v692, %v756
      %v780 = vadd.f32 %v693, %v759
      %v781 = vadd.f32 %v694, %v761
      %v782 = vadd.f32 %v695, %v764
      %v783 = vadd.f32 %v696, %v766
      %v784 = vadd.f32 %v697, %v769
      %vm785 = vsmask.f32 7424
      %v786 = vrot.slane %v220, 1
      %v787 = vor.u32 %v217, %v786
      %v788 = vrot.slane %v228, 1
      %v789 = vsel %vm785, %v787, %v788
      %v790 = vor.u32 %v225, %v788
      %v791 = vrot.slane %v237, 1
      %v792 = vsel %vm785, %v790, %v791
      %v793 = vor.u32 %v234, %v791
      %v794 = vrot.slane %v246, 1
      %v795 = vsel %vm785, %v793, %v794
      %v796 = vor.u32 %v243, %v794
      %v797 = vrot.slane %v255, 1
      %v798 = vsel %vm785, %v796, %v797
      %v799 = vor.u32 %v252, %v797
      %v800 = vrot.slane %v264, 1
      %v801 = vsel %vm785, %v799, %v800
      %v802 = vor.u32 %v261, %v800
      %v803 = vrot.slane %v596, 1
      %v804 = vsel %vm785, %v802, %v803
      %v805 = vor.u32 %v593, %v803
      %vm807 = vcmask 1043456
      %vm808 = vsmask.f32 3328
      %vm809 = vmand %vm807, %vm808
      %v810 = vsel %vm809, %v805, 0
      %s811 = scalar_lea.vmem %s1, 80
      %v812 = vld [vmem:[%s811] sm:$0xf]
      %v813 = vld [vmem:[%s811 + $0x4] sm:$0xf]
      %v814 = vld [vmem:[%s811 + $0x8] sm:$0xf]
      %v815 = vld [vmem:[%s811 + $0xc] sm:$0xf]
      %v820 = vunpack.c.l.b16 %v812
      %v821 = vunpack.c.l.b16 %v813
      %v822 = vunpack.c.l.b16 %v814
      %v823 = vunpack.c.l.b16 %v815
      %v824 = vpack.c.b16 %v821, %v820
      %v825 = vpack.c.b16 %v823, %v822
      %v829 = vsel %vm310, %v789, 0
      %v832 = vsel %vm310, %v792, 0
      %v835 = vsel %vm310, %v795, 0
      %v838 = vsel %vm310, %v798, 0
      %v841 = vsel %vm310, %v801, 0
      %v844 = vsel %vm310, %v804, 0
      %v847 = vsel %vm310, %v810, 0
      %849 = vmatpush.bf16.msra.mxu0 0
      %850 = vmatpush.bf16.msra.mxu0 0
      %851 = vmatpush.bf16.msra.mxu0 0
      %852 = vmatpush.bf16.msra.mxu0 0
      %853 = vmatpush.bf16.msra.mxu0 0
      %854 = vmatpush.bf16.msra.mxu0 0
      %855 = vmatpush.bf16.msra.mxu0 %v825
      %856 = vmatpush.bf16.msra.mxu0 %v824
      %857 = vmatmul.bf16.gmra.mxu0 %v829
      %v858 = vpop.f32.mrf.mxu0
      %v859 = vadd.f32 0.0, %v858
      %v860 = vpop.f32.mrf.mxu0
      %v861 = vadd.f32 0.0, %v860
      %862 = vmatmul.bf16.gmra.mxu0 %v832
      %v863 = vpop.f32.mrf.mxu0
      %v864 = vadd.f32 0.0, %v863
      %v865 = vpop.f32.mrf.mxu0
      %v866 = vadd.f32 0.0, %v865
      %867 = vmatmul.bf16.gmra.mxu0 %v835
      %v868 = vpop.f32.mrf.mxu0
      %v869 = vadd.f32 0.0, %v868
      %v870 = vpop.f32.mrf.mxu0
      %v871 = vadd.f32 0.0, %v870
      %872 = vmatmul.bf16.gmra.mxu0 %v838
      %v873 = vpop.f32.mrf.mxu0
      %v874 = vadd.f32 0.0, %v873
      %v875 = vpop.f32.mrf.mxu0
      %v876 = vadd.f32 0.0, %v875
      %877 = vmatmul.bf16.gmra.mxu0 %v841
      %v878 = vpop.f32.mrf.mxu0
      %v879 = vadd.f32 0.0, %v878
      %v880 = vpop.f32.mrf.mxu0
      %v881 = vadd.f32 0.0, %v880
      %882 = vmatmul.bf16.gmra.mxu0 %v844
      %v883 = vpop.f32.mrf.mxu0
      %v884 = vadd.f32 0.0, %v883
      %v885 = vpop.f32.mrf.mxu0
      %v886 = vadd.f32 0.0, %v885
      %887 = vmatmul.bf16.gmra.mxu0 %v847
      %v888 = vpop.f32.mrf.mxu0
      %v889 = vadd.f32 0.0, %v888
      %v890 = vpop.f32.mrf.mxu0
      %891 = vdwg.mxu0
      %v892 = vadd.f32 %v772, %v859
      %v893 = vadd.f32 %v773, %v861
      %v894 = vadd.f32 %v774, %v864
      %v895 = vadd.f32 %v775, %v866
      %v896 = vadd.f32 %v776, %v869
      %v897 = vadd.f32 %v777, %v871
      %v898 = vadd.f32 %v778, %v874
      %v899 = vadd.f32 %v779, %v876
      %v900 = vadd.f32 %v780, %v879
      %v901 = vadd.f32 %v781, %v881
      %v902 = vadd.f32 %v782, %v884
      %v903 = vadd.f32 %v783, %v886
      %v904 = vadd.f32 %v784, %v889
      %v905 = vpack.c.b16 %v199, %v198
      %v906 = vpack.c.b16 %v201, %v200
      %v907 = vpack.c.b16 %v203, %v202
      %v908 = vpack.c.b16 %v205, %v204
      %v909 = vpack.c.b16 %v207, %v206
      %v910 = vpack.c.b16 %v572, %v208
      %v912 = vshrl.u32 %v905, 16
      %v914 = vshll.u32 %v905, 16
      %v916 = vrot.slane %v914, 1
      %v917 = vor.u32 %v912, %v916
      %v919 = vshll.u32 %v906, 16
      %v921 = vrot.slane %v919, 1
      %v922 = vsel %vm785, %v917, %v921
      %v923 = vshrl.u32 %v906, 16
      %v925 = vor.u32 %v923, %v921
      %v927 = vshll.u32 %v907, 16
      %v929 = vrot.slane %v927, 1
      %v930 = vsel %vm785, %v925, %v929
      %v931 = vshrl.u32 %v907, 16
      %v933 = vor.u32 %v931, %v929
      %v935 = vshll.u32 %v908, 16
      %v937 = vrot.slane %v935, 1
      %v938 = vsel %vm785, %v933, %v937
      %v939 = vshrl.u32 %v908, 16
      %v941 = vor.u32 %v939, %v937
      %v943 = vshll.u32 %v909, 16
      %v945 = vrot.slane %v943, 1
      %v946 = vsel %vm785, %v941, %v945
      %v947 = vshrl.u32 %v909, 16
      %v949 = vor.u32 %v947, %v945
      %v951 = vshll.u32 %v910, 16
      %v953 = vrot.slane %v951, 1
      %v954 = vsel %vm785, %v949, %v953
      %v955 = vshrl.u32 %v910, 16
      %v957 = vor.u32 %v955, %v953
      %vm959 = vcmask 1047552
      %vm960 = vmand %vm959, %vm785
      %v961 = vsel %vm960, %v957, 0
      %s962 = scalar_lea.vmem %s1, 96
      %v963 = vld [vmem:[%s962] sm:$0xf]
      %v964 = vld [vmem:[%s962 + $0x4] sm:$0xf]
      %v965 = vld [vmem:[%s962 + $0x8] sm:$0xf]
      %v966 = vld [vmem:[%s962 + $0xc] sm:$0xf]
      %v971 = vunpack.c.l.b16 %v963
      %v972 = vunpack.c.l.b16 %v964
      %v973 = vunpack.c.l.b16 %v965
      %v974 = vunpack.c.l.b16 %v966
      %v975 = vpack.c.b16 %v972, %v971
      %v976 = vpack.c.b16 %v974, %v973
      %v980 = vsel %vm310, %v922, 0
      %v983 = vsel %vm310, %v930, 0
      %v986 = vsel %vm310, %v938, 0
      %v989 = vsel %vm310, %v946, 0
      %v992 = vsel %vm310, %v954, 0
      %v995 = vsel %vm310, %v961, 0
      %v997 = vsel %vm310, 0, 0
      %999 = vmatpush.bf16.msra.mxu0 0
      %1000 = vmatpush.bf16.msra.mxu0 0
      %1001 = vmatpush.bf16.msra.mxu0 0
      %1002 = vmatpush.bf16.msra.mxu0 0
      %1003 = vmatpush.bf16.msra.mxu0 0
      %1004 = vmatpush.bf16.msra.mxu0 0
      %1005 = vmatpush.bf16.msra.mxu0 %v976
      %1006 = vmatpush.bf16.msra.mxu0 %v975
      %1007 = vmatmul.bf16.gmra.mxu0 %v980
      %v1008 = vpop.f32.mrf.mxu0
      %v1009 = vadd.f32 0.0, %v1008
      %v1010 = vpop.f32.mrf.mxu0
      %v1011 = vadd.f32 0.0, %v1010
      %1012 = vmatmul.bf16.gmra.mxu0 %v983
      %v1013 = vpop.f32.mrf.mxu0
      %v1014 = vadd.f32 0.0, %v1013
      %v1015 = vpop.f32.mrf.mxu0
      %v1016 = vadd.f32 0.0, %v1015
      %1017 = vmatmul.bf16.gmra.mxu0 %v986
      %v1018 = vpop.f32.mrf.mxu0
      %v1019 = vadd.f32 0.0, %v1018
      %v1020 = vpop.f32.mrf.mxu0
      %v1021 = vadd.f32 0.0, %v1020
      %1022 = vmatmul.bf16.gmra.mxu0 %v989
      %v1023 = vpop.f32.mrf.mxu0
      %v1024 = vadd.f32 0.0, %v1023
      %v1025 = vpop.f32.mrf.mxu0
      %v1026 = vadd.f32 0.0, %v1025
      %1027 = vmatmul.bf16.gmra.mxu0 %v992
      %v1028 = vpop.f32.mrf.mxu0
      %v1029 = vadd.f32 0.0, %v1028
      %v1030 = vpop.f32.mrf.mxu0
      %v1031 = vadd.f32 0.0, %v1030
      %1032 = vmatmul.bf16.gmra.mxu0 %v995
      %v1033 = vpop.f32.mrf.mxu0
      %v1034 = vadd.f32 0.0, %v1033
      %v1035 = vpop.f32.mrf.mxu0
      %v1036 = vadd.f32 0.0, %v1035
      %1037 = vmatmul.bf16.gmra.mxu0 %v997
      %v1038 = vpop.f32.mrf.mxu0
      %v1039 = vadd.f32 0.0, %v1038
      %v1040 = vpop.f32.mrf.mxu0
      %1041 = vdwg.mxu0
      %v1042 = vadd.f32 %v892, %v1009
      %v1043 = vadd.f32 %v893, %v1011
      %v1044 = vadd.f32 %v894, %v1014
      %v1045 = vadd.f32 %v895, %v1016
      %v1046 = vadd.f32 %v896, %v1019
      %v1047 = vadd.f32 %v897, %v1021
      %v1048 = vadd.f32 %v898, %v1024
      %v1049 = vadd.f32 %v899, %v1026
      %v1050 = vadd.f32 %v900, %v1029
      %v1051 = vadd.f32 %v901, %v1031
      %v1052 = vadd.f32 %v902, %v1034
      %v1053 = vadd.f32 %v903, %v1036
      %v1054 = vadd.f32 %v904, %v1039
      %vm1055 = vcmask 1046528
      %v1056 = vrot.slane %v905, 1
      %v1057 = vrot.slane %v906, 1
      %v1058 = vsel %vm1055, %v1056, %v1057
      %v1059 = vrot.slane %v907, 1
      %v1060 = vsel %vm1055, %v1057, %v1059
      %v1061 = vrot.slane %v908, 1
      %v1062 = vsel %vm1055, %v1059, %v1061
      %v1063 = vrot.slane %v909, 1
      %v1064 = vsel %vm1055, %v1061, %v1063
      %v1065 = vrot.slane %v910, 1
      %v1066 = vsel %vm1055, %v1063, %v1065
      %vm1067 = vcmask 1046528
      %v1069 = vsel %vm1067, %v1065, 0
      %s1070 = scalar_lea.vmem %s1, 112
      %v1071 = vld [vmem:[%s1070] sm:$0xf]
      %v1072 = vld [vmem:[%s1070 + $0x4] sm:$0xf]
      %v1073 = vld [vmem:[%s1070 + $0x8] sm:$0xf]
      %v1074 = vld [vmem:[%s1070 + $0xc] sm:$0xf]
      %v1079 = vunpack.c.l.b16 %v1071
      %v1080 = vunpack.c.l.b16 %v1072
      %v1081 = vunpack.c.l.b16 %v1073
      %v1082 = vunpack.c.l.b16 %v1074
      %v1083 = vpack.c.b16 %v1080, %v1079
      %v1084 = vpack.c.b16 %v1082, %v1081
      %v1088 = vsel %vm310, %v1058, 0
      %v1091 = vsel %vm310, %v1060, 0
      %v1094 = vsel %vm310, %v1062, 0
      %v1097 = vsel %vm310, %v1064, 0
      %v1100 = vsel %vm310, %v1066, 0
      %v1102 = vsel %vm310, %v1069, 0
      %1104 = vmatpush.bf16.msra.mxu0 0
      %1105 = vmatpush.bf16.msra.mxu0 0
      %1106 = vmatpush.bf16.msra.mxu0 0
      %1107 = vmatpush.bf16.msra.mxu0 0
      %1108 = vmatpush.bf16.msra.mxu0 0
      %1109 = vmatpush.bf16.msra.mxu0 0
      %1110 = vmatpush.bf16.msra.mxu0 %v1084
      %1111 = vmatpush.bf16.msra.mxu0 %v1083
      %1112 = vmatmul.bf16.gmra.mxu0 %v1088
      %v1113 = vpop.f32.mrf.mxu0
      %v1114 = vadd.f32 0.0, %v1113
      %v1115 = vpop.f32.mrf.mxu0
      %v1116 = vadd.f32 0.0, %v1115
      %1117 = vmatmul.bf16.gmra.mxu0 %v1091
      %v1118 = vpop.f32.mrf.mxu0
      %v1119 = vadd.f32 0.0, %v1118
      %v1120 = vpop.f32.mrf.mxu0
      %v1121 = vadd.f32 0.0, %v1120
      %1122 = vmatmul.bf16.gmra.mxu0 %v1094
      %v1123 = vpop.f32.mrf.mxu0
      %v1124 = vadd.f32 0.0, %v1123
      %v1125 = vpop.f32.mrf.mxu0
      %v1126 = vadd.f32 0.0, %v1125
      %1127 = vmatmul.bf16.gmra.mxu0 %v1097
      %v1128 = vpop.f32.mrf.mxu0
      %v1129 = vadd.f32 0.0, %v1128
      %v1130 = vpop.f32.mrf.mxu0
      %v1131 = vadd.f32 0.0, %v1130
      %1132 = vmatmul.bf16.gmra.mxu0 %v1100
      %v1133 = vpop.f32.mrf.mxu0
      %v1134 = vadd.f32 0.0, %v1133
      %v1135 = vpop.f32.mrf.mxu0
      %v1136 = vadd.f32 0.0, %v1135
      %1137 = vmatmul.bf16.gmra.mxu0 %v1102
      %v1138 = vpop.f32.mrf.mxu0
      %v1139 = vadd.f32 0.0, %v1138
      %v1140 = vpop.f32.mrf.mxu0
      %v1141 = vadd.f32 0.0, %v1140
      %1142 = vmatmul.bf16.gmra.mxu0 %v997
      %v1143 = vpop.f32.mrf.mxu0
      %v1144 = vadd.f32 0.0, %v1143
      %v1145 = vpop.f32.mrf.mxu0
      %1146 = vdwg.mxu0
      %v1147 = vadd.f32 %v1042, %v1114
      %v1148 = vadd.f32 %v1043, %v1116
      %v1149 = vadd.f32 %v1044, %v1119
      %v1150 = vadd.f32 %v1045, %v1121
      %v1151 = vadd.f32 %v1046, %v1124
      %v1152 = vadd.f32 %v1047, %v1126
      %v1153 = vadd.f32 %v1048, %v1129
      %v1154 = vadd.f32 %v1049, %v1131
      %v1155 = vadd.f32 %v1050, %v1134
      %v1156 = vadd.f32 %v1051, %v1136
      %v1157 = vadd.f32 %v1052, %v1139
      %v1158 = vadd.f32 %v1053, %v1141
      %v1159 = vadd.f32 %v1054, %v1144
      %vm1160 = vsmask.f32 6400
      %v1161 = vrot.slane %v912, 1
      %v1162 = vrot.slane %v914, 2
      %v1163 = vor.u32 %v1161, %v1162
      %v1164 = vrot.slane %v923, 1
      %v1165 = vrot.slane %v919, 2
      %v1166 = vor.u32 %v1164, %v1165
      %v1167 = vsel %vm1160, %v1163, %v1166
      %v1168 = vrot.slane %v931, 1
      %v1169 = vrot.slane %v927, 2
      %v1170 = vor.u32 %v1168, %v1169
      %v1171 = vsel %vm1160, %v1166, %v1170
      %v1172 = vrot.slane %v939, 1
      %v1173 = vrot.slane %v935, 2
      %v1174 = vor.u32 %v1172, %v1173
      %v1175 = vsel %vm1160, %v1170, %v1174
      %v1176 = vrot.slane %v947, 1
      %v1177 = vrot.slane %v943, 2
      %v1178 = vor.u32 %v1176, %v1177
      %v1179 = vsel %vm1160, %v1174, %v1178
      %v1180 = vrot.slane %v955, 1
      %v1181 = vrot.slane %v951, 2
      %v1182 = vor.u32 %v1180, %v1181
      %v1183 = vsel %vm1160, %v1178, %v1182
      %vm1185 = vmand %vm1055, %vm1160
      %v1186 = vsel %vm1185, %v1182, 0
      %s1187 = scalar_lea.vmem %s1, 128
      %v1188 = vld [vmem:[%s1187] sm:$0xf]
      %v1189 = vld [vmem:[%s1187 + $0x4] sm:$0xf]
      %v1190 = vld [vmem:[%s1187 + $0x8] sm:$0xf]
      %v1191 = vld [vmem:[%s1187 + $0xc] sm:$0xf]
      %v1196 = vunpack.c.l.b16 %v1188
      %v1197 = vunpack.c.l.b16 %v1189
      %v1198 = vunpack.c.l.b16 %v1190
      %v1199 = vunpack.c.l.b16 %v1191
      %v1200 = vpack.c.b16 %v1197, %v1196
      %v1201 = vpack.c.b16 %v1199, %v1198
      %v1205 = vsel %vm310, %v1167, 0
      %v1208 = vsel %vm310, %v1171, 0
      %v1211 = vsel %vm310, %v1175, 0
      %v1214 = vsel %vm310, %v1179, 0
      %v1217 = vsel %vm310, %v1183, 0
      %v1220 = vsel %vm310, %v1186, 0
      %1222 = vmatpush.bf16.msra.mxu0 0
      %1223 = vmatpush.bf16.msra.mxu0 0
      %1224 = vmatpush.bf16.msra.mxu0 0
      %1225 = vmatpush.bf16.msra.mxu0 0
      %1226 = vmatpush.bf16.msra.mxu0 0
      %1227 = vmatpush.bf16.msra.mxu0 0
      %1228 = vmatpush.bf16.msra.mxu0 %v1201
      %1229 = vmatpush.bf16.msra.mxu0 %v1200
      %1230 = vmatmul.bf16.gmra.mxu0 %v1205
      %v1231 = vpop.f32.mrf.mxu0
      %v1232 = vadd.f32 0.0, %v1231
      %v1233 = vpop.f32.mrf.mxu0
      %v1234 = vadd.f32 0.0, %v1233
      %1235 = vmatmul.bf16.gmra.mxu0 %v1208
      %v1236 = vpop.f32.mrf.mxu0
      %v1237 = vadd.f32 0.0, %v1236
      %v1238 = vpop.f32.mrf.mxu0
      %v1239 = vadd.f32 0.0, %v1238
      %1240 = vmatmul.bf16.gmra.mxu0 %v1211
      %v1241 = vpop.f32.mrf.mxu0
      %v1242 = vadd.f32 0.0, %v1241
      %v1243 = vpop.f32.mrf.mxu0
      %v1244 = vadd.f32 0.0, %v1243
      %1245 = vmatmul.bf16.gmra.mxu0 %v1214
      %v1246 = vpop.f32.mrf.mxu0
      %v1247 = vadd.f32 0.0, %v1246
      %v1248 = vpop.f32.mrf.mxu0
      %v1249 = vadd.f32 0.0, %v1248
      %1250 = vmatmul.bf16.gmra.mxu0 %v1217
      %v1251 = vpop.f32.mrf.mxu0
      %v1252 = vadd.f32 0.0, %v1251
      %v1253 = vpop.f32.mrf.mxu0
      %v1254 = vadd.f32 0.0, %v1253
      %1255 = vmatmul.bf16.gmra.mxu0 %v1220
      %v1256 = vpop.f32.mrf.mxu0
      %v1257 = vadd.f32 0.0, %v1256
      %v1258 = vpop.f32.mrf.mxu0
      %v1259 = vadd.f32 0.0, %v1258
      %1260 = vmatmul.bf16.gmra.mxu0 %v997
      %v1261 = vpop.f32.mrf.mxu0
      %v1262 = vadd.f32 0.0, %v1261
      %v1263 = vpop.f32.mrf.mxu0
      %1264 = vdwg.mxu0
      %v1265 = vadd.f32 %v1147, %v1232
      %v1266 = vadd.f32 %v1148, %v1234
      %v1267 = vadd.f32 %v1149, %v1237
      %v1268 = vadd.f32 %v1150, %v1239
      %v1269 = vadd.f32 %v1151, %v1242
      %v1270 = vadd.f32 %v1152, %v1244
      %v1271 = vadd.f32 %v1153, %v1247
      %v1272 = vadd.f32 %v1154, %v1249
      %v1273 = vadd.f32 %v1155, %v1252
      %v1274 = vadd.f32 %v1156, %v1254
      %v1275 = vadd.f32 %v1157, %v1257
      %v1276 = vadd.f32 %v1158, %v1259
      %v1277 = vadd.f32 %v1159, %v1262
      %v1278 = vld [vmem:[%s2] sm:$0x1]
      %v1280 = vperm.slane %v1278, 0
      %v1282 = vadd.f32 %v1265, %v1280
      %v1283 = vadd.f32 %v1266, %v1280
      %v1284 = vadd.f32 %v1267, %v1280
      %v1285 = vadd.f32 %v1268, %v1280
      %v1286 = vadd.f32 %v1269, %v1280
      %v1287 = vadd.f32 %v1270, %v1280
      %v1288 = vadd.f32 %v1271, %v1280
      %v1289 = vadd.f32 %v1272, %v1280
      %v1290 = vadd.f32 %v1273, %v1280
      %v1291 = vadd.f32 %v1274, %v1280
      %v1292 = vadd.f32 %v1275, %v1280
      %v1293 = vadd.f32 %v1276, %v1280
      %v1294 = vadd.f32 %v1277, %v1280
      %v1295 = vpack.c.bf16 %v1282, %v1282
      %v1296 = vpack.c.bf16 %v1283, %v1283
      %v1297 = vpack.c.bf16 %v1284, %v1284
      %v1298 = vpack.c.bf16 %v1285, %v1285
      %v1299 = vpack.c.bf16 %v1286, %v1286
      %v1300 = vpack.c.bf16 %v1287, %v1287
      %v1301 = vpack.c.bf16 %v1288, %v1288
      %v1302 = vpack.c.bf16 %v1289, %v1289
      %v1303 = vpack.c.bf16 %v1290, %v1290
      %v1304 = vpack.c.bf16 %v1291, %v1291
      %v1305 = vpack.c.bf16 %v1292, %v1292
      %v1306 = vpack.c.bf16 %v1293, %v1293
      %v1307 = vpack.c.bf16 %v1294, %v1294
      %vm1308 = vcmask 60416
      %1309 = vst.msk [vmem:[%s170] sm:$0xf] %vm1308, %v1295
      %1310 = vst.msk [vmem:[%s170 + $0x4] sm:$0xf] %vm1308, %v1296
      %1311 = vst.msk [vmem:[%s170 + $0x8] sm:$0xf] %vm1308, %v1297
      %1312 = vst.msk [vmem:[%s170 + $0xc] sm:$0xf] %vm1308, %v1298
      %1313 = vst.msk [vmem:[%s170 + $0x10] sm:$0xf] %vm1308, %v1299
      %1314 = vst.msk [vmem:[%s170 + $0x14] sm:$0xf] %vm1308, %v1300
      %1315 = vst.msk [vmem:[%s170 + $0x18] sm:$0xf] %vm1308, %v1301
      %1316 = vst.msk [vmem:[%s170 + $0x1c] sm:$0xf] %vm1308, %v1302
      %1317 = vst.msk [vmem:[%s170 + $0x20] sm:$0xf] %vm1308, %v1303
      %1318 = vst.msk [vmem:[%s170 + $0x24] sm:$0xf] %vm1308, %v1304
      %1319 = vst.msk [vmem:[%s170 + $0x28] sm:$0xf] %vm1308, %v1305
      %1320 = vst.msk [vmem:[%s170 + $0x2c] sm:$0xf] %vm1308, %v1306
      %1321 = vst.msk [vmem:[%s170 + $0x30] sm:$0xf] %vm1308, %v1307
      %p1322 = scmp.lt.s32.totalorder %s14, 1
      %s1323 = scalar_select %p1322, %s14, 1
      %s1324 = smul.addr %s1323, 13
      %s1325 = smul.addr %s1324, 4
      %s1326 = scalar_lea.vmem %s3, %s1325
      // Predicated region
      $region33: #{_lambda_.7} parent=31 // pred_check
        %p1327 = pneg %p100
      $region34: #{_lambda_.7} parent=31 // pred_check_branch
        %1329 = sbr.rel (%p1327) target = $region36
      $region35: #{_lambda_.7} parent=31 // pred_region
        _
      $region36: #{_lambda_.7} parent=31 // pred_fallthru
        _
    $region32: #{_lambda_.7} parent=5 // pred_fallthru
      _
    %p1330 = scmp.le.s32.totalorder 2, %s9
    // Predicated region
    $region37: #{_lambda_.7} parent=5 // pred_check
      %p1331 = pneg %p1330
    $region38: #{_lambda_.7} parent=5 // pred_check_branch
      %1333 = sbr.rel (%p1331) target = $region40
    $region39: #{_lambda_.7} parent=5 // pred_region
      %s1334 = ssub.s32 %s9, 2
      // Predicated region
      $region41: #{_lambda_.7} parent=39 // pred_check
        %p1335 = pneg %p106
      $region42: #{_lambda_.7} parent=39 // pred_check_branch
        %1337 = sbr.rel (%p1335) target = $region44
      $region43: #{_lambda_.7} parent=39 // pred_region
        %p1338 = scmp.lt.s32.totalorder %s15, 1
        %s1339 = scalar_select %p1338, %s15, 1
        %s1340 = smul.addr %s1339, 13
        %s1341 = smul.addr %s1340, 4
        %s1342 = scalar_lea.vmem %s3, %s1341
      $region44: #{_lambda_.7} parent=39 // pred_fallthru
        _
    $region40: #{_lambda_.7} parent=5 // pred_fallthru
      _
  $region6: #{_lambda_.7} parent=0 // loop_footer
    %s13 = sadd.s32 1, %s9
  $region7: #{_lambda_.7} parent=0 // loop_footer_branch
    %8 = sbr.rel target = $region3
  $region8: #{_lambda_.7} parent=0 // loop_exit
    _

</llo_original>
